<compile_context>
chip_gen: v7x
topology: tpu7x:2x2x1
jax: 0.10.0
libtpu: 0.0.40
codegen_flags: <defaults>
</compile_context>

<pallas_src>
import functools

import jax
import jax.numpy as jnp
from jax import lax
from jax.experimental import pallas as pl
from jax.experimental.pallas import tpu as pltpu

BN_EPS = 1e-5


def _round_up(x, m):
    return (x + m - 1) // m * m


def _vmem_capacity_bytes():
    try:
        cap = getattr(pltpu.get_tpu_info(), "vmem_capacity_bytes", None)
        if cap:
            return int(cap)
    except Exception:
        pass
    return 64 << 20  # conservative default (v7x per-TensorCore VMEM)


def _conv_bn_stats_kernel(p00, p01, p10, p11, w_ref, mask_ref,
                          conv_ref, stats_ref, *, ow, r_pad):
    """One (n, output-row-block) grid step.

    p??      : bf16 [Lp, C_in]        flattened stride-2 phase block
    w_ref    : bf16 [16, C_in, C_pad] per-tap weights (VMEM-resident)
    mask_ref : f32  [R_pad, 1]        1.0 on valid rows, 0.0 on garbage/pad rows
    conv_ref : f32  [R_pad, C_pad]    conv output (accumulated over 16 taps)
    stats_ref: f32  [2, C_pad]        BN partials (row-sum, row-sum-of-squares)
    """
    owp = ow + 1
    phases = (p00, p01, p10, p11)
    for kh in range(4):
        rh, qh = kh % 2, kh // 2
        for kw in range(4):
            rw, qw = kw % 2, kw // 2
            off = qh * owp + qw                      # constant row shift per tap
            lhs = phases[rh * 2 + rw][off:off + r_pad, :]
            contrib = jnp.dot(lhs, w_ref[kh * 4 + kw],
                              preferred_element_type=jnp.float32)
            if kh == 0 and kw == 0:
                conv_ref[...] = contrib              # first tap initializes
            else:
                conv_ref[...] += contrib
    # BN batch-stat partials over valid rows only; single (2, C_pad) store.
    ym = conv_ref[...] * mask_ref[...]
    stats_ref[...] = jnp.concatenate(
        [jnp.sum(ym, axis=0, keepdims=True),
         jnp.sum(ym * ym, axis=0, keepdims=True)], axis=0)


@functools.partial(jax.jit, static_argnames=("activation",))
def block_forward(x, w, gamma, beta, *, activation="relu"):
    """x: [N, C_in, H, W] f32 (NCHW), w: [C_out, C_in, 4, 4].

    Returns [N, C_out, H//2, W//2] f32 (conv -> train-mode BN -> activation).
    """
    N, C_in, H, W = x.shape
    C_out = w.shape[0]
    assert w.shape[1] == C_in and w.shape[2:] == (4, 4)
    assert H % 2 == 0 and W % 2 == 0 and H >= 2 and W >= 2
    OH, OW = H // 2, W // 2
    OWP = OW + 1
    P = N * OH * OW
    C_pad = _round_up(C_out, 128)

    # ---- choose output-row block size from an accurate VMEM estimate -------
    cap = _vmem_capacity_bytes()

    def vmem_bytes(toh):
        r_pad = _round_up(toh * OWP, 8)
        lp = _round_up(r_pad + OWP + 1, 8)
        phase = 4 * 2 * _round_up(lp, 16) * _round_up(C_in, 128) * 2
        conv = 2 * r_pad * C_pad * 4
        wts = 2 * 16 * _round_up(C_in, 16) * C_pad * 2
        misc = 2 * 8 * C_pad * 4 + 2 * _round_up(r_pad, 16) * 128 * 4
        return phase + conv + wts + misc

    toh = OH
    while toh % 2 == 0 and vmem_bytes(toh) > int(cap * 0.55):
        toh //= 2
    if N * (OH // toh) < 2 and toh % 2 == 0:   # keep >=2 grid steps for megacore
        toh //= 2
    RB = OH // toh
    R_pad = _round_up(toh * OWP, 8)
    Lp = _round_up(R_pad + OWP + 1, 8)
    assert OWP + 1 + R_pad <= Lp
    vmem_limit = min(max(vmem_bytes(toh) + (8 << 20), 32 << 20),
                     int(cap * 0.75))

    # ---- host prep: NHWC reflect-pad + stride-2 phase split (~1x traffic) --
    x_pad = jnp.pad(jnp.transpose(x, (0, 2, 3, 1)).astype(jnp.bfloat16),
                    ((0, 0), (1, 1), (1, 1), (0, 0)), mode="reflect")
    phases = []
    for r in range(2):
        for s in range(2):
            ph = x_pad[:, r::2, s::2, :]                    # [N, OH+1, OW+1, C]
            blk = jnp.stack([ph[:, b * toh:b * toh + toh + 1]
                             for b in range(RB)], axis=1)   # [N,RB,toh+1,OW+1,C]
            blk = blk.reshape(N, RB, (toh + 1) * OWP, C_in)
            blk = jnp.pad(blk,
                          ((0, 0), (0, 0), (0, Lp - (toh + 1) * OWP), (0, 0)))
            phases.append(blk)

    # per-tap weights [16, C_in, C_pad] (t = kh*4 + kw), zero-padded lanes
    w_taps = jnp.transpose(w, (2, 3, 1, 0)).reshape(16, C_in, C_out)
    w_taps = jnp.pad(w_taps, ((0, 0), (0, 0), (0, C_pad - C_out)))
    w_taps = w_taps.astype(jnp.bfloat16)

    # valid-row mask (garbage column ow'==OW and rows past toh*OWP are 0)
    row_ids = jnp.arange(R_pad)
    mask = (((row_ids % OWP) != OW) & (row_ids < toh * OWP))
    mask = mask.astype(jnp.float32).reshape(R_pad, 1)

    kern = functools.partial(_conv_bn_stats_kernel, ow=OW, r_pad=R_pad)
    phase_spec = pl.BlockSpec((None, None, Lp, C_in),
                              lambda n, rb: (n, rb, 0, 0))
    conv, stats = pl.pallas_call(
        kern,
        out_shape=(jax.ShapeDtypeStruct((N, RB, R_pad, C_pad), jnp.float32),
                   jax.ShapeDtypeStruct((N, RB, 2, C_pad), jnp.float32)),
        grid_spec=pltpu.PrefetchScalarGridSpec(
            num_scalar_prefetch=0,
            grid=(N, RB),
            in_specs=[
                phase_spec, phase_spec, phase_spec, phase_spec,
                pl.BlockSpec((16, C_in, C_pad), lambda n, rb: (0, 0, 0)),
                pl.BlockSpec((R_pad, 1), lambda n, rb: (0, 0)),
            ],
            out_specs=[
                pl.BlockSpec((None, None, R_pad, C_pad),
                             lambda n, rb: (n, rb, 0, 0)),
                pl.BlockSpec((None, None, 2, C_pad),
                             lambda n, rb: (n, rb, 0, 0)),
            ],
        ),
        compiler_params=pltpu.CompilerParams(
            dimension_semantics=("parallel", "parallel"),
            vmem_limit_bytes=vmem_limit),
    )(*phases, w_taps, mask)

    # ---- BN batch statistics (training mode) from per-block partials -------
    tot = stats.sum(axis=(0, 1))                      # [2, C_pad]
    mean = tot[0, :C_out] / P
    var = jnp.maximum(tot[1, :C_out] / P - mean * mean, 0.0)
    rstd = lax.rsqrt(var + BN_EPS)
    scale = gamma.astype(jnp.float32) * rstd
    shift = beta.astype(jnp.float32) - mean * scale

    # ---- epilogue in plain JAX: XLA fuses affine+act with crop+transpose ---
    conv = conv[:, :, :toh * OWP, :C_out].reshape(N, RB, toh, OWP, C_out)
    conv = conv[:, :, :, :OW, :].reshape(N, OH, OW, C_out)
    y = conv * scale + shift
    if activation == "relu":
        y = jnp.maximum(y, 0.0)
    else:                                             # LeakyReLU(0.2)
        y = jnp.where(y > 0.0, y, 0.2 * y)
    return jnp.transpose(y, (0, 3, 1, 2))


if __name__ == "__main__":
    key = jax.random.PRNGKey(0)
    k1, k2, k3, k4 = jax.random.split(key, 4)

    N, C_in, H, W = 2, 16, 16, 16
    C_out = 32

    x = jax.random.normal(k1, (N, C_in, H, W), jnp.float32)
    w = jax.random.normal(k2, (C_out, C_in, 4, 4), jnp.float32) * 0.05
    gamma = 1.0 + 0.1 * jax.random.normal(k3, (C_out,), jnp.float32)
    beta = 0.1 * jax.random.normal(k4, (C_out,), jnp.float32)

    def reference(x, w, gamma, beta, activation):
        x_pad = jnp.pad(x, ((0, 0), (0, 0), (1, 1), (1, 1)), mode="reflect")
        conv = lax.conv_general_dilated(
            x_pad.astype(jnp.bfloat16), w.astype(jnp.bfloat16),
            window_strides=(2, 2), padding="VALID",
            dimension_numbers=("NCHW", "OIHW", "NCHW"),
            preferred_element_type=jnp.float32)
        mean = conv.mean(axis=(0, 2, 3), keepdims=True)
        var = ((conv - mean) ** 2).mean(axis=(0, 2, 3), keepdims=True)
        y = ((conv - mean) * lax.rsqrt(var + BN_EPS)
             * gamma.reshape(1, -1, 1, 1) + beta.reshape(1, -1, 1, 1))
        return (jnp.maximum(y, 0.0) if activation == "relu"
                else jnp.where(y > 0.0, y, 0.2 * y))

    for act in ("relu", "leaky"):
        y = block_forward(x, w, gamma, beta, activation=act)
        jax.block_until_ready(y)
        ref = reference(x, w, gamma, beta, act)
        assert y.shape == (N, C_out, H // 2, W // 2)
        assert jnp.allclose(y, ref, rtol=2e-3, atol=2e-3), f"mismatch ({act})"

    print("KERNEL_OK")
</pallas_src>

<mosaic_0001>
module attributes {stable_mosaic.version = 11 : i64} {
  func.func @_conv_bn_stats_kernel(%arg0: i32, %arg1: i32, %arg2: memref<1x1x88x16xbf16, #tpu.memory_space<vmem>>, %arg3: memref<1x1x88x16xbf16, #tpu.memory_space<vmem>>, %arg4: memref<1x1x88x16xbf16, #tpu.memory_space<vmem>>, %arg5: memref<1x1x88x16xbf16, #tpu.memory_space<vmem>>, %arg6: memref<16x16x128xbf16, #tpu.memory_space<vmem>>, %arg7: memref<72x1xf32, #tpu.memory_space<vmem>>, %arg8: memref<1x1x72x128xf32, #tpu.memory_space<vmem>>, %arg9: memref<1x1x2x128xf32, #tpu.memory_space<vmem>>) attributes {dimension_semantics = [#tpu.dimension_semantics<parallel>, #tpu.dimension_semantics<parallel>], iteration_bounds = array<i64: 2, 1>, scalar_prefetch = 0 : i64, scratch_operands = 0 : i64, tpu.core_type = #tpu.core_type<tc>, window_params = [{transform_indices = @transform_0, window_bounds = array<i64: 1, 1, 88, 16>}, {transform_indices = @transform_1, window_bounds = array<i64: 1, 1, 88, 16>}, {transform_indices = @transform_2, window_bounds = array<i64: 1, 1, 88, 16>}, {transform_indices = @transform_3, window_bounds = array<i64: 1, 1, 88, 16>}, {pipeline_mode = #tpu.pipeline_mode<synchronous>, transform_indices = @transform_4, window_bounds = array<i64: 16, 16, 128>}, {pipeline_mode = #tpu.pipeline_mode<synchronous>, transform_indices = @transform_5, window_bounds = array<i64: 72, 1>}, {transform_indices = @transform_6, window_bounds = array<i64: 1, 1, 72, 128>}, {transform_indices = @transform_7, window_bounds = array<i64: 1, 1, 2, 128>}]} {
    %c0 = arith.constant 0 : index
    %c0_0 = arith.constant 0 : index
    %c0_1 = arith.constant 0 : index
    %c0_2 = arith.constant 0 : index
    %0 = vector.load %arg2[%c0, %c0_0, %c0_1, %c0_2] : memref<1x1x88x16xbf16, #tpu.memory_space<vmem>>, vector<1x1x72x16xbf16>
    %1 = vector.shape_cast %0 : vector<1x1x72x16xbf16> to vector<72x16xbf16>
    %c0_3 = arith.constant 0 : index
    %c0_4 = arith.constant 0 : index
    %c0_5 = arith.constant 0 : index
    %2 = vector.load %arg6[%c0_3, %c0_4, %c0_5] : memref<16x16x128xbf16, #tpu.memory_space<vmem>>, vector<1x16x128xbf16>
    %3 = vector.shape_cast %2 : vector<1x16x128xbf16> to vector<16x128xbf16>
    %cst = arith.constant dense<0.000000e+00> : vector<72x128xf32>
    %4 = tpu.matmul %1, %3, %cst {dimension_numbers = #tpu.dot_dimension_numbers<[1], [0], [0], [1], [0, 0, 1, 1], [], []>} : vector<72x16xbf16>, vector<16x128xbf16>, vector<72x128xf32> -> vector<72x128xf32>
    %c0_6 = arith.constant 0 : index
    %c0_7 = arith.constant 0 : index
    %c0_8 = arith.constant 0 : index
    %c0_9 = arith.constant 0 : index
    %5 = vector.load %arg8[%c0_6, %c0_7, %c0_8, %c0_9] : memref<1x1x72x128xf32, #tpu.memory_space<vmem>>, vector<1x1x72x128xf32>
    %6 = vector.shape_cast %5 : vector<1x1x72x128xf32> to vector<72x128xf32>
    %7 = vector.shape_cast %4 : vector<72x128xf32> to vector<1x1x72x128xf32>
    tpu.vector_store %arg8[%c0_6, %c0_7, %c0_8, %c0_9], %7 {strides = array<i32>} : memref<1x1x72x128xf32, #tpu.memory_space<vmem>>, vector<1x1x72x128xf32>,
    %c0_10 = arith.constant 0 : index
    %c0_11 = arith.constant 0 : index
    %c0_12 = arith.constant 0 : index
    %c0_13 = arith.constant 0 : index
    %8 = vector.load %arg3[%c0_10, %c0_11, %c0_12, %c0_13] : memref<1x1x88x16xbf16, #tpu.memory_space<vmem>>, vector<1x1x72x16xbf16>
    %9 = vector.shape_cast %8 : vector<1x1x72x16xbf16> to vector<72x16xbf16>
    %c1 = arith.constant 1 : index
    %c0_14 = arith.constant 0 : index
    %c0_15 = arith.constant 0 : index
    %10 = vector.load %arg6[%c1, %c0_14, %c0_15] : memref<16x16x128xbf16, #tpu.memory_space<vmem>>, vector<1x16x128xbf16>
    %11 = vector.shape_cast %10 : vector<1x16x128xbf16> to vector<16x128xbf16>
    %cst_16 = arith.constant dense<0.000000e+00> : vector<72x128xf32>
    %12 = tpu.matmul %9, %11, %cst_16 {dimension_numbers = #tpu.dot_dimension_numbers<[1], [0], [0], [1], [0, 0, 1, 1], [], []>} : vector<72x16xbf16>, vector<16x128xbf16>, vector<72x128xf32> -> vector<72x128xf32>
    %c0_17 = arith.constant 0 : index
    %c0_18 = arith.constant 0 : index
    %c0_19 = arith.constant 0 : index
    %c0_20 = arith.constant 0 : index
    %13 = vector.load %arg8[%c0_17, %c0_18, %c0_19, %c0_20] : memref<1x1x72x128xf32, #tpu.memory_space<vmem>>, vector<1x1x72x128xf32>
    %14 = vector.shape_cast %13 : vector<1x1x72x128xf32> to vector<72x128xf32>
    %15 = arith.addf %14, %12 : vector<72x128xf32>
    %c0_21 = arith.constant 0 : index
    %c0_22 = arith.constant 0 : index
    %c0_23 = arith.constant 0 : index
    %c0_24 = arith.constant 0 : index
    %16 = vector.load %arg8[%c0_21, %c0_22, %c0_23, %c0_24] : memref<1x1x72x128xf32, #tpu.memory_space<vmem>>, vector<1x1x72x128xf32>
    %17 = vector.shape_cast %16 : vector<1x1x72x128xf32> to vector<72x128xf32>
    %18 = vector.shape_cast %15 : vector<72x128xf32> to vector<1x1x72x128xf32>
    tpu.vector_store %arg8[%c0_21, %c0_22, %c0_23, %c0_24], %18 {strides = array<i32>} : memref<1x1x72x128xf32, #tpu.memory_space<vmem>>, vector<1x1x72x128xf32>,
    %c0_25 = arith.constant 0 : index
    %c0_26 = arith.constant 0 : index
    %c1_27 = arith.constant 1 : index
    %c0_28 = arith.constant 0 : index
    %19 = vector.load %arg2[%c0_25, %c0_26, %c1_27, %c0_28] : memref<1x1x88x16xbf16, #tpu.memory_space<vmem>>, vector<1x1x72x16xbf16>
    %20 = vector.shape_cast %19 : vector<1x1x72x16xbf16> to vector<72x16xbf16>
    %c2 = arith.constant 2 : index
    %c0_29 = arith.constant 0 : index
    %c0_30 = arith.constant 0 : index
    %21 = vector.load %arg6[%c2, %c0_29, %c0_30] : memref<16x16x128xbf16, #tpu.memory_space<vmem>>, vector<1x16x128xbf16>
    %22 = vector.shape_cast %21 : vector<1x16x128xbf16> to vector<16x128xbf16>
    %cst_31 = arith.constant dense<0.000000e+00> : vector<72x128xf32>
    %23 = tpu.matmul %20, %22, %cst_31 {dimension_numbers = #tpu.dot_dimension_numbers<[1], [0], [0], [1], [0, 0, 1, 1], [], []>} : vector<72x16xbf16>, vector<16x128xbf16>, vector<72x128xf32> -> vector<72x128xf32>
    %c0_32 = arith.constant 0 : index
    %c0_33 = arith.constant 0 : index
    %c0_34 = arith.constant 0 : index
    %c0_35 = arith.constant 0 : index
    %24 = vector.load %arg8[%c0_32, %c0_33, %c0_34, %c0_35] : memref<1x1x72x128xf32, #tpu.memory_space<vmem>>, vector<1x1x72x128xf32>
    %25 = vector.shape_cast %24 : vector<1x1x72x128xf32> to vector<72x128xf32>
    %26 = arith.addf %25, %23 : vector<72x128xf32>
    %c0_36 = arith.constant 0 : index
    %c0_37 = arith.constant 0 : index
    %c0_38 = arith.constant 0 : index
    %c0_39 = arith.constant 0 : index
    %27 = vector.load %arg8[%c0_36, %c0_37, %c0_38, %c0_39] : memref<1x1x72x128xf32, #tpu.memory_space<vmem>>, vector<1x1x72x128xf32>
    %28 = vector.shape_cast %27 : vector<1x1x72x128xf32> to vector<72x128xf32>
    %29 = vector.shape_cast %26 : vector<72x128xf32> to vector<1x1x72x128xf32>
    tpu.vector_store %arg8[%c0_36, %c0_37, %c0_38, %c0_39], %29 {strides = array<i32>} : memref<1x1x72x128xf32, #tpu.memory_space<vmem>>, vector<1x1x72x128xf32>,
    %c0_40 = arith.constant 0 : index
    %c0_41 = arith.constant 0 : index
    %c1_42 = arith.constant 1 : index
    %c0_43 = arith.constant 0 : index
    %30 = vector.load %arg3[%c0_40, %c0_41, %c1_42, %c0_43] : memref<1x1x88x16xbf16, #tpu.memory_space<vmem>>, vector<1x1x72x16xbf16>
    %31 = vector.shape_cast %30 : vector<1x1x72x16xbf16> to vector<72x16xbf16>
    %c3 = arith.constant 3 : index
    %c0_44 = arith.constant 0 : index
    %c0_45 = arith.constant 0 : index
    %32 = vector.load %arg6[%c3, %c0_44, %c0_45] : memref<16x16x128xbf16, #tpu.memory_space<vmem>>, vector<1x16x128xbf16>
    %33 = vector.shape_cast %32 : vector<1x16x128xbf16> to vector<16x128xbf16>
    %cst_46 = arith.constant dense<0.000000e+00> : vector<72x128xf32>
    %34 = tpu.matmul %31, %33, %cst_46 {dimension_numbers = #tpu.dot_dimension_numbers<[1], [0], [0], [1], [0, 0, 1, 1], [], []>} : vector<72x16xbf16>, vector<16x128xbf16>, vector<72x128xf32> -> vector<72x128xf32>
    %c0_47 = arith.constant 0 : index
    %c0_48 = arith.constant 0 : index
    %c0_49 = arith.constant 0 : index
    %c0_50 = arith.constant 0 : index
    %35 = vector.load %arg8[%c0_47, %c0_48, %c0_49, %c0_50] : memref<1x1x72x128xf32, #tpu.memory_space<vmem>>, vector<1x1x72x128xf32>
    %36 = vector.shape_cast %35 : vector<1x1x72x128xf32> to vector<72x128xf32>
    %37 = arith.addf %36, %34 : vector<72x128xf32>
    %c0_51 = arith.constant 0 : index
    %c0_52 = arith.constant 0 : index
    %c0_53 = arith.constant 0 : index
    %c0_54 = arith.constant 0 : index
    %38 = vector.load %arg8[%c0_51, %c0_52, %c0_53, %c0_54] : memref<1x1x72x128xf32, #tpu.memory_space<vmem>>, vector<1x1x72x128xf32>
    %39 = vector.shape_cast %38 : vector<1x1x72x128xf32> to vector<72x128xf32>
    %40 = vector.shape_cast %37 : vector<72x128xf32> to vector<1x1x72x128xf32>
    tpu.vector_store %arg8[%c0_51, %c0_52, %c0_53, %c0_54], %40 {strides = array<i32>} : memref<1x1x72x128xf32, #tpu.memory_space<vmem>>, vector<1x1x72x128xf32>,
    %c0_55 = arith.constant 0 : index
    %c0_56 = arith.constant 0 : index
    %c0_57 = arith.constant 0 : index
    %c0_58 = arith.constant 0 : index
    %41 = vector.load %arg4[%c0_55, %c0_56, %c0_57, %c0_58] : memref<1x1x88x16xbf16, #tpu.memory_space<vmem>>, vector<1x1x72x16xbf16>
    %42 = vector.shape_cast %41 : vector<1x1x72x16xbf16> to vector<72x16xbf16>
    %c4 = arith.constant 4 : index
    %c0_59 = arith.constant 0 : index
    %c0_60 = arith.constant 0 : index
    %43 = vector.load %arg6[%c4, %c0_59, %c0_60] : memref<16x16x128xbf16, #tpu.memory_space<vmem>>, vector<1x16x128xbf16>
    %44 = vector.shape_cast %43 : vector<1x16x128xbf16> to vector<16x128xbf16>
    %cst_61 = arith.constant dense<0.000000e+00> : vector<72x128xf32>
    %45 = tpu.matmul %42, %44, %cst_61 {dimension_numbers = #tpu.dot_dimension_numbers<[1], [0], [0], [1], [0, 0, 1, 1], [], []>} : vector<72x16xbf16>, vector<16x128xbf16>, vector<72x128xf32> -> vector<72x128xf32>
    %c0_62 = arith.constant 0 : index
    %c0_63 = arith.constant 0 : index
    %c0_64 = arith.constant 0 : index
    %c0_65 = arith.constant 0 : index
    %46 = vector.load %arg8[%c0_62, %c0_63, %c0_64, %c0_65] : memref<1x1x72x128xf32, #tpu.memory_space<vmem>>, vector<1x1x72x128xf32>
    %47 = vector.shape_cast %46 : vector<1x1x72x128xf32> to vector<72x128xf32>
    %48 = arith.addf %47, %45 : vector<72x128xf32>
    %c0_66 = arith.constant 0 : index
    %c0_67 = arith.constant 0 : index
    %c0_68 = arith.constant 0 : index
    %c0_69 = arith.constant 0 : index
    %49 = vector.load %arg8[%c0_66, %c0_67, %c0_68, %c0_69] : memref<1x1x72x128xf32, #tpu.memory_space<vmem>>, vector<1x1x72x128xf32>
    %50 = vector.shape_cast %49 : vector<1x1x72x128xf32> to vector<72x128xf32>
    %51 = vector.shape_cast %48 : vector<72x128xf32> to vector<1x1x72x128xf32>
    tpu.vector_store %arg8[%c0_66, %c0_67, %c0_68, %c0_69], %51 {strides = array<i32>} : memref<1x1x72x128xf32, #tpu.memory_space<vmem>>, vector<1x1x72x128xf32>,
    %c0_70 = arith.constant 0 : index
    %c0_71 = arith.constant 0 : index
    %c0_72 = arith.constant 0 : index
    %c0_73 = arith.constant 0 : index
    %52 = vector.load %arg5[%c0_70, %c0_71, %c0_72, %c0_73] : memref<1x1x88x16xbf16, #tpu.memory_space<vmem>>, vector<1x1x72x16xbf16>
    %53 = vector.shape_cast %52 : vector<1x1x72x16xbf16> to vector<72x16xbf16>
    %c5 = arith.constant 5 : index
    %c0_74 = arith.constant 0 : index
    %c0_75 = arith.constant 0 : index
    %54 = vector.load %arg6[%c5, %c0_74, %c0_75] : memref<16x16x128xbf16, #tpu.memory_space<vmem>>, vector<1x16x128xbf16>
    %55 = vector.shape_cast %54 : vector<1x16x128xbf16> to vector<16x128xbf16>
    %cst_76 = arith.constant dense<0.000000e+00> : vector<72x128xf32>
    %56 = tpu.matmul %53, %55, %cst_76 {dimension_numbers = #tpu.dot_dimension_numbers<[1], [0], [0], [1], [0, 0, 1, 1], [], []>} : vector<72x16xbf16>, vector<16x128xbf16>, vector<72x128xf32> -> vector<72x128xf32>
    %c0_77 = arith.constant 0 : index
    %c0_78 = arith.constant 0 : index
    %c0_79 = arith.constant 0 : index
    %c0_80 = arith.constant 0 : index
    %57 = vector.load %arg8[%c0_77, %c0_78, %c0_79, %c0_80] : memref<1x1x72x128xf32, #tpu.memory_space<vmem>>, vector<1x1x72x128xf32>
    %58 = vector.shape_cast %57 : vector<1x1x72x128xf32> to vector<72x128xf32>
    %59 = arith.addf %58, %56 : vector<72x128xf32>
    %c0_81 = arith.constant 0 : index
    %c0_82 = arith.constant 0 : index
    %c0_83 = arith.constant 0 : index
    %c0_84 = arith.constant 0 : index
    %60 = vector.load %arg8[%c0_81, %c0_82, %c0_83, %c0_84] : memref<1x1x72x128xf32, #tpu.memory_space<vmem>>, vector<1x1x72x128xf32>
    %61 = vector.shape_cast %60 : vector<1x1x72x128xf32> to vector<72x128xf32>
    %62 = vector.shape_cast %59 : vector<72x128xf32> to vector<1x1x72x128xf32>
    tpu.vector_store %arg8[%c0_81, %c0_82, %c0_83, %c0_84], %62 {strides = array<i32>} : memref<1x1x72x128xf32, #tpu.memory_space<vmem>>, vector<1x1x72x128xf32>,
    %c0_85 = arith.constant 0 : index
    %c0_86 = arith.constant 0 : index
    %c1_87 = arith.constant 1 : index
    %c0_88 = arith.constant 0 : index
    %63 = vector.load %arg4[%c0_85, %c0_86, %c1_87, %c0_88] : memref<1x1x88x16xbf16, #tpu.memory_space<vmem>>, vector<1x1x72x16xbf16>
    %64 = vector.shape_cast %63 : vector<1x1x72x16xbf16> to vector<72x16xbf16>
    %c6 = arith.constant 6 : index
    %c0_89 = arith.constant 0 : index
    %c0_90 = arith.constant 0 : index
    %65 = vector.load %arg6[%c6, %c0_89, %c0_90] : memref<16x16x128xbf16, #tpu.memory_space<vmem>>, vector<1x16x128xbf16>
    %66 = vector.shape_cast %65 : vector<1x16x128xbf16> to vector<16x128xbf16>
    %cst_91 = arith.constant dense<0.000000e+00> : vector<72x128xf32>
    %67 = tpu.matmul %64, %66, %cst_91 {dimension_numbers = #tpu.dot_dimension_numbers<[1], [0], [0], [1], [0, 0, 1, 1], [], []>} : vector<72x16xbf16>, vector<16x128xbf16>, vector<72x128xf32> -> vector<72x128xf32>
    %c0_92 = arith.constant 0 : index
    %c0_93 = arith.constant 0 : index
    %c0_94 = arith.constant 0 : index
    %c0_95 = arith.constant 0 : index
    %68 = vector.load %arg8[%c0_92, %c0_93, %c0_94, %c0_95] : memref<1x1x72x128xf32, #tpu.memory_space<vmem>>, vector<1x1x72x128xf32>
    %69 = vector.shape_cast %68 : vector<1x1x72x128xf32> to vector<72x128xf32>
    %70 = arith.addf %69, %67 : vector<72x128xf32>
    %c0_96 = arith.constant 0 : index
    %c0_97 = arith.constant 0 : index
    %c0_98 = arith.constant 0 : index
    %c0_99 = arith.constant 0 : index
    %71 = vector.load %arg8[%c0_96, %c0_97, %c0_98, %c0_99] : memref<1x1x72x128xf32, #tpu.memory_space<vmem>>, vector<1x1x72x128xf32>
    %72 = vector.shape_cast %71 : vector<1x1x72x128xf32> to vector<72x128xf32>
    %73 = vector.shape_cast %70 : vector<72x128xf32> to vector<1x1x72x128xf32>
    tpu.vector_store %arg8[%c0_96, %c0_97, %c0_98, %c0_99], %73 {strides = array<i32>} : memref<1x1x72x128xf32, #tpu.memory_space<vmem>>, vector<1x1x72x128xf32>,
    %c0_100 = arith.constant 0 : index
    %c0_101 = arith.constant 0 : index
    %c1_102 = arith.constant 1 : index
    %c0_103 = arith.constant 0 : index
    %74 = vector.load %arg5[%c0_100, %c0_101, %c1_102, %c0_103] : memref<1x1x88x16xbf16, #tpu.memory_space<vmem>>, vector<1x1x72x16xbf16>
    %75 = vector.shape_cast %74 : vector<1x1x72x16xbf16> to vector<72x16xbf16>
    %c7 = arith.constant 7 : index
    %c0_104 = arith.constant 0 : index
    %c0_105 = arith.constant 0 : index
    %76 = vector.load %arg6[%c7, %c0_104, %c0_105] : memref<16x16x128xbf16, #tpu.memory_space<vmem>>, vector<1x16x128xbf16>
    %77 = vector.shape_cast %76 : vector<1x16x128xbf16> to vector<16x128xbf16>
    %cst_106 = arith.constant dense<0.000000e+00> : vector<72x128xf32>
    %78 = tpu.matmul %75, %77, %cst_106 {dimension_numbers = #tpu.dot_dimension_numbers<[1], [0], [0], [1], [0, 0, 1, 1], [], []>} : vector<72x16xbf16>, vector<16x128xbf16>, vector<72x128xf32> -> vector<72x128xf32>
    %c0_107 = arith.constant 0 : index
    %c0_108 = arith.constant 0 : index
    %c0_109 = arith.constant 0 : index
    %c0_110 = arith.constant 0 : index
    %79 = vector.load %arg8[%c0_107, %c0_108, %c0_109, %c0_110] : memref<1x1x72x128xf32, #tpu.memory_space<vmem>>, vector<1x1x72x128xf32>
    %80 = vector.shape_cast %79 : vector<1x1x72x128xf32> to vector<72x128xf32>
    %81 = arith.addf %80, %78 : vector<72x128xf32>
    %c0_111 = arith.constant 0 : index
    %c0_112 = arith.constant 0 : index
    %c0_113 = arith.constant 0 : index
    %c0_114 = arith.constant 0 : index
    %82 = vector.load %arg8[%c0_111, %c0_112, %c0_113, %c0_114] : memref<1x1x72x128xf32, #tpu.memory_space<vmem>>, vector<1x1x72x128xf32>
    %83 = vector.shape_cast %82 : vector<1x1x72x128xf32> to vector<72x128xf32>
    %84 = vector.shape_cast %81 : vector<72x128xf32> to vector<1x1x72x128xf32>
    tpu.vector_store %arg8[%c0_111, %c0_112, %c0_113, %c0_114], %84 {strides = array<i32>} : memref<1x1x72x128xf32, #tpu.memory_space<vmem>>, vector<1x1x72x128xf32>,
    %c0_115 = arith.constant 0 : index
    %c0_116 = arith.constant 0 : index
    %c9 = arith.constant 9 : index
    %c0_117 = arith.constant 0 : index
    %85 = vector.load %arg2[%c0_115, %c0_116, %c9, %c0_117] : memref<1x1x88x16xbf16, #tpu.memory_space<vmem>>, vector<1x1x72x16xbf16>
    %86 = vector.shape_cast %85 : vector<1x1x72x16xbf16> to vector<72x16xbf16>
    %c8 = arith.constant 8 : index
    %c0_118 = arith.constant 0 : index
    %c0_119 = arith.constant 0 : index
    %87 = vector.load %arg6[%c8, %c0_118, %c0_119] : memref<16x16x128xbf16, #tpu.memory_space<vmem>>, vector<1x16x128xbf16>
    %88 = vector.shape_cast %87 : vector<1x16x128xbf16> to vector<16x128xbf16>
    %cst_120 = arith.constant dense<0.000000e+00> : vector<72x128xf32>
    %89 = tpu.matmul %86, %88, %cst_120 {dimension_numbers = #tpu.dot_dimension_numbers<[1], [0], [0], [1], [0, 0, 1, 1], [], []>} : vector<72x16xbf16>, vector<16x128xbf16>, vector<72x128xf32> -> vector<72x128xf32>
    %c0_121 = arith.constant 0 : index
    %c0_122 = arith.constant 0 : index
    %c0_123 = arith.constant 0 : index
    %c0_124 = arith.constant 0 : index
    %90 = vector.load %arg8[%c0_121, %c0_122, %c0_123, %c0_124] : memref<1x1x72x128xf32, #tpu.memory_space<vmem>>, vector<1x1x72x128xf32>
    %91 = vector.shape_cast %90 : vector<1x1x72x128xf32> to vector<72x128xf32>
    %92 = arith.addf %91, %89 : vector<72x128xf32>
    %c0_125 = arith.constant 0 : index
    %c0_126 = arith.constant 0 : index
    %c0_127 = arith.constant 0 : index
    %c0_128 = arith.constant 0 : index
    %93 = vector.load %arg8[%c0_125, %c0_126, %c0_127, %c0_128] : memref<1x1x72x128xf32, #tpu.memory_space<vmem>>, vector<1x1x72x128xf32>
    %94 = vector.shape_cast %93 : vector<1x1x72x128xf32> to vector<72x128xf32>
    %95 = vector.shape_cast %92 : vector<72x128xf32> to vector<1x1x72x128xf32>
    tpu.vector_store %arg8[%c0_125, %c0_126, %c0_127, %c0_128], %95 {strides = array<i32>} : memref<1x1x72x128xf32, #tpu.memory_space<vmem>>, vector<1x1x72x128xf32>,
    %c0_129 = arith.constant 0 : index
    %c0_130 = arith.constant 0 : index
    %c9_131 = arith.constant 9 : index
    %c0_132 = arith.constant 0 : index
    %96 = vector.load %arg3[%c0_129, %c0_130, %c9_131, %c0_132] : memref<1x1x88x16xbf16, #tpu.memory_space<vmem>>, vector<1x1x72x16xbf16>
    %97 = vector.shape_cast %96 : vector<1x1x72x16xbf16> to vector<72x16xbf16>
    %c9_133 = arith.constant 9 : index
    %c0_134 = arith.constant 0 : index
    %c0_135 = arith.constant 0 : index
    %98 = vector.load %arg6[%c9_133, %c0_134, %c0_135] : memref<16x16x128xbf16, #tpu.memory_space<vmem>>, vector<1x16x128xbf16>
    %99 = vector.shape_cast %98 : vector<1x16x128xbf16> to vector<16x128xbf16>
    %cst_136 = arith.constant dense<0.000000e+00> : vector<72x128xf32>
    %100 = tpu.matmul %97, %99, %cst_136 {dimension_numbers = #tpu.dot_dimension_numbers<[1], [0], [0], [1], [0, 0, 1, 1], [], []>} : vector<72x16xbf16>, vector<16x128xbf16>, vector<72x128xf32> -> vector<72x128xf32>
    %c0_137 = arith.constant 0 : index
    %c0_138 = arith.constant 0 : index
    %c0_139 = arith.constant 0 : index
    %c0_140 = arith.constant 0 : index
    %101 = vector.load %arg8[%c0_137, %c0_138, %c0_139, %c0_140] : memref<1x1x72x128xf32, #tpu.memory_space<vmem>>, vector<1x1x72x128xf32>
    %102 = vector.shape_cast %101 : vector<1x1x72x128xf32> to vector<72x128xf32>
    %103 = arith.addf %102, %100 : vector<72x128xf32>
    %c0_141 = arith.constant 0 : index
    %c0_142 = arith.constant 0 : index
    %c0_143 = arith.constant 0 : index
    %c0_144 = arith.constant 0 : index
    %104 = vector.load %arg8[%c0_141, %c0_142, %c0_143, %c0_144] : memref<1x1x72x128xf32, #tpu.memory_space<vmem>>, vector<1x1x72x128xf32>
    %105 = vector.shape_cast %104 : vector<1x1x72x128xf32> to vector<72x128xf32>
    %106 = vector.shape_cast %103 : vector<72x128xf32> to vector<1x1x72x128xf32>
    tpu.vector_store %arg8[%c0_141, %c0_142, %c0_143, %c0_144], %106 {strides = array<i32>} : memref<1x1x72x128xf32, #tpu.memory_space<vmem>>, vector<1x1x72x128xf32>,
    %c0_145 = arith.constant 0 : index
    %c0_146 = arith.constant 0 : index
    %c10 = arith.constant 10 : index
    %c0_147 = arith.constant 0 : index
    %107 = vector.load %arg2[%c0_145, %c0_146, %c10, %c0_147] : memref<1x1x88x16xbf16, #tpu.memory_space<vmem>>, vector<1x1x72x16xbf16>
    %108 = vector.shape_cast %107 : vector<1x1x72x16xbf16> to vector<72x16xbf16>
    %c10_148 = arith.constant 10 : index
    %c0_149 = arith.constant 0 : index
    %c0_150 = arith.constant 0 : index
    %109 = vector.load %arg6[%c10_148, %c0_149, %c0_150] : memref<16x16x128xbf16, #tpu.memory_space<vmem>>, vector<1x16x128xbf16>
    %110 = vector.shape_cast %109 : vector<1x16x128xbf16> to vector<16x128xbf16>
    %cst_151 = arith.constant dense<0.000000e+00> : vector<72x128xf32>
    %111 = tpu.matmul %108, %110, %cst_151 {dimension_numbers = #tpu.dot_dimension_numbers<[1], [0], [0], [1], [0, 0, 1, 1], [], []>} : vector<72x16xbf16>, vector<16x128xbf16>, vector<72x128xf32> -> vector<72x128xf32>
    %c0_152 = arith.constant 0 : index
    %c0_153 = arith.constant 0 : index
    %c0_154 = arith.constant 0 : index
    %c0_155 = arith.constant 0 : index
    %112 = vector.load %arg8[%c0_152, %c0_153, %c0_154, %c0_155] : memref<1x1x72x128xf32, #tpu.memory_space<vmem>>, vector<1x1x72x128xf32>
    %113 = vector.shape_cast %112 : vector<1x1x72x128xf32> to vector<72x128xf32>
    %114 = arith.addf %113, %111 : vector<72x128xf32>
    %c0_156 = arith.constant 0 : index
    %c0_157 = arith.constant 0 : index
    %c0_158 = arith.constant 0 : index
    %c0_159 = arith.constant 0 : index
    %115 = vector.load %arg8[%c0_156, %c0_157, %c0_158, %c0_159] : memref<1x1x72x128xf32, #tpu.memory_space<vmem>>, vector<1x1x72x128xf32>
    %116 = vector.shape_cast %115 : vector<1x1x72x128xf32> to vector<72x128xf32>
    %117 = vector.shape_cast %114 : vector<72x128xf32> to vector<1x1x72x128xf32>
    tpu.vector_store %arg8[%c0_156, %c0_157, %c0_158, %c0_159], %117 {strides = array<i32>} : memref<1x1x72x128xf32, #tpu.memory_space<vmem>>, vector<1x1x72x128xf32>,
    %c0_160 = arith.constant 0 : index
    %c0_161 = arith.constant 0 : index
    %c10_162 = arith.constant 10 : index
    %c0_163 = arith.constant 0 : index
    %118 = vector.load %arg3[%c0_160, %c0_161, %c10_162, %c0_163] : memref<1x1x88x16xbf16, #tpu.memory_space<vmem>>, vector<1x1x72x16xbf16>
    %119 = vector.shape_cast %118 : vector<1x1x72x16xbf16> to vector<72x16xbf16>
    %c11 = arith.constant 11 : index
    %c0_164 = arith.constant 0 : index
    %c0_165 = arith.constant 0 : index
    %120 = vector.load %arg6[%c11, %c0_164, %c0_165] : memref<16x16x128xbf16, #tpu.memory_space<vmem>>, vector<1x16x128xbf16>
    %121 = vector.shape_cast %120 : vector<1x16x128xbf16> to vector<16x128xbf16>
    %cst_166 = arith.constant dense<0.000000e+00> : vector<72x128xf32>
    %122 = tpu.matmul %119, %121, %cst_166 {dimension_numbers = #tpu.dot_dimension_numbers<[1], [0], [0], [1], [0, 0, 1, 1], [], []>} : vector<72x16xbf16>, vector<16x128xbf16>, vector<72x128xf32> -> vector<72x128xf32>
    %c0_167 = arith.constant 0 : index
    %c0_168 = arith.constant 0 : index
    %c0_169 = arith.constant 0 : index
    %c0_170 = arith.constant 0 : index
    %123 = vector.load %arg8[%c0_167, %c0_168, %c0_169, %c0_170] : memref<1x1x72x128xf32, #tpu.memory_space<vmem>>, vector<1x1x72x128xf32>
    %124 = vector.shape_cast %123 : vector<1x1x72x128xf32> to vector<72x128xf32>
    %125 = arith.addf %124, %122 : vector<72x128xf32>
    %c0_171 = arith.constant 0 : index
    %c0_172 = arith.constant 0 : index
    %c0_173 = arith.constant 0 : index
    %c0_174 = arith.constant 0 : index
    %126 = vector.load %arg8[%c0_171, %c0_172, %c0_173, %c0_174] : memref<1x1x72x128xf32, #tpu.memory_space<vmem>>, vector<1x1x72x128xf32>
    %127 = vector.shape_cast %126 : vector<1x1x72x128xf32> to vector<72x128xf32>
    %128 = vector.shape_cast %125 : vector<72x128xf32> to vector<1x1x72x128xf32>
    tpu.vector_store %arg8[%c0_171, %c0_172, %c0_173, %c0_174], %128 {strides = array<i32>} : memref<1x1x72x128xf32, #tpu.memory_space<vmem>>, vector<1x1x72x128xf32>,
    %c0_175 = arith.constant 0 : index
    %c0_176 = arith.constant 0 : index
    %c9_177 = arith.constant 9 : index
    %c0_178 = arith.constant 0 : index
    %129 = vector.load %arg4[%c0_175, %c0_176, %c9_177, %c0_178] : memref<1x1x88x16xbf16, #tpu.memory_space<vmem>>, vector<1x1x72x16xbf16>
    %130 = vector.shape_cast %129 : vector<1x1x72x16xbf16> to vector<72x16xbf16>
    %c12 = arith.constant 12 : index
    %c0_179 = arith.constant 0 : index
    %c0_180 = arith.constant 0 : index
    %131 = vector.load %arg6[%c12, %c0_179, %c0_180] : memref<16x16x128xbf16, #tpu.memory_space<vmem>>, vector<1x16x128xbf16>
    %132 = vector.shape_cast %131 : vector<1x16x128xbf16> to vector<16x128xbf16>
    %cst_181 = arith.constant dense<0.000000e+00> : vector<72x128xf32>
    %133 = tpu.matmul %130, %132, %cst_181 {dimension_numbers = #tpu.dot_dimension_numbers<[1], [0], [0], [1], [0, 0, 1, 1], [], []>} : vector<72x16xbf16>, vector<16x128xbf16>, vector<72x128xf32> -> vector<72x128xf32>
    %c0_182 = arith.constant 0 : index
    %c0_183 = arith.constant 0 : index
    %c0_184 = arith.constant 0 : index
    %c0_185 = arith.constant 0 : index
    %134 = vector.load %arg8[%c0_182, %c0_183, %c0_184, %c0_185] : memref<1x1x72x128xf32, #tpu.memory_space<vmem>>, vector<1x1x72x128xf32>
    %135 = vector.shape_cast %134 : vector<1x1x72x128xf32> to vector<72x128xf32>
    %136 = arith.addf %135, %133 : vector<72x128xf32>
    %c0_186 = arith.constant 0 : index
    %c0_187 = arith.constant 0 : index
    %c0_188 = arith.constant 0 : index
    %c0_189 = arith.constant 0 : index
    %137 = vector.load %arg8[%c0_186, %c0_187, %c0_188, %c0_189] : memref<1x1x72x128xf32, #tpu.memory_space<vmem>>, vector<1x1x72x128xf32>
    %138 = vector.shape_cast %137 : vector<1x1x72x128xf32> to vector<72x128xf32>
    %139 = vector.shape_cast %136 : vector<72x128xf32> to vector<1x1x72x128xf32>
    tpu.vector_store %arg8[%c0_186, %c0_187, %c0_188, %c0_189], %139 {strides = array<i32>} : memref<1x1x72x128xf32, #tpu.memory_space<vmem>>, vector<1x1x72x128xf32>,
    %c0_190 = arith.constant 0 : index
    %c0_191 = arith.constant 0 : index
    %c9_192 = arith.constant 9 : index
    %c0_193 = arith.constant 0 : index
    %140 = vector.load %arg5[%c0_190, %c0_191, %c9_192, %c0_193] : memref<1x1x88x16xbf16, #tpu.memory_space<vmem>>, vector<1x1x72x16xbf16>
    %141 = vector.shape_cast %140 : vector<1x1x72x16xbf16> to vector<72x16xbf16>
    %c13 = arith.constant 13 : index
    %c0_194 = arith.constant 0 : index
    %c0_195 = arith.constant 0 : index
    %142 = vector.load %arg6[%c13, %c0_194, %c0_195] : memref<16x16x128xbf16, #tpu.memory_space<vmem>>, vector<1x16x128xbf16>
    %143 = vector.shape_cast %142 : vector<1x16x128xbf16> to vector<16x128xbf16>
    %cst_196 = arith.constant dense<0.000000e+00> : vector<72x128xf32>
    %144 = tpu.matmul %141, %143, %cst_196 {dimension_numbers = #tpu.dot_dimension_numbers<[1], [0], [0], [1], [0, 0, 1, 1], [], []>} : vector<72x16xbf16>, vector<16x128xbf16>, vector<72x128xf32> -> vector<72x128xf32>
    %c0_197 = arith.constant 0 : index
    %c0_198 = arith.constant 0 : index
    %c0_199 = arith.constant 0 : index
    %c0_200 = arith.constant 0 : index
    %145 = vector.load %arg8[%c0_197, %c0_198, %c0_199, %c0_200] : memref<1x1x72x128xf32, #tpu.memory_space<vmem>>, vector<1x1x72x128xf32>
    %146 = vector.shape_cast %145 : vector<1x1x72x128xf32> to vector<72x128xf32>
    %147 = arith.addf %146, %144 : vector<72x128xf32>
    %c0_201 = arith.constant 0 : index
    %c0_202 = arith.constant 0 : index
    %c0_203 = arith.constant 0 : index
    %c0_204 = arith.constant 0 : index
    %148 = vector.load %arg8[%c0_201, %c0_202, %c0_203, %c0_204] : memref<1x1x72x128xf32, #tpu.memory_space<vmem>>, vector<1x1x72x128xf32>
    %149 = vector.shape_cast %148 : vector<1x1x72x128xf32> to vector<72x128xf32>
    %150 = vector.shape_cast %147 : vector<72x128xf32> to vector<1x1x72x128xf32>
    tpu.vector_store %arg8[%c0_201, %c0_202, %c0_203, %c0_204], %150 {strides = array<i32>} : memref<1x1x72x128xf32, #tpu.memory_space<vmem>>, vector<1x1x72x128xf32>,
    %c0_205 = arith.constant 0 : index
    %c0_206 = arith.constant 0 : index
    %c10_207 = arith.constant 10 : index
    %c0_208 = arith.constant 0 : index
    %151 = vector.load %arg4[%c0_205, %c0_206, %c10_207, %c0_208] : memref<1x1x88x16xbf16, #tpu.memory_space<vmem>>, vector<1x1x72x16xbf16>
    %152 = vector.shape_cast %151 : vector<1x1x72x16xbf16> to vector<72x16xbf16>
    %c14 = arith.constant 14 : index
    %c0_209 = arith.constant 0 : index
    %c0_210 = arith.constant 0 : index
    %153 = vector.load %arg6[%c14, %c0_209, %c0_210] : memref<16x16x128xbf16, #tpu.memory_space<vmem>>, vector<1x16x128xbf16>
    %154 = vector.shape_cast %153 : vector<1x16x128xbf16> to vector<16x128xbf16>
    %cst_211 = arith.constant dense<0.000000e+00> : vector<72x128xf32>
    %155 = tpu.matmul %152, %154, %cst_211 {dimension_numbers = #tpu.dot_dimension_numbers<[1], [0], [0], [1], [0, 0, 1, 1], [], []>} : vector<72x16xbf16>, vector<16x128xbf16>, vector<72x128xf32> -> vector<72x128xf32>
    %c0_212 = arith.constant 0 : index
    %c0_213 = arith.constant 0 : index
    %c0_214 = arith.constant 0 : index
    %c0_215 = arith.constant 0 : index
    %156 = vector.load %arg8[%c0_212, %c0_213, %c0_214, %c0_215] : memref<1x1x72x128xf32, #tpu.memory_space<vmem>>, vector<1x1x72x128xf32>
    %157 = vector.shape_cast %156 : vector<1x1x72x128xf32> to vector<72x128xf32>
    %158 = arith.addf %157, %155 : vector<72x128xf32>
    %c0_216 = arith.constant 0 : index
    %c0_217 = arith.constant 0 : index
    %c0_218 = arith.constant 0 : index
    %c0_219 = arith.constant 0 : index
    %159 = vector.load %arg8[%c0_216, %c0_217, %c0_218, %c0_219] : memref<1x1x72x128xf32, #tpu.memory_space<vmem>>, vector<1x1x72x128xf32>
    %160 = vector.shape_cast %159 : vector<1x1x72x128xf32> to vector<72x128xf32>
    %161 = vector.shape_cast %158 : vector<72x128xf32> to vector<1x1x72x128xf32>
    tpu.vector_store %arg8[%c0_216, %c0_217, %c0_218, %c0_219], %161 {strides = array<i32>} : memref<1x1x72x128xf32, #tpu.memory_space<vmem>>, vector<1x1x72x128xf32>,
    %c0_220 = arith.constant 0 : index
    %c0_221 = arith.constant 0 : index
    %c10_222 = arith.constant 10 : index
    %c0_223 = arith.constant 0 : index
    %162 = vector.load %arg5[%c0_220, %c0_221, %c10_222, %c0_223] : memref<1x1x88x16xbf16, #tpu.memory_space<vmem>>, vector<1x1x72x16xbf16>
    %163 = vector.shape_cast %162 : vector<1x1x72x16xbf16> to vector<72x16xbf16>
    %c15 = arith.constant 15 : index
    %c0_224 = arith.constant 0 : index
    %c0_225 = arith.constant 0 : index
    %164 = vector.load %arg6[%c15, %c0_224, %c0_225] : memref<16x16x128xbf16, #tpu.memory_space<vmem>>, vector<1x16x128xbf16>
    %165 = vector.shape_cast %164 : vector<1x16x128xbf16> to vector<16x128xbf16>
    %cst_226 = arith.constant dense<0.000000e+00> : vector<72x128xf32>
    %166 = tpu.matmul %163, %165, %cst_226 {dimension_numbers = #tpu.dot_dimension_numbers<[1], [0], [0], [1], [0, 0, 1, 1], [], []>} : vector<72x16xbf16>, vector<16x128xbf16>, vector<72x128xf32> -> vector<72x128xf32>
    %c0_227 = arith.constant 0 : index
    %c0_228 = arith.constant 0 : index
    %c0_229 = arith.constant 0 : index
    %c0_230 = arith.constant 0 : index
    %167 = vector.load %arg8[%c0_227, %c0_228, %c0_229, %c0_230] : memref<1x1x72x128xf32, #tpu.memory_space<vmem>>, vector<1x1x72x128xf32>
    %168 = vector.shape_cast %167 : vector<1x1x72x128xf32> to vector<72x128xf32>
    %169 = arith.addf %168, %166 : vector<72x128xf32>
    %c0_231 = arith.constant 0 : index
    %c0_232 = arith.constant 0 : index
    %c0_233 = arith.constant 0 : index
    %c0_234 = arith.constant 0 : index
    %170 = vector.load %arg8[%c0_231, %c0_232, %c0_233, %c0_234] : memref<1x1x72x128xf32, #tpu.memory_space<vmem>>, vector<1x1x72x128xf32>
    %171 = vector.shape_cast %170 : vector<1x1x72x128xf32> to vector<72x128xf32>
    %172 = vector.shape_cast %169 : vector<72x128xf32> to vector<1x1x72x128xf32>
    tpu.vector_store %arg8[%c0_231, %c0_232, %c0_233, %c0_234], %172 {strides = array<i32>} : memref<1x1x72x128xf32, #tpu.memory_space<vmem>>, vector<1x1x72x128xf32>,
    %c0_235 = arith.constant 0 : index
    %c0_236 = arith.constant 0 : index
    %c0_237 = arith.constant 0 : index
    %c0_238 = arith.constant 0 : index
    %173 = vector.load %arg8[%c0_235, %c0_236, %c0_237, %c0_238] : memref<1x1x72x128xf32, #tpu.memory_space<vmem>>, vector<1x1x72x128xf32>
    %174 = vector.shape_cast %173 : vector<1x1x72x128xf32> to vector<72x128xf32>
    %c0_239 = arith.constant 0 : index
    %c0_240 = arith.constant 0 : index
    %175 = vector.load %arg7[%c0_239, %c0_240] : memref<72x1xf32, #tpu.memory_space<vmem>>, vector<72x1xf32>
    %176 = vector.broadcast %175 : vector<72x1xf32> to vector<72x128xf32>
    %177 = arith.mulf %174, %176 : vector<72x128xf32>
    %cst_241 = arith.constant dense<0.000000e+00> : vector<128xf32>
    %178 = vector.multi_reduction <add>, %177, %cst_241 [0] : vector<72x128xf32> to vector<128xf32>
    %179 = vector.shape_cast %178 : vector<128xf32> to vector<1x128xf32>
    %180 = arith.mulf %177, %177 : vector<72x128xf32>
    %cst_242 = arith.constant dense<0.000000e+00> : vector<128xf32>
    %181 = vector.multi_reduction <add>, %180, %cst_242 [0] : vector<72x128xf32> to vector<128xf32>
    %182 = vector.shape_cast %181 : vector<128xf32> to vector<1x128xf32>
    %183 = tpu.concatenate %179, %182 in 0 : vector<1x128xf32>, vector<1x128xf32> -> vector<2x128xf32>
    %c0_243 = arith.constant 0 : index
    %c0_244 = arith.constant 0 : index
    %c0_245 = arith.constant 0 : index
    %c0_246 = arith.constant 0 : index
    %184 = vector.load %arg9[%c0_243, %c0_244, %c0_245, %c0_246] : memref<1x1x2x128xf32, #tpu.memory_space<vmem>>, vector<1x1x2x128xf32>
    %185 = vector.shape_cast %184 : vector<1x1x2x128xf32> to vector<2x128xf32>
    %186 = vector.shape_cast %183 : vector<2x128xf32> to vector<1x1x2x128xf32>
    tpu.vector_store %arg9[%c0_243, %c0_244, %c0_245, %c0_246], %186 {strides = array<i32>} : memref<1x1x2x128xf32, #tpu.memory_space<vmem>>, vector<1x1x2x128xf32>,
    return
  }
  func.func @transform_0(%arg0: i32, %arg1: i32) -> (i32, i32, i32, i32) {
    %c0_i32 = arith.constant 0 : i32
    %c0_i32_0 = arith.constant 0 : i32
    %c0_i32_1 = arith.constant 0 : i32
    return %arg0, %arg1, %c0_i32, %c0_i32_0 : i32, i32, i32, i32
  }
  func.func @transform_1(%arg0: i32, %arg1: i32) -> (i32, i32, i32, i32) {
    %c0_i32 = arith.constant 0 : i32
    %c0_i32_0 = arith.constant 0 : i32
    %c0_i32_1 = arith.constant 0 : i32
    return %arg0, %arg1, %c0_i32, %c0_i32_0 : i32, i32, i32, i32
  }
  func.func @transform_2(%arg0: i32, %arg1: i32) -> (i32, i32, i32, i32) {
    %c0_i32 = arith.constant 0 : i32
    %c0_i32_0 = arith.constant 0 : i32
    %c0_i32_1 = arith.constant 0 : i32
    return %arg0, %arg1, %c0_i32, %c0_i32_0 : i32, i32, i32, i32
  }
  func.func @transform_3(%arg0: i32, %arg1: i32) -> (i32, i32, i32, i32) {
    %c0_i32 = arith.constant 0 : i32
    %c0_i32_0 = arith.constant 0 : i32
    %c0_i32_1 = arith.constant 0 : i32
    return %arg0, %arg1, %c0_i32, %c0_i32_0 : i32, i32, i32, i32
  }
  func.func @transform_4(%arg0: i32, %arg1: i32) -> (i32, i32, i32) {
    %c0_i32 = arith.constant 0 : i32
    %c0_i32_0 = arith.constant 0 : i32
    %c0_i32_1 = arith.constant 0 : i32
    %c0_i32_2 = arith.constant 0 : i32
    return %c0_i32, %c0_i32_0, %c0_i32_1 : i32, i32, i32
  }
  func.func @transform_5(%arg0: i32, %arg1: i32) -> (i32, i32) {
    %c0_i32 = arith.constant 0 : i32
    %c0_i32_0 = arith.constant 0 : i32
    %c0_i32_1 = arith.constant 0 : i32
    return %c0_i32, %c0_i32_0 : i32, i32
  }
  func.func @transform_6(%arg0: i32, %arg1: i32) -> (i32, i32, i32, i32) {
    %c0_i32 = arith.constant 0 : i32
    %c0_i32_0 = arith.constant 0 : i32
    %c0_i32_1 = arith.constant 0 : i32
    return %arg0, %arg1, %c0_i32, %c0_i32_0 : i32, i32, i32, i32
  }
  func.func @transform_7(%arg0: i32, %arg1: i32) -> (i32, i32, i32, i32) {
    %c0_i32 = arith.constant 0 : i32
    %c0_i32_0 = arith.constant 0 : i32
    %c0_i32_1 = arith.constant 0 : i32
    return %arg0, %arg1, %c0_i32, %c0_i32_0 : i32, i32, i32, i32
  }
}

</mosaic_0001>

<llo_original>
// kernel: block_forward.1
$region0: #{block_forward.1}
  #allocation0 [shape = 'u32[]', space=smem, size = 0x4, offset = 0x4, fixed_abs, tag = 'smem constant byte address 0x4 - core index']
  #allocation1 [shape = 'u32[144,128]{1,0:T(1,128)}', space=vmem, size = 0x12000, scoped, tag = 'internal scratch']
  %s0 = inlined_call_operand.vmem [shape: bf16[2,1,88,16], index: 0, kind: input, shape index: {}]
  %s1 = inlined_call_operand.vmem [shape: bf16[2,1,88,16], index: 1, kind: input, shape index: {}]
  %s2 = inlined_call_operand.vmem [shape: bf16[2,1,88,16], index: 2, kind: input, shape index: {}]
  %s3 = inlined_call_operand.vmem [shape: bf16[2,1,88,16], index: 3, kind: input, shape index: {}]
  %s4 = inlined_call_operand.vmem [shape: bf16[16,16,128], index: 4, kind: input, shape index: {}]
  %s5 = inlined_call_operand.vmem [shape: f32[72,1], index: 5, kind: input, shape index: {}]
  %s6 = inlined_call_operand.vmem [shape: f32[2,1,72,128], index: 6, kind: output, shape index: {0}]
  %s7 = inlined_call_operand.vmem [shape: f32[2,1,2,128], index: 7, kind: output, shape index: {1}]
  %8 = xla_tuple %s6, %s7
  %s9 = sld [smem:[#allocation0]]
  $region65: #{block_forward.1} parent=0
    _
  %s11 = ssub.s32 1, %s9
  %s12 = scalar_select 0, %s11, %s9
  loop: start=0, step=1, limit=4
  $region2: #{block_forward.1} parent=0 // loop_pre_header
    _
  $region3: #{block_forward.1} parent=0 // loop_header
    %s14 = sphi 0, %s18
    %p15 = scmp.ge.s32.totalorder %s14, 4
    %s21 = sphi 0, %s33
    %s22 = sphi 0, %s29
    %s23 = sphi 0, %s21
    %s24 = sphi 0, %s22
    %s25 = sphi 0, %s23
    %s26 = sphi 0, %s24
    %s38 = sphi 0, %s40
    %s41 = sphi 0, %s38
    %s42 = sphi 0, %s41
    %s58 = sphi 0, %s42
    %s66 = sphi 0, %s68
    %s69 = sphi 0, %s66
    %s70 = sphi 0, %s69
    %s86 = sphi 0, %s70
    %s94 = sphi 0, %s96
    %s97 = sphi 0, %s94
    %s98 = sphi 0, %s97
    %s114 = sphi 0, %s98
    %s122 = sphi 0, %s124
    %s125 = sphi 0, %s122
    %s126 = sphi 0, %s125
    %s142 = sphi 0, %s126
    %s146 = sphi 0, %s146
    %s148 = sphi 0, %s146
    %s149 = sphi 0, %s148
    %s163 = sphi 0, %s149
    %s167 = sphi 0, %s167
    %s169 = sphi 0, %s167
    %s170 = sphi 0, %s169
    %s184 = sphi 0, %s170
    %s192 = sphi 0, %s194
    %s195 = sphi 0, %s192
    %s196 = sphi 0, %s195
    %s212 = sphi 0, %s196
    %s220 = sphi 0, %s222
    %s223 = sphi 0, %s220
    %s224 = sphi 0, %s223
    %s240 = sphi 0, %s224
  $region4: #{block_forward.1} parent=0 // loop_header_branch
    %17 = sbr.rel (%p15) target = $region8
  $region5: #{block_forward.1} parent=0 // loop_body
    %s19 = ssub.s32 %s14, 1
    %s20 = ssub.s32 %s14, 2
    %s27 = sadd.s32 1, %s22
    %p28 = scmp.ge.s32.totalorder %s27, 1
    %s29 = scalar_select %p28, 0, %s27
    %s30 = sadd.s32 1, %s21
    %s31 = scalar_select %p28, %s30, %s21
    %p32 = scmp.ge.s32.totalorder %s31, 2
    %s33 = scalar_select %p32, 0, %s31
    %s34 = ssub.s32 %s21, %s33
    %s35 = ssub.s32 %s22, %s29
    %s36 = sor.u32 %s34, %s35
    %p37 = scmp.eq.s32.totalorder %s36, 0
    %s39 = sadd.s32 %s38, 1
    %s40 = scalar_select %p37, %s38, %s39
    %p43 = pneg %p37
    %p44 = scmp.eq.s32.totalorder %s14, 1
    %p45 = por %p43, %p44
    %p46 = scmp.ne.s32.totalorder %s38, %s41
    %p47 = scmp.eq.s32.totalorder %s14, 0
    %p48 = por %p46, %p47
    %p49 = scmp.ne.s32.totalorder %s38, %s41
    %p50 = scmp.eq.s32.totalorder %s19, 1
    %p51 = por %p49, %p50
    %p52 = scmp.ne.s32.totalorder %s41, %s42
    %p53 = scmp.eq.s32.totalorder %s19, 0
    %p54 = por %p52, %p53
    %p55 = scmp.ne.s32.totalorder %s41, %s42
    %p56 = scmp.eq.s32.totalorder %s20, 1
    %p57 = por %p55, %p56
    %p59 = scmp.ne.s32.totalorder %s42, %s58
    %p60 = scmp.eq.s32.totalorder %s20, 0
    %p61 = por %p59, %p60
    %s62 = ssub.s32 %s21, %s33
    %s63 = ssub.s32 %s22, %s29
    %s64 = sor.u32 %s62, %s63
    %p65 = scmp.eq.s32.totalorder %s64, 0
    %s67 = sadd.s32 %s66, 1
    %s68 = scalar_select %p65, %s66, %s67
    %p71 = pneg %p65
    %p72 = scmp.eq.s32.totalorder %s14, 1
    %p73 = por %p71, %p72
    %p74 = scmp.ne.s32.totalorder %s66, %s69
    %p75 = scmp.eq.s32.totalorder %s14, 0
    %p76 = por %p74, %p75
    %p77 = scmp.ne.s32.totalorder %s66, %s69
    %p78 = scmp.eq.s32.totalorder %s19, 1
    %p79 = por %p77, %p78
    %p80 = scmp.ne.s32.totalorder %s69, %s70
    %p81 = scmp.eq.s32.totalorder %s19, 0
    %p82 = por %p80, %p81
    %p83 = scmp.ne.s32.totalorder %s69, %s70
    %p84 = scmp.eq.s32.totalorder %s20, 1
    %p85 = por %p83, %p84
    %p87 = scmp.ne.s32.totalorder %s70, %s86
    %p88 = scmp.eq.s32.totalorder %s20, 0
    %p89 = por %p87, %p88
    %s90 = ssub.s32 %s21, %s33
    %s91 = ssub.s32 %s22, %s29
    %s92 = sor.u32 %s90, %s91
    %p93 = scmp.eq.s32.totalorder %s92, 0
    %s95 = sadd.s32 %s94, 1
    %s96 = scalar_select %p93, %s94, %s95
    %p99 = pneg %p93
    %p100 = scmp.eq.s32.totalorder %s14, 1
    %p101 = por %p99, %p100
    %p102 = scmp.ne.s32.totalorder %s94, %s97
    %p103 = scmp.eq.s32.totalorder %s14, 0
    %p104 = por %p102, %p103
    %p105 = scmp.ne.s32.totalorder %s94, %s97
    %p106 = scmp.eq.s32.totalorder %s19, 1
    %p107 = por %p105, %p106
    %p108 = scmp.ne.s32.totalorder %s97, %s98
    %p109 = scmp.eq.s32.totalorder %s19, 0
    %p110 = por %p108, %p109
    %p111 = scmp.ne.s32.totalorder %s97, %s98
    %p112 = scmp.eq.s32.totalorder %s20, 1
    %p113 = por %p111, %p112
    %p115 = scmp.ne.s32.totalorder %s98, %s114
    %p116 = scmp.eq.s32.totalorder %s20, 0
    %p117 = por %p115, %p116
    %s118 = ssub.s32 %s21, %s33
    %s119 = ssub.s32 %s22, %s29
    %s120 = sor.u32 %s118, %s119
    %p121 = scmp.eq.s32.totalorder %s120, 0
    %s123 = sadd.s32 %s122, 1
    %s124 = scalar_select %p121, %s122, %s123
    %p127 = pneg %p121
    %p128 = scmp.eq.s32.totalorder %s14, 1
    %p129 = por %p127, %p128
    %p130 = scmp.ne.s32.totalorder %s122, %s125
    %p131 = scmp.eq.s32.totalorder %s14, 0
    %p132 = por %p130, %p131
    %p133 = scmp.ne.s32.totalorder %s122, %s125
    %p134 = scmp.eq.s32.totalorder %s19, 1
    %p135 = por %p133, %p134
    %p136 = scmp.ne.s32.totalorder %s125, %s126
    %p137 = scmp.eq.s32.totalorder %s19, 0
    %p138 = por %p136, %p137
    %p139 = scmp.ne.s32.totalorder %s125, %s126
    %p140 = scmp.eq.s32.totalorder %s20, 1
    %p141 = por %p139, %p140
    %p143 = scmp.ne.s32.totalorder %s126, %s142
    %p144 = scmp.eq.s32.totalorder %s20, 0
    %p145 = por %p143, %p144
    %s147 = sadd.s32 %s146, 1
    %p150 = scmp.eq.s32.totalorder %s14, 1
    %p151 = scmp.ne.s32.totalorder %s146, %s148
    %p152 = scmp.eq.s32.totalorder %s14, 0
    %p153 = por %p151, %p152
    %p154 = scmp.ne.s32.totalorder %s146, %s148
    %p155 = scmp.eq.s32.totalorder %s19, 1
    %p156 = por %p154, %p155
    %p157 = scmp.ne.s32.totalorder %s148, %s149
    %p158 = scmp.eq.s32.totalorder %s19, 0
    %p159 = por %p157, %p158
    %p160 = scmp.ne.s32.totalorder %s148, %s149
    %p161 = scmp.eq.s32.totalorder %s20, 1
    %p162 = por %p160, %p161
    %p164 = scmp.ne.s32.totalorder %s149, %s163
    %p165 = scmp.eq.s32.totalorder %s20, 0
    %p166 = por %p164, %p165
    %s168 = sadd.s32 %s167, 1
    %p171 = scmp.eq.s32.totalorder %s14, 1
    %p172 = scmp.ne.s32.totalorder %s167, %s169
    %p173 = scmp.eq.s32.totalorder %s14, 0
    %p174 = por %p172, %p173
    %p175 = scmp.ne.s32.totalorder %s167, %s169
    %p176 = scmp.eq.s32.totalorder %s19, 1
    %p177 = por %p175, %p176
    %p178 = scmp.ne.s32.totalorder %s169, %s170
    %p179 = scmp.eq.s32.totalorder %s19, 0
    %p180 = por %p178, %p179
    %p181 = scmp.ne.s32.totalorder %s169, %s170
    %p182 = scmp.eq.s32.totalorder %s20, 1
    %p183 = por %p181, %p182
    %p185 = scmp.ne.s32.totalorder %s170, %s184
    %p186 = scmp.eq.s32.totalorder %s20, 0
    %p187 = por %p185, %p186
    %s188 = ssub.s32 %s21, %s33
    %s189 = ssub.s32 %s22, %s29
    %s190 = sor.u32 %s188, %s189
    %p191 = scmp.eq.s32.totalorder %s190, 0
    %s193 = sadd.s32 %s192, 1
    %s194 = scalar_select %p191, %s192, %s193
    %p197 = pneg %p191
    %p198 = scmp.eq.s32.totalorder %s14, 1
    %p199 = por %p197, %p198
    %p200 = scmp.ne.s32.totalorder %s192, %s195
    %p201 = scmp.eq.s32.totalorder %s14, 0
    %p202 = por %p200, %p201
    %p203 = scmp.ne.s32.totalorder %s192, %s195
    %p204 = scmp.eq.s32.totalorder %s19, 1
    %p205 = por %p203, %p204
    %p206 = scmp.ne.s32.totalorder %s195, %s196
    %p207 = scmp.eq.s32.totalorder %s19, 0
    %p208 = por %p206, %p207
    %p209 = scmp.ne.s32.totalorder %s195, %s196
    %p210 = scmp.eq.s32.totalorder %s20, 1
    %p211 = por %p209, %p210
    %p213 = scmp.ne.s32.totalorder %s196, %s212
    %p214 = scmp.eq.s32.totalorder %s20, 0
    %p215 = por %p213, %p214
    %s216 = ssub.s32 %s21, %s33
    %s217 = ssub.s32 %s22, %s29
    %s218 = sor.u32 %s216, %s217
    %p219 = scmp.eq.s32.totalorder %s218, 0
    %s221 = sadd.s32 %s220, 1
    %s222 = scalar_select %p219, %s220, %s221
    %p225 = pneg %p219
    %p226 = scmp.eq.s32.totalorder %s14, 1
    %p227 = por %p225, %p226
    %p228 = scmp.ne.s32.totalorder %s220, %s223
    %p229 = scmp.eq.s32.totalorder %s14, 0
    %p230 = por %p228, %p229
    %p231 = scmp.ne.s32.totalorder %s220, %s223
    %p232 = scmp.eq.s32.totalorder %s19, 1
    %p233 = por %p231, %p232
    %p234 = scmp.ne.s32.totalorder %s223, %s224
    %p235 = scmp.eq.s32.totalorder %s19, 0
    %p236 = por %p234, %p235
    %p237 = scmp.ne.s32.totalorder %s223, %s224
    %p238 = scmp.eq.s32.totalorder %s20, 1
    %p239 = por %p237, %p238
    %p241 = scmp.ne.s32.totalorder %s224, %s240
    %p242 = scmp.eq.s32.totalorder %s20, 0
    %p243 = por %p241, %p242
    %p244 = scmp.le.s32.totalorder 1, %s14
    %p245 = scmp.lt.s32.totalorder %s14, 3
    %p246 = pnand %p244, %p245
    %p247 = pneg %p246
    // Predicated region
    $region9: #{block_forward.1} parent=5 // pred_check
      _
    $region10: #{block_forward.1} parent=5 // pred_check_branch
      %249 = sbr.rel (%p246) target = $region12
    $region11: #{block_forward.1} parent=5 // pred_region
      %s250 = ssub.s32 %s14, 1
      // Predicated region
      $region13: #{block_forward.1} parent=11 // pred_check
        %p251 = pneg %p159
      $region14: #{block_forward.1} parent=11 // pred_check_branch
        %253 = sbr.rel (%p251) target = $region16
      $region15: #{block_forward.1} parent=11 // pred_region
        _
      $region16: #{block_forward.1} parent=11 // pred_fallthru
        _
      // Predicated region
      $region17: #{block_forward.1} parent=11 // pred_check
        %p254 = pneg %p180
      $region18: #{block_forward.1} parent=11 // pred_check_branch
        %256 = sbr.rel (%p254) target = $region20
      $region19: #{block_forward.1} parent=11 // pred_region
        _
      $region20: #{block_forward.1} parent=11 // pred_fallthru
        _
    $region12: #{block_forward.1} parent=5 // pred_fallthru
      _
    %p257 = scmp.lt.s32.totalorder %s14, 2
    // Predicated region
    $region21: #{block_forward.1} parent=5 // pred_check
      %p258 = pneg %p257
    $region22: #{block_forward.1} parent=5 // pred_check_branch
      %260 = sbr.rel (%p258) target = $region24
    $region23: #{block_forward.1} parent=5 // pred_region
      // Predicated region
      $region25: #{block_forward.1} parent=23 // pred_check
        %p261 = pneg %p48
      $region26: #{block_forward.1} parent=23 // pred_check_branch
        %263 = sbr.rel (%p261) target = $region28
      $region27: #{block_forward.1} parent=23 // pred_region
        %p264 = scmp.lt.s32.totalorder %s21, 1
        %s265 = scalar_select %p264, %s21, 1
        %p266 = scmp.lt.s32.totalorder %s22, 0
        %s267 = scalar_select %p266, %s22, 0
        %s268 = smul.addr %s267, 11
        %s269 = smul.addr %s265, 11
        %s270 = sadd.s32 %s268, %s269
        %s271 = smul.addr %s270, 4
        %s272 = scalar_lea.vmem %s0, %s271
      $region28: #{block_forward.1} parent=23 // pred_fallthru
        _
      // Predicated region
      $region29: #{block_forward.1} parent=23 // pred_check
        %p273 = pneg %p76
      $region30: #{block_forward.1} parent=23 // pred_check_branch
        %275 = sbr.rel (%p273) target = $region32
      $region31: #{block_forward.1} parent=23 // pred_region
        %p276 = scmp.lt.s32.totalorder %s21, 1
        %s277 = scalar_select %p276, %s21, 1
        %p278 = scmp.lt.s32.totalorder %s22, 0
        %s279 = scalar_select %p278, %s22, 0
        %s280 = smul.addr %s279, 11
        %s281 = smul.addr %s277, 11
        %s282 = sadd.s32 %s280, %s281
        %s283 = smul.addr %s282, 4
        %s284 = scalar_lea.vmem %s1, %s283
      $region32: #{block_forward.1} parent=23 // pred_fallthru
        _
      // Predicated region
      $region33: #{block_forward.1} parent=23 // pred_check
        %p285 = pneg %p104
      $region34: #{block_forward.1} parent=23 // pred_check_branch
        %287 = sbr.rel (%p285) target = $region36
      $region35: #{block_forward.1} parent=23 // pred_region
        %p288 = scmp.lt.s32.totalorder %s21, 1
        %s289 = scalar_select %p288, %s21, 1
        %p290 = scmp.lt.s32.totalorder %s22, 0
        %s291 = scalar_select %p290, %s22, 0
        %s292 = smul.addr %s291, 11
        %s293 = smul.addr %s289, 11
        %s294 = sadd.s32 %s292, %s293
        %s295 = smul.addr %s294, 4
        %s296 = scalar_lea.vmem %s2, %s295
      $region36: #{block_forward.1} parent=23 // pred_fallthru
        _
      // Predicated region
      $region37: #{block_forward.1} parent=23 // pred_check
        %p297 = pneg %p132
      $region38: #{block_forward.1} parent=23 // pred_check_branch
        %299 = sbr.rel (%p297) target = $region40
      $region39: #{block_forward.1} parent=23 // pred_region
        %p300 = scmp.lt.s32.totalorder %s21, 1
        %s301 = scalar_select %p300, %s21, 1
        %p302 = scmp.lt.s32.totalorder %s22, 0
        %s303 = scalar_select %p302, %s22, 0
        %s304 = smul.addr %s303, 11
        %s305 = smul.addr %s301, 11
        %s306 = sadd.s32 %s304, %s305
        %s307 = smul.addr %s306, 4
        %s308 = scalar_lea.vmem %s3, %s307
      $region40: #{block_forward.1} parent=23 // pred_fallthru
        _
    $region24: #{block_forward.1} parent=5 // pred_fallthru
      _
    %p309 = scmp.le.s32.totalorder 1, %s14
    %p310 = scmp.lt.s32.totalorder %s14, 3
    %p311 = pnand %p309, %p310
    %p312 = pneg %p311
    // Predicated region
    $region41: #{block_forward.1} parent=5 // pred_check
      _
    $region42: #{block_forward.1} parent=5 // pred_check_branch
      %314 = sbr.rel (%p311) target = $region44
    $region43: #{block_forward.1} parent=5 // pred_region
      %s315 = ssub.s32 %s14, 1
      %p316 = scmp.lt.s32.totalorder %s23, 1
      %s317 = scalar_select %p316, %s23, 1
      %p318 = scmp.lt.s32.totalorder %s24, 0
      %s319 = scalar_select %p318, %s24, 0
      %s320 = smul.addr %s319, 11
      %s321 = smul.addr %s317, 11
      %s322 = sadd.s32 %s320, %s321
      %s323 = smul.addr %s322, 4
      %s324 = scalar_lea.vmem %s0, %s323
      %p325 = pneg %p54
      %p326 = pneg %p51
      %p327 = scmp.lt.s32.totalorder %s23, 1
      %s328 = scalar_select %p327, %s23, 1
      %p329 = scmp.lt.s32.totalorder %s24, 0
      %s330 = scalar_select %p329, %s24, 0
      %s331 = smul.addr %s330, 11
      %s332 = smul.addr %s328, 11
      %s333 = sadd.s32 %s331, %s332
      %s334 = smul.addr %s333, 4
      %s335 = scalar_lea.vmem %s1, %s334
      %p336 = pneg %p82
      %p337 = pneg %p79
      %p338 = scmp.lt.s32.totalorder %s23, 1
      %s339 = scalar_select %p338, %s23, 1
      %p340 = scmp.lt.s32.totalorder %s24, 0
      %s341 = scalar_select %p340, %s24, 0
      %s342 = smul.addr %s341, 11
      %s343 = smul.addr %s339, 11
      %s344 = sadd.s32 %s342, %s343
      %s345 = smul.addr %s344, 4
      %s346 = scalar_lea.vmem %s2, %s345
      %p347 = pneg %p110
      %p348 = pneg %p107
      %p349 = scmp.lt.s32.totalorder %s23, 1
      %s350 = scalar_select %p349, %s23, 1
      %p351 = scmp.lt.s32.totalorder %s24, 0
      %s352 = scalar_select %p351, %s24, 0
      %s353 = smul.addr %s352, 11
      %s354 = smul.addr %s350, 11
      %s355 = sadd.s32 %s353, %s354
      %s356 = smul.addr %s355, 4
      %s357 = scalar_lea.vmem %s3, %s356
      %p358 = pneg %p138
      %p359 = pneg %p135
      %p360 = pneg %p159
      %p361 = pneg %p156
      %p362 = pneg %p180
      %p363 = pneg %p177
      %p364 = pneg %p208
      %p365 = pneg %p205
      %p366 = scmp.lt.s32.totalorder %s23, 1
      %s367 = scalar_select %p366, %s23, 1
      %p368 = scmp.lt.s32.totalorder %s24, 0
      %s369 = scalar_select %p368, %s24, 0
      %s370 = smul.addr %s369, 9
      %s371 = smul.addr %s367, 9
      %s372 = sadd.s32 %s370, %s371
      %s373 = smul.addr %s372, 8
      %s374 = scalar_lea.vmem %s6, %s373
      %p375 = pneg %p236
      %p376 = pneg %p233
      %p377 = scmp.lt.s32.totalorder %s23, 1
      %s378 = scalar_select %p377, %s23, 1
      %p379 = scmp.lt.s32.totalorder %s24, 0
      %s380 = scalar_select %p379, %s24, 0
      %s381 = sadd.s32 %s380, %s378
      %s382 = smul.addr %s381, 2
      %s383 = scalar_lea.vmem %s7, %s382
      %p384 = scmp.lt.s32.totalorder %s23, 1
      %s385 = scalar_select %p384, %s23, 1
      %p386 = scmp.lt.s32.totalorder %s24, 0
      %s387 = scalar_select %p386, %s24, 0
      %s388 = smul.addr %s387, 11
      %s389 = smul.addr %s385, 11
      %s390 = sadd.s32 %s388, %s389
      %s391 = smul.addr %s390, 4
      %s392 = scalar_lea.vmem %s0, %s391
      %p393 = scmp.lt.s32.totalorder %s23, 1
      %s394 = scalar_select %p393, %s23, 1
      %p395 = scmp.lt.s32.totalorder %s24, 0
      %s396 = scalar_select %p395, %s24, 0
      %s397 = smul.addr %s396, 11
      %s398 = smul.addr %s394, 11
      %s399 = sadd.s32 %s397, %s398
      %s400 = smul.addr %s399, 4
      %s401 = scalar_lea.vmem %s1, %s400
      %p402 = scmp.lt.s32.totalorder %s23, 1
      %s403 = scalar_select %p402, %s23, 1
      %p404 = scmp.lt.s32.totalorder %s24, 0
      %s405 = scalar_select %p404, %s24, 0
      %s406 = smul.addr %s405, 11
      %s407 = smul.addr %s403, 11
      %s408 = sadd.s32 %s406, %s407
      %s409 = smul.addr %s408, 4
      %s410 = scalar_lea.vmem %s2, %s409
      %p411 = scmp.lt.s32.totalorder %s23, 1
      %s412 = scalar_select %p411, %s23, 1
      %p413 = scmp.lt.s32.totalorder %s24, 0
      %s414 = scalar_select %p413, %s24, 0
      %s415 = smul.addr %s414, 11
      %s416 = smul.addr %s412, 11
      %s417 = sadd.s32 %s415, %s416
      %s418 = smul.addr %s417, 4
      %s419 = scalar_lea.vmem %s3, %s418
      %p420 = scmp.lt.s32.totalorder %s23, 1
      %s421 = scalar_select %p420, %s23, 1
      %p422 = scmp.lt.s32.totalorder %s24, 0
      %s423 = scalar_select %p422, %s24, 0
      %s424 = smul.addr %s423, 9
      %s425 = smul.addr %s421, 9
      %s426 = sadd.s32 %s424, %s425
      %s427 = smul.addr %s426, 8
      %s428 = scalar_lea.vmem %s6, %s427
      %p429 = scmp.lt.s32.totalorder %s23, 1
      %s430 = scalar_select %p429, %s23, 1
      %p431 = scmp.lt.s32.totalorder %s24, 0
      %s432 = scalar_select %p431, %s24, 0
      %s433 = sadd.s32 %s432, %s430
      %s434 = smul.addr %s433, 2
      %s435 = scalar_lea.vmem %s7, %s434
      %v437 = vld [vmem:[%s392] sm:$0xf]
      %v438 = vld [vmem:[%s392 + $0x4] sm:$0xf]
      %v439 = vld [vmem:[%s392 + $0x8] sm:$0xf]
      %v440 = vld [vmem:[%s392 + $0xc] sm:$0xf]
      %v441 = vld [vmem:[%s392 + $0x10] sm:$0xf]
      %v442 = vld [vmem:[%s392 + $0x14] sm:$0xf]
      %v443 = vld [vmem:[%s392 + $0x18] sm:$0xf]
      %v444 = vld [vmem:[%s392 + $0x1c] sm:$0xf]
      %v445 = vld [vmem:[%s392 + $0x20] sm:$0xf]
      %v446 = vld [vmem:[%s4] sm:$0xf]
      %v447 = vld [vmem:[%s4 + $0x4] sm:$0xf]
      %v457 = vunpack.c.l.b16 %v437
      %v458 = vunpack.c.l.b16 %v438
      %v459 = vunpack.c.l.b16 %v439
      %v460 = vunpack.c.l.b16 %v440
      %v461 = vunpack.c.l.b16 %v441
      %v462 = vunpack.c.l.b16 %v442
      %v463 = vunpack.c.l.b16 %v443
      %v464 = vunpack.c.l.b16 %v444
      %v465 = vunpack.c.l.b16 %v445
      %v466 = vpack.c.b16 %v458, %v457
      %v467 = vpack.c.b16 %v460, %v459
      %v468 = vpack.c.b16 %v462, %v461
      %v469 = vpack.c.b16 %v464, %v463
      %v470 = vpack.c.b16 %v465, %v465
      %v473 = vunpack.c.l.b16 %v446
      %v474 = vunpack.c.l.b16 %v447
      %v475 = vpack.c.b16 %v474, %v473
      %vm477 = vcmask 130048
      %v479 = vsel %vm477, %v466, 0
      %v482 = vsel %vm477, %v467, 0
      %v485 = vsel %vm477, %v468, 0
      %v488 = vsel %vm477, %v469, 0
      %v491 = vsel %vm477, %v470, 0
      %493 = vmatprep.subr.bf16.mxu0 0
      %494 = vmatpush1.bf16.msra.mxu0 %v475
      %495 = vmatprep.subr.bf16.mxu0 0
      %496 = vmatpush1.bf16.msra.mxu0 0
      %497 = vmatprep.subr.bf16.mxu0 0
      %498 = vmatpush1.bf16.msra.mxu0 0
      %499 = vmatprep.subr.bf16.mxu0 0
      %500 = vmatpush1.bf16.msra.mxu0 0
      %501 = vmatprep.subr.bf16.mxu0 0
      %502 = vmatpush1.bf16.msra.mxu0 0
      %503 = vmatprep.subr.bf16.mxu0 0
      %504 = vmatpush1.bf16.msra.mxu0 0
      %505 = vmatprep.subr.bf16.mxu0 0
      %506 = vmatpush1.bf16.msra.mxu0 0
      %507 = vmatprep.subr.bf16.mxu0 0
      %508 = vmatpush1.bf16.msra.mxu0 0
      %509 = vmatprep.subr.bf16.mxu0 0
      %510 = vmatpush1.bf16.msra.mxu0 0
      %511 = vmatprep.subr.bf16.mxu0 0
      %512 = vmatpush1.bf16.msra.mxu0 0
      %513 = vmatprep.subr.bf16.mxu0 0
      %514 = vmatpush1.bf16.msra.mxu0 0
      %515 = vmatprep.subr.bf16.mxu0 0
      %516 = vmatpush1.bf16.msra.mxu0 0
      %517 = vmatprep.subr.bf16.mxu0 0
      %518 = vmatpush1.bf16.msra.mxu0 0
      %519 = vmatprep.subr.bf16.mxu0 0
      %520 = vmatpush1.bf16.msra.mxu0 0
      %521 = vmatprep.subr.bf16.mxu0 0
      %522 = vmatpush1.bf16.msra.mxu0 0
      %523 = vmatprep.subr.bf16.mxu0 0
      %524 = vmatpush1.bf16.msra.mxu0 0
      %525 = vmatprep.mubr.bf16.mxu0 0
      %526 = vmatmul.mubr.bf16.gmra.mrb[0].mxu0 %v479
      %v527 = vpop.f32.mrb[0].mxu0
      %v528 = vadd.f32 0.0, %v527
      %v529 = vpop.f32.mrb[0].mxu0
      %v530 = vpop.f32.mrb[0].mxu0
      %v531 = vadd.f32 0.0, %v530
      %v532 = vpop.f32.mrb[0].mxu0
      %533 = vmatprep.mubr.bf16.mxu0 0
      %534 = vmatmul.mubr.bf16.gmra.mrb[0].mxu0 %v482
      %v535 = vpop.f32.mrb[0].mxu0
      %v536 = vadd.f32 0.0, %v535
      %v537 = vpop.f32.mrb[0].mxu0
      %v538 = vpop.f32.mrb[0].mxu0
      %v539 = vadd.f32 0.0, %v538
      %v540 = vpop.f32.mrb[0].mxu0
      %541 = vmatprep.mubr.bf16.mxu0 0
      %542 = vmatmul.mubr.bf16.gmra.mrb[0].mxu0 %v485
      %v543 = vpop.f32.mrb[0].mxu0
      %v544 = vadd.f32 0.0, %v543
      %v545 = vpop.f32.mrb[0].mxu0
      %v546 = vpop.f32.mrb[0].mxu0
      %v547 = vadd.f32 0.0, %v546
      %v548 = vpop.f32.mrb[0].mxu0
      %549 = vmatprep.mubr.bf16.mxu0 0
      %550 = vmatmul.mubr.bf16.gmra.mrb[0].mxu0 %v488
      %v551 = vpop.f32.mrb[0].mxu0
      %v552 = vadd.f32 0.0, %v551
      %v553 = vpop.f32.mrb[0].mxu0
      %v554 = vpop.f32.mrb[0].mxu0
      %v555 = vadd.f32 0.0, %v554
      %v556 = vpop.f32.mrb[0].mxu0
      %557 = vmatprep.mubr.bf16.mxu0 0
      %558 = vmatmul.mubr.bf16.gmra.mrb[0].mxu0 %v491
      %v559 = vpop.f32.mrb[0].mxu0
      %v560 = vadd.f32 0.0, %v559
      %v561 = vpop.f32.mrb[0].mxu0
      %v562 = vpop.f32.mrb[0].mxu0
      %v563 = vpop.f32.mrb[0].mxu0
      %564 = vdwg.mxu0
      %565 = vst [vmem:[%s428] sm:$0xff] %v528
      %566 = vst [vmem:[%s428 + $0x8] sm:$0xff] %v531
      %567 = vst [vmem:[%s428 + $0x10] sm:$0xff] %v536
      %568 = vst [vmem:[%s428 + $0x18] sm:$0xff] %v539
      %569 = vst [vmem:[%s428 + $0x20] sm:$0xff] %v544
      %570 = vst [vmem:[%s428 + $0x28] sm:$0xff] %v547
      %571 = vst [vmem:[%s428 + $0x30] sm:$0xff] %v552
      %572 = vst [vmem:[%s428 + $0x38] sm:$0xff] %v555
      %573 = vst [vmem:[%s428 + $0x40] sm:$0xff] %v560
      %v574 = vld [vmem:[%s401] sm:$0xf]
      %v575 = vld [vmem:[%s401 + $0x4] sm:$0xf]
      %v576 = vld [vmem:[%s401 + $0x8] sm:$0xf]
      %v577 = vld [vmem:[%s401 + $0xc] sm:$0xf]
      %v578 = vld [vmem:[%s401 + $0x10] sm:$0xf]
      %v579 = vld [vmem:[%s401 + $0x14] sm:$0xf]
      %v580 = vld [vmem:[%s401 + $0x18] sm:$0xf]
      %v581 = vld [vmem:[%s401 + $0x1c] sm:$0xf]
      %v582 = vld [vmem:[%s401 + $0x20] sm:$0xf]
      %s583 = scalar_lea.vmem %s4, 8
      %v584 = vld [vmem:[%s583] sm:$0xf]
      %v585 = vld [vmem:[%s583 + $0x4] sm:$0xf]
      %v595 = vunpack.c.l.b16 %v574
      %v596 = vunpack.c.l.b16 %v575
      %v597 = vunpack.c.l.b16 %v576
      %v598 = vunpack.c.l.b16 %v577
      %v599 = vunpack.c.l.b16 %v578
      %v600 = vunpack.c.l.b16 %v579
      %v601 = vunpack.c.l.b16 %v580
      %v602 = vunpack.c.l.b16 %v581
      %v603 = vunpack.c.l.b16 %v582
      %v604 = vpack.c.b16 %v596, %v595
      %v605 = vpack.c.b16 %v598, %v597
      %v606 = vpack.c.b16 %v600, %v599
      %v607 = vpack.c.b16 %v602, %v601
      %v608 = vpack.c.b16 %v603, %v603
      %v611 = vunpack.c.l.b16 %v584
      %v612 = vunpack.c.l.b16 %v585
      %v613 = vpack.c.b16 %v612, %v611
      %v616 = vsel %vm477, %v604, 0
      %v619 = vsel %vm477, %v605, 0
      %v622 = vsel %vm477, %v606, 0
      %v625 = vsel %vm477, %v607, 0
      %v628 = vsel %vm477, %v608, 0
      %630 = vmatprep.subr.bf16.mxu0 0
      %631 = vmatpush1.bf16.msra.mxu0 %v613
      %632 = vmatprep.subr.bf16.mxu0 0
      %633 = vmatpush1.bf16.msra.mxu0 0
      %634 = vmatprep.subr.bf16.mxu0 0
      %635 = vmatpush1.bf16.msra.mxu0 0
      %636 = vmatprep.subr.bf16.mxu0 0
      %637 = vmatpush1.bf16.msra.mxu0 0
      %638 = vmatprep.subr.bf16.mxu0 0
      %639 = vmatpush1.bf16.msra.mxu0 0
      %640 = vmatprep.subr.bf16.mxu0 0
      %641 = vmatpush1.bf16.msra.mxu0 0
      %642 = vmatprep.subr.bf16.mxu0 0
      %643 = vmatpush1.bf16.msra.mxu0 0
      %644 = vmatprep.subr.bf16.mxu0 0
      %645 = vmatpush1.bf16.msra.mxu0 0
      %646 = vmatprep.subr.bf16.mxu0 0
      %647 = vmatpush1.bf16.msra.mxu0 0
      %648 = vmatprep.subr.bf16.mxu0 0
      %649 = vmatpush1.bf16.msra.mxu0 0
      %650 = vmatprep.subr.bf16.mxu0 0
      %651 = vmatpush1.bf16.msra.mxu0 0
      %652 = vmatprep.subr.bf16.mxu0 0
      %653 = vmatpush1.bf16.msra.mxu0 0
      %654 = vmatprep.subr.bf16.mxu0 0
      %655 = vmatpush1.bf16.msra.mxu0 0
      %656 = vmatprep.subr.bf16.mxu0 0
      %657 = vmatpush1.bf16.msra.mxu0 0
      %658 = vmatprep.subr.bf16.mxu0 0
      %659 = vmatpush1.bf16.msra.mxu0 0
      %660 = vmatprep.subr.bf16.mxu0 0
      %661 = vmatpush1.bf16.msra.mxu0 0
      %662 = vmatprep.mubr.bf16.mxu0 0
      %663 = vmatmul.mubr.bf16.gmra.mrb[0].mxu0 %v616
      %v664 = vpop.f32.mrb[0].mxu0
      %v665 = vadd.f32 0.0, %v664
      %v666 = vpop.f32.mrb[0].mxu0
      %v667 = vpop.f32.mrb[0].mxu0
      %v668 = vadd.f32 0.0, %v667
      %v669 = vpop.f32.mrb[0].mxu0
      %670 = vmatprep.mubr.bf16.mxu0 0
      %671 = vmatmul.mubr.bf16.gmra.mrb[0].mxu0 %v619
      %v672 = vpop.f32.mrb[0].mxu0
      %v673 = vadd.f32 0.0, %v672
      %v674 = vpop.f32.mrb[0].mxu0
      %v675 = vpop.f32.mrb[0].mxu0
      %v676 = vadd.f32 0.0, %v675
      %v677 = vpop.f32.mrb[0].mxu0
      %678 = vmatprep.mubr.bf16.mxu0 0
      %679 = vmatmul.mubr.bf16.gmra.mrb[0].mxu0 %v622
      %v680 = vpop.f32.mrb[0].mxu0
      %v681 = vadd.f32 0.0, %v680
      %v682 = vpop.f32.mrb[0].mxu0
      %v683 = vpop.f32.mrb[0].mxu0
      %v684 = vadd.f32 0.0, %v683
      %v685 = vpop.f32.mrb[0].mxu0
      %686 = vmatprep.mubr.bf16.mxu0 0
      %687 = vmatmul.mubr.bf16.gmra.mrb[0].mxu0 %v625
      %v688 = vpop.f32.mrb[0].mxu0
      %v689 = vadd.f32 0.0, %v688
      %v690 = vpop.f32.mrb[0].mxu0
      %v691 = vpop.f32.mrb[0].mxu0
      %v692 = vadd.f32 0.0, %v691
      %v693 = vpop.f32.mrb[0].mxu0
      %694 = vmatprep.mubr.bf16.mxu0 0
      %695 = vmatmul.mubr.bf16.gmra.mrb[0].mxu0 %v628
      %v696 = vpop.f32.mrb[0].mxu0
      %v697 = vadd.f32 0.0, %v696
      %v698 = vpop.f32.mrb[0].mxu0
      %v699 = vpop.f32.mrb[0].mxu0
      %v700 = vpop.f32.mrb[0].mxu0
      %701 = vdwg.mxu0
      %v702 = vld [vmem:[%s428] sm:$0xff]
      %v703 = vld [vmem:[%s428 + $0x8] sm:$0xff]
      %v704 = vld [vmem:[%s428 + $0x10] sm:$0xff]
      %v705 = vld [vmem:[%s428 + $0x18] sm:$0xff]
      %v706 = vld [vmem:[%s428 + $0x20] sm:$0xff]
      %v707 = vld [vmem:[%s428 + $0x28] sm:$0xff]
      %v708 = vld [vmem:[%s428 + $0x30] sm:$0xff]
      %v709 = vld [vmem:[%s428 + $0x38] sm:$0xff]
      %v710 = vld [vmem:[%s428 + $0x40] sm:$0xff]
      %v711 = vadd.f32 %v702, %v665
      %v712 = vadd.f32 %v703, %v668
      %v713 = vadd.f32 %v704, %v673
      %v714 = vadd.f32 %v705, %v676
      %v715 = vadd.f32 %v706, %v681
      %v716 = vadd.f32 %v707, %v684
      %v717 = vadd.f32 %v708, %v689
      %v718 = vadd.f32 %v709, %v692
      %v719 = vadd.f32 %v710, %v697
      %720 = vst [vmem:[%s428] sm:$0xff] %v711
      %721 = vst [vmem:[%s428 + $0x8] sm:$0xff] %v712
      %722 = vst [vmem:[%s428 + $0x10] sm:$0xff] %v713
      %723 = vst [vmem:[%s428 + $0x18] sm:$0xff] %v714
      %724 = vst [vmem:[%s428 + $0x20] sm:$0xff] %v715
      %725 = vst [vmem:[%s428 + $0x28] sm:$0xff] %v716
      %726 = vst [vmem:[%s428 + $0x30] sm:$0xff] %v717
      %727 = vst [vmem:[%s428 + $0x38] sm:$0xff] %v718
      %728 = vst [vmem:[%s428 + $0x40] sm:$0xff] %v719
      %v729 = vld [vmem:[%s392] sm:$0xf]
      %v730 = vld [vmem:[%s392 + $0x4] sm:$0xf]
      %v731 = vld [vmem:[%s392 + $0x8] sm:$0xf]
      %v732 = vld [vmem:[%s392 + $0xc] sm:$0xf]
      %v733 = vld [vmem:[%s392 + $0x10] sm:$0xf]
      %v734 = vld [vmem:[%s392 + $0x14] sm:$0xf]
      %v735 = vld [vmem:[%s392 + $0x18] sm:$0xf]
      %v736 = vld [vmem:[%s392 + $0x1c] sm:$0xf]
      %v737 = vld [vmem:[%s392 + $0x20] sm:$0xf]
      %v738 = vld [vmem:[%s392 + $0x24] sm:$0x1]
      %s739 = scalar_lea.vmem %s4, 16
      %v740 = vld [vmem:[%s739] sm:$0xf]
      %v741 = vld [vmem:[%s739 + $0x4] sm:$0xf]
      %v752 = vunpack.c.l.b16 %v729
      %v753 = vunpack.c.l.b16 %v730
      %v754 = vunpack.c.l.b16 %v731
      %v755 = vunpack.c.l.b16 %v732
      %v756 = vunpack.c.l.b16 %v733
      %v757 = vunpack.c.l.b16 %v734
      %v758 = vunpack.c.l.b16 %v735
      %v759 = vunpack.c.l.b16 %v736
      %v760 = vunpack.c.l.b16 %v737
      %v761 = vunpack.c.l.b16 %v738
      %v762 = vpack.c.b16 %v753, %v752
      %v763 = vpack.c.b16 %v755, %v754
      %v764 = vpack.c.b16 %v757, %v756
      %v765 = vpack.c.b16 %v759, %v758
      %v766 = vpack.c.b16 %v761, %v760
      %vm767 = vsmask.f32 7424
      %v769 = vshrl.u32 %v762, 16
      %v771 = vshll.u32 %v762, 16
      %v773 = vrot.slane %v771, 1
      %v774 = vor.u32 %v769, %v773
      %v776 = vshll.u32 %v763, 16
      %v778 = vrot.slane %v776, 1
      %v779 = vsel %vm767, %v774, %v778
      %v780 = vshrl.u32 %v763, 16
      %v782 = vor.u32 %v780, %v778
      %v784 = vshll.u32 %v764, 16
      %v786 = vrot.slane %v784, 1
      %v787 = vsel %vm767, %v782, %v786
      %v788 = vshrl.u32 %v764, 16
      %v790 = vor.u32 %v788, %v786
      %v792 = vshll.u32 %v765, 16
      %v794 = vrot.slane %v792, 1
      %v795 = vsel %vm767, %v790, %v794
      %v796 = vshrl.u32 %v765, 16
      %v798 = vor.u32 %v796, %v794
      %v800 = vshll.u32 %v766, 16
      %v802 = vrot.slane %v800, 1
      %v803 = vsel %vm767, %v798, %v802
      %v804 = vshrl.u32 %v766, 16
      %v806 = vor.u32 %v804, %v802
      %v809 = vunpack.c.l.b16 %v740
      %v810 = vunpack.c.l.b16 %v741
      %v811 = vpack.c.b16 %v810, %v809
      %v814 = vsel %vm477, %v779, 0
      %v817 = vsel %vm477, %v787, 0
      %v820 = vsel %vm477, %v795, 0
      %v823 = vsel %vm477, %v803, 0
      %v826 = vsel %vm477, %v806, 0
      %828 = vmatprep.subr.bf16.mxu0 0
      %829 = vmatpush1.bf16.msra.mxu0 %v811
      %830 = vmatprep.subr.bf16.mxu0 0
      %831 = vmatpush1.bf16.msra.mxu0 0
      %832 = vmatprep.subr.bf16.mxu0 0
      %833 = vmatpush1.bf16.msra.mxu0 0
      %834 = vmatprep.subr.bf16.mxu0 0
      %835 = vmatpush1.bf16.msra.mxu0 0
      %836 = vmatprep.subr.bf16.mxu0 0
      %837 = vmatpush1.bf16.msra.mxu0 0
      %838 = vmatprep.subr.bf16.mxu0 0
      %839 = vmatpush1.bf16.msra.mxu0 0
      %840 = vmatprep.subr.bf16.mxu0 0
      %841 = vmatpush1.bf16.msra.mxu0 0
      %842 = vmatprep.subr.bf16.mxu0 0
      %843 = vmatpush1.bf16.msra.mxu0 0
      %844 = vmatprep.subr.bf16.mxu0 0
      %845 = vmatpush1.bf16.msra.mxu0 0
      %846 = vmatprep.subr.bf16.mxu0 0
      %847 = vmatpush1.bf16.msra.mxu0 0
      %848 = vmatprep.subr.bf16.mxu0 0
      %849 = vmatpush1.bf16.msra.mxu0 0
      %850 = vmatprep.subr.bf16.mxu0 0
      %851 = vmatpush1.bf16.msra.mxu0 0
      %852 = vmatprep.subr.bf16.mxu0 0
      %853 = vmatpush1.bf16.msra.mxu0 0
      %854 = vmatprep.subr.bf16.mxu0 0
      %855 = vmatpush1.bf16.msra.mxu0 0
      %856 = vmatprep.subr.bf16.mxu0 0
      %857 = vmatpush1.bf16.msra.mxu0 0
      %858 = vmatprep.subr.bf16.mxu0 0
      %859 = vmatpush1.bf16.msra.mxu0 0
      %860 = vmatprep.mubr.bf16.mxu0 0
      %861 = vmatmul.mubr.bf16.gmra.mrb[0].mxu0 %v814
      %v862 = vpop.f32.mrb[0].mxu0
      %v863 = vadd.f32 0.0, %v862
      %v864 = vpop.f32.mrb[0].mxu0
      %v865 = vpop.f32.mrb[0].mxu0
      %v866 = vadd.f32 0.0, %v865
      %v867 = vpop.f32.mrb[0].mxu0
      %868 = vmatprep.mubr.bf16.mxu0 0
      %869 = vmatmul.mubr.bf16.gmra.mrb[0].mxu0 %v817
      %v870 = vpop.f32.mrb[0].mxu0
      %v871 = vadd.f32 0.0, %v870
      %v872 = vpop.f32.mrb[0].mxu0
      %v873 = vpop.f32.mrb[0].mxu0
      %v874 = vadd.f32 0.0, %v873
      %v875 = vpop.f32.mrb[0].mxu0
      %876 = vmatprep.mubr.bf16.mxu0 0
      %877 = vmatmul.mubr.bf16.gmra.mrb[0].mxu0 %v820
      %v878 = vpop.f32.mrb[0].mxu0
      %v879 = vadd.f32 0.0, %v878
      %v880 = vpop.f32.mrb[0].mxu0
      %v881 = vpop.f32.mrb[0].mxu0
      %v882 = vadd.f32 0.0, %v881
      %v883 = vpop.f32.mrb[0].mxu0
      %884 = vmatprep.mubr.bf16.mxu0 0
      %885 = vmatmul.mubr.bf16.gmra.mrb[0].mxu0 %v823
      %v886 = vpop.f32.mrb[0].mxu0
      %v887 = vadd.f32 0.0, %v886
      %v888 = vpop.f32.mrb[0].mxu0
      %v889 = vpop.f32.mrb[0].mxu0
      %v890 = vadd.f32 0.0, %v889
      %v891 = vpop.f32.mrb[0].mxu0
      %892 = vmatprep.mubr.bf16.mxu0 0
      %893 = vmatmul.mubr.bf16.gmra.mrb[0].mxu0 %v826
      %v894 = vpop.f32.mrb[0].mxu0
      %v895 = vadd.f32 0.0, %v894
      %v896 = vpop.f32.mrb[0].mxu0
      %v897 = vpop.f32.mrb[0].mxu0
      %v898 = vpop.f32.mrb[0].mxu0
      %899 = vdwg.mxu0
      %v900 = vld [vmem:[%s428] sm:$0xff]
      %v901 = vld [vmem:[%s428 + $0x8] sm:$0xff]
      %v902 = vld [vmem:[%s428 + $0x10] sm:$0xff]
      %v903 = vld [vmem:[%s428 + $0x18] sm:$0xff]
      %v904 = vld [vmem:[%s428 + $0x20] sm:$0xff]
      %v905 = vld [vmem:[%s428 + $0x28] sm:$0xff]
      %v906 = vld [vmem:[%s428 + $0x30] sm:$0xff]
      %v907 = vld [vmem:[%s428 + $0x38] sm:$0xff]
      %v908 = vld [vmem:[%s428 + $0x40] sm:$0xff]
      %v909 = vadd.f32 %v900, %v863
      %v910 = vadd.f32 %v901, %v866
      %v911 = vadd.f32 %v902, %v871
      %v912 = vadd.f32 %v903, %v874
      %v913 = vadd.f32 %v904, %v879
      %v914 = vadd.f32 %v905, %v882
      %v915 = vadd.f32 %v906, %v887
      %v916 = vadd.f32 %v907, %v890
      %v917 = vadd.f32 %v908, %v895
      %918 = vst [vmem:[%s428] sm:$0xff] %v909
      %919 = vst [vmem:[%s428 + $0x8] sm:$0xff] %v910
      %920 = vst [vmem:[%s428 + $0x10] sm:$0xff] %v911
      %921 = vst [vmem:[%s428 + $0x18] sm:$0xff] %v912
      %922 = vst [vmem:[%s428 + $0x20] sm:$0xff] %v913
      %923 = vst [vmem:[%s428 + $0x28] sm:$0xff] %v914
      %924 = vst [vmem:[%s428 + $0x30] sm:$0xff] %v915
      %925 = vst [vmem:[%s428 + $0x38] sm:$0xff] %v916
      %926 = vst [vmem:[%s428 + $0x40] sm:$0xff] %v917
      %v927 = vld [vmem:[%s401] sm:$0xf]
      %v928 = vld [vmem:[%s401 + $0x4] sm:$0xf]
      %v929 = vld [vmem:[%s401 + $0x8] sm:$0xf]
      %v930 = vld [vmem:[%s401 + $0xc] sm:$0xf]
      %v931 = vld [vmem:[%s401 + $0x10] sm:$0xf]
      %v932 = vld [vmem:[%s401 + $0x14] sm:$0xf]
      %v933 = vld [vmem:[%s401 + $0x18] sm:$0xf]
      %v934 = vld [vmem:[%s401 + $0x1c] sm:$0xf]
      %v935 = vld [vmem:[%s401 + $0x20] sm:$0xf]
      %v936 = vld [vmem:[%s401 + $0x24] sm:$0x1]
      %s937 = scalar_lea.vmem %s4, 24
      %v938 = vld [vmem:[%s937] sm:$0xf]
      %v939 = vld [vmem:[%s937 + $0x4] sm:$0xf]
      %v950 = vunpack.c.l.b16 %v927
      %v951 = vunpack.c.l.b16 %v928
      %v952 = vunpack.c.l.b16 %v929
      %v953 = vunpack.c.l.b16 %v930
      %v954 = vunpack.c.l.b16 %v931
      %v955 = vunpack.c.l.b16 %v932
      %v956 = vunpack.c.l.b16 %v933
      %v957 = vunpack.c.l.b16 %v934
      %v958 = vunpack.c.l.b16 %v935
      %v959 = vunpack.c.l.b16 %v936
      %v960 = vpack.c.b16 %v951, %v950
      %v961 = vpack.c.b16 %v953, %v952
      %v962 = vpack.c.b16 %v955, %v954
      %v963 = vpack.c.b16 %v957, %v956
      %v964 = vpack.c.b16 %v959, %v958
      %v966 = vshrl.u32 %v960, 16
      %v968 = vshll.u32 %v960, 16
      %v970 = vrot.slane %v968, 1
      %v971 = vor.u32 %v966, %v970
      %v973 = vshll.u32 %v961, 16
      %v975 = vrot.slane %v973, 1
      %v976 = vsel %vm767, %v971, %v975
      %v977 = vshrl.u32 %v961, 16
      %v979 = vor.u32 %v977, %v975
      %v981 = vshll.u32 %v962, 16
      %v983 = vrot.slane %v981, 1
      %v984 = vsel %vm767, %v979, %v983
      %v985 = vshrl.u32 %v962, 16
      %v987 = vor.u32 %v985, %v983
      %v989 = vshll.u32 %v963, 16
      %v991 = vrot.slane %v989, 1
      %v992 = vsel %vm767, %v987, %v991
      %v993 = vshrl.u32 %v963, 16
      %v995 = vor.u32 %v993, %v991
      %v997 = vshll.u32 %v964, 16
      %v999 = vrot.slane %v997, 1
      %v1000 = vsel %vm767, %v995, %v999
      %v1001 = vshrl.u32 %v964, 16
      %v1003 = vor.u32 %v1001, %v999
      %v1006 = vunpack.c.l.b16 %v938
      %v1007 = vunpack.c.l.b16 %v939
      %v1008 = vpack.c.b16 %v1007, %v1006
      %v1011 = vsel %vm477, %v976, 0
      %v1014 = vsel %vm477, %v984, 0
      %v1017 = vsel %vm477, %v992, 0
      %v1020 = vsel %vm477, %v1000, 0
      %v1023 = vsel %vm477, %v1003, 0
      %1025 = vmatprep.subr.bf16.mxu0 0
      %1026 = vmatpush1.bf16.msra.mxu0 %v1008
      %1027 = vmatprep.subr.bf16.mxu0 0
      %1028 = vmatpush1.bf16.msra.mxu0 0
      %1029 = vmatprep.subr.bf16.mxu0 0
      %1030 = vmatpush1.bf16.msra.mxu0 0
      %1031 = vmatprep.subr.bf16.mxu0 0
      %1032 = vmatpush1.bf16.msra.mxu0 0
      %1033 = vmatprep.subr.bf16.mxu0 0
      %1034 = vmatpush1.bf16.msra.mxu0 0
      %1035 = vmatprep.subr.bf16.mxu0 0
      %1036 = vmatpush1.bf16.msra.mxu0 0
      %1037 = vmatprep.subr.bf16.mxu0 0
      %1038 = vmatpush1.bf16.msra.mxu0 0
      %1039 = vmatprep.subr.bf16.mxu0 0
      %1040 = vmatpush1.bf16.msra.mxu0 0
      %1041 = vmatprep.subr.bf16.mxu0 0
      %1042 = vmatpush1.bf16.msra.mxu0 0
      %1043 = vmatprep.subr.bf16.mxu0 0
      %1044 = vmatpush1.bf16.msra.mxu0 0
      %1045 = vmatprep.subr.bf16.mxu0 0
      %1046 = vmatpush1.bf16.msra.mxu0 0
      %1047 = vmatprep.subr.bf16.mxu0 0
      %1048 = vmatpush1.bf16.msra.mxu0 0
      %1049 = vmatprep.subr.bf16.mxu0 0
      %1050 = vmatpush1.bf16.msra.mxu0 0
      %1051 = vmatprep.subr.bf16.mxu0 0
      %1052 = vmatpush1.bf16.msra.mxu0 0
      %1053 = vmatprep.subr.bf16.mxu0 0
      %1054 = vmatpush1.bf16.msra.mxu0 0
      %1055 = vmatprep.subr.bf16.mxu0 0
      %1056 = vmatpush1.bf16.msra.mxu0 0
      %1057 = vmatprep.mubr.bf16.mxu0 0
      %1058 = vmatmul.mubr.bf16.gmra.mrb[0].mxu0 %v1011
      %v1059 = vpop.f32.mrb[0].mxu0
      %v1060 = vadd.f32 0.0, %v1059
      %v1061 = vpop.f32.mrb[0].mxu0
      %v1062 = vpop.f32.mrb[0].mxu0
      %v1063 = vadd.f32 0.0, %v1062
      %v1064 = vpop.f32.mrb[0].mxu0
      %1065 = vmatprep.mubr.bf16.mxu0 0
      %1066 = vmatmul.mubr.bf16.gmra.mrb[0].mxu0 %v1014
      %v1067 = vpop.f32.mrb[0].mxu0
      %v1068 = vadd.f32 0.0, %v1067
      %v1069 = vpop.f32.mrb[0].mxu0
      %v1070 = vpop.f32.mrb[0].mxu0
      %v1071 = vadd.f32 0.0, %v1070
      %v1072 = vpop.f32.mrb[0].mxu0
      %1073 = vmatprep.mubr.bf16.mxu0 0
      %1074 = vmatmul.mubr.bf16.gmra.mrb[0].mxu0 %v1017
      %v1075 = vpop.f32.mrb[0].mxu0
      %v1076 = vadd.f32 0.0, %v1075
      %v1077 = vpop.f32.mrb[0].mxu0
      %v1078 = vpop.f32.mrb[0].mxu0
      %v1079 = vadd.f32 0.0, %v1078
      %v1080 = vpop.f32.mrb[0].mxu0
      %1081 = vmatprep.mubr.bf16.mxu0 0
      %1082 = vmatmul.mubr.bf16.gmra.mrb[0].mxu0 %v1020
      %v1083 = vpop.f32.mrb[0].mxu0
      %v1084 = vadd.f32 0.0, %v1083
      %v1085 = vpop.f32.mrb[0].mxu0
      %v1086 = vpop.f32.mrb[0].mxu0
      %v1087 = vadd.f32 0.0, %v1086
      %v1088 = vpop.f32.mrb[0].mxu0
      %1089 = vmatprep.mubr.bf16.mxu0 0
      %1090 = vmatmul.mubr.bf16.gmra.mrb[0].mxu0 %v1023
      %v1091 = vpop.f32.mrb[0].mxu0
      %v1092 = vadd.f32 0.0, %v1091
      %v1093 = vpop.f32.mrb[0].mxu0
      %v1094 = vpop.f32.mrb[0].mxu0
      %v1095 = vpop.f32.mrb[0].mxu0
      %1096 = vdwg.mxu0
      %v1097 = vld [vmem:[%s428] sm:$0xff]
      %v1098 = vld [vmem:[%s428 + $0x8] sm:$0xff]
      %v1099 = vld [vmem:[%s428 + $0x10] sm:$0xff]
      %v1100 = vld [vmem:[%s428 + $0x18] sm:$0xff]
      %v1101 = vld [vmem:[%s428 + $0x20] sm:$0xff]
      %v1102 = vld [vmem:[%s428 + $0x28] sm:$0xff]
      %v1103 = vld [vmem:[%s428 + $0x30] sm:$0xff]
      %v1104 = vld [vmem:[%s428 + $0x38] sm:$0xff]
      %v1105 = vld [vmem:[%s428 + $0x40] sm:$0xff]
      %v1106 = vadd.f32 %v1097, %v1060
      %v1107 = vadd.f32 %v1098, %v1063
      %v1108 = vadd.f32 %v1099, %v1068
      %v1109 = vadd.f32 %v1100, %v1071
      %v1110 = vadd.f32 %v1101, %v1076
      %v1111 = vadd.f32 %v1102, %v1079
      %v1112 = vadd.f32 %v1103, %v1084
      %v1113 = vadd.f32 %v1104, %v1087
      %v1114 = vadd.f32 %v1105, %v1092
      %1115 = vst [vmem:[%s428] sm:$0xff] %v1106
      %1116 = vst [vmem:[%s428 + $0x8] sm:$0xff] %v1107
      %1117 = vst [vmem:[%s428 + $0x10] sm:$0xff] %v1108
      %1118 = vst [vmem:[%s428 + $0x18] sm:$0xff] %v1109
      %1119 = vst [vmem:[%s428 + $0x20] sm:$0xff] %v1110
      %1120 = vst [vmem:[%s428 + $0x28] sm:$0xff] %v1111
      %1121 = vst [vmem:[%s428 + $0x30] sm:$0xff] %v1112
      %1122 = vst [vmem:[%s428 + $0x38] sm:$0xff] %v1113
      %1123 = vst [vmem:[%s428 + $0x40] sm:$0xff] %v1114
      %v1124 = vld [vmem:[%s410] sm:$0xf]
      %v1125 = vld [vmem:[%s410 + $0x4] sm:$0xf]
      %v1126 = vld [vmem:[%s410 + $0x8] sm:$0xf]
      %v1127 = vld [vmem:[%s410 + $0xc] sm:$0xf]
      %v1128 = vld [vmem:[%s410 + $0x10] sm:$0xf]
      %v1129 = vld [vmem:[%s410 + $0x14] sm:$0xf]
      %v1130 = vld [vmem:[%s410 + $0x18] sm:$0xf]
      %v1131 = vld [vmem:[%s410 + $0x1c] sm:$0xf]
      %v1132 = vld [vmem:[%s410 + $0x20] sm:$0xf]
      %s1133 = scalar_lea.vmem %s4, 32
      %v1134 = vld [vmem:[%s1133] sm:$0xf]
      %v1135 = vld [vmem:[%s1133 + $0x4] sm:$0xf]
      %v1145 = vunpack.c.l.b16 %v1124
      %v1146 = vunpack.c.l.b16 %v1125
      %v1147 = vunpack.c.l.b16 %v1126
      %v1148 = vunpack.c.l.b16 %v1127
      %v1149 = vunpack.c.l.b16 %v1128
      %v1150 = vunpack.c.l.b16 %v1129
      %v1151 = vunpack.c.l.b16 %v1130
      %v1152 = vunpack.c.l.b16 %v1131
      %v1153 = vunpack.c.l.b16 %v1132
      %v1154 = vpack.c.b16 %v1146, %v1145
      %v1155 = vpack.c.b16 %v1148, %v1147
      %v1156 = vpack.c.b16 %v1150, %v1149
      %v1157 = vpack.c.b16 %v1152, %v1151
      %v1158 = vpack.c.b16 %v1153, %v1153
      %v1161 = vunpack.c.l.b16 %v1134
      %v1162 = vunpack.c.l.b16 %v1135
      %v1163 = vpack.c.b16 %v1162, %v1161
      %v1166 = vsel %vm477, %v1154, 0
      %v1169 = vsel %vm477, %v1155, 0
      %v1172 = vsel %vm477, %v1156, 0
      %v1175 = vsel %vm477, %v1157, 0
      %v1178 = vsel %vm477, %v1158, 0
      %1180 = vmatprep.subr.bf16.mxu0 0
      %1181 = vmatpush1.bf16.msra.mxu0 %v1163
      %1182 = vmatprep.subr.bf16.mxu0 0
      %1183 = vmatpush1.bf16.msra.mxu0 0
      %1184 = vmatprep.subr.bf16.mxu0 0
      %1185 = vmatpush1.bf16.msra.mxu0 0
      %1186 = vmatprep.subr.bf16.mxu0 0
      %1187 = vmatpush1.bf16.msra.mxu0 0
      %1188 = vmatprep.subr.bf16.mxu0 0
      %1189 = vmatpush1.bf16.msra.mxu0 0
      %1190 = vmatprep.subr.bf16.mxu0 0
      %1191 = vmatpush1.bf16.msra.mxu0 0
      %1192 = vmatprep.subr.bf16.mxu0 0
      %1193 = vmatpush1.bf16.msra.mxu0 0
      %1194 = vmatprep.subr.bf16.mxu0 0
      %1195 = vmatpush1.bf16.msra.mxu0 0
      %1196 = vmatprep.subr.bf16.mxu0 0
      %1197 = vmatpush1.bf16.msra.mxu0 0
      %1198 = vmatprep.subr.bf16.mxu0 0
      %1199 = vmatpush1.bf16.msra.mxu0 0
      %1200 = vmatprep.subr.bf16.mxu0 0
      %1201 = vmatpush1.bf16.msra.mxu0 0
      %1202 = vmatprep.subr.bf16.mxu0 0
      %1203 = vmatpush1.bf16.msra.mxu0 0
      %1204 = vmatprep.subr.bf16.mxu0 0
      %1205 = vmatpush1.bf16.msra.mxu0 0
      %1206 = vmatprep.subr.bf16.mxu0 0
      %1207 = vmatpush1.bf16.msra.mxu0 0
      %1208 = vmatprep.subr.bf16.mxu0 0
      %1209 = vmatpush1.bf16.msra.mxu0 0
      %1210 = vmatprep.subr.bf16.mxu0 0
      %1211 = vmatpush1.bf16.msra.mxu0 0
      %1212 = vmatprep.mubr.bf16.mxu0 0
      %1213 = vmatmul.mubr.bf16.gmra.mrb[0].mxu0 %v1166
      %v1214 = vpop.f32.mrb[0].mxu0
      %v1215 = vadd.f32 0.0, %v1214
      %v1216 = vpop.f32.mrb[0].mxu0
      %v1217 = vpop.f32.mrb[0].mxu0
      %v1218 = vadd.f32 0.0, %v1217
      %v1219 = vpop.f32.mrb[0].mxu0
      %1220 = vmatprep.mubr.bf16.mxu0 0
      %1221 = vmatmul.mubr.bf16.gmra.mrb[0].mxu0 %v1169
      %v1222 = vpop.f32.mrb[0].mxu0
      %v1223 = vadd.f32 0.0, %v1222
      %v1224 = vpop.f32.mrb[0].mxu0
      %v1225 = vpop.f32.mrb[0].mxu0
      %v1226 = vadd.f32 0.0, %v1225
      %v1227 = vpop.f32.mrb[0].mxu0
      %1228 = vmatprep.mubr.bf16.mxu0 0
      %1229 = vmatmul.mubr.bf16.gmra.mrb[0].mxu0 %v1172
      %v1230 = vpop.f32.mrb[0].mxu0
      %v1231 = vadd.f32 0.0, %v1230
      %v1232 = vpop.f32.mrb[0].mxu0
      %v1233 = vpop.f32.mrb[0].mxu0
      %v1234 = vadd.f32 0.0, %v1233
      %v1235 = vpop.f32.mrb[0].mxu0
      %1236 = vmatprep.mubr.bf16.mxu0 0
      %1237 = vmatmul.mubr.bf16.gmra.mrb[0].mxu0 %v1175
      %v1238 = vpop.f32.mrb[0].mxu0
      %v1239 = vadd.f32 0.0, %v1238
      %v1240 = vpop.f32.mrb[0].mxu0
      %v1241 = vpop.f32.mrb[0].mxu0
      %v1242 = vadd.f32 0.0, %v1241
      %v1243 = vpop.f32.mrb[0].mxu0
      %1244 = vmatprep.mubr.bf16.mxu0 0
      %1245 = vmatmul.mubr.bf16.gmra.mrb[0].mxu0 %v1178
      %v1246 = vpop.f32.mrb[0].mxu0
      %v1247 = vadd.f32 0.0, %v1246
      %v1248 = vpop.f32.mrb[0].mxu0
      %v1249 = vpop.f32.mrb[0].mxu0
      %v1250 = vpop.f32.mrb[0].mxu0
      %1251 = vdwg.mxu0
      %v1252 = vld [vmem:[%s428] sm:$0xff]
      %v1253 = vld [vmem:[%s428 + $0x8] sm:$0xff]
      %v1254 = vld [vmem:[%s428 + $0x10] sm:$0xff]
      %v1255 = vld [vmem:[%s428 + $0x18] sm:$0xff]
      %v1256 = vld [vmem:[%s428 + $0x20] sm:$0xff]
      %v1257 = vld [vmem:[%s428 + $0x28] sm:$0xff]
      %v1258 = vld [vmem:[%s428 + $0x30] sm:$0xff]
      %v1259 = vld [vmem:[%s428 + $0x38] sm:$0xff]
      %v1260 = vld [vmem:[%s428 + $0x40] sm:$0xff]
      %v1261 = vadd.f32 %v1252, %v1215
      %v1262 = vadd.f32 %v1253, %v1218
      %v1263 = vadd.f32 %v1254, %v1223
      %v1264 = vadd.f32 %v1255, %v1226
      %v1265 = vadd.f32 %v1256, %v1231
      %v1266 = vadd.f32 %v1257, %v1234
      %v1267 = vadd.f32 %v1258, %v1239
      %v1268 = vadd.f32 %v1259, %v1242
      %v1269 = vadd.f32 %v1260, %v1247
      %1270 = vst [vmem:[%s428] sm:$0xff] %v1261
      %1271 = vst [vmem:[%s428 + $0x8] sm:$0xff] %v1262
      %1272 = vst [vmem:[%s428 + $0x10] sm:$0xff] %v1263
      %1273 = vst [vmem:[%s428 + $0x18] sm:$0xff] %v1264
      %1274 = vst [vmem:[%s428 + $0x20] sm:$0xff] %v1265
      %1275 = vst [vmem:[%s428 + $0x28] sm:$0xff] %v1266
      %1276 = vst [vmem:[%s428 + $0x30] sm:$0xff] %v1267
      %1277 = vst [vmem:[%s428 + $0x38] sm:$0xff] %v1268
      %1278 = vst [vmem:[%s428 + $0x40] sm:$0xff] %v1269
      %v1279 = vld [vmem:[%s419] sm:$0xf]
      %v1280 = vld [vmem:[%s419 + $0x4] sm:$0xf]
      %v1281 = vld [vmem:[%s419 + $0x8] sm:$0xf]
      %v1282 = vld [vmem:[%s419 + $0xc] sm:$0xf]
      %v1283 = vld [vmem:[%s419 + $0x10] sm:$0xf]
      %v1284 = vld [vmem:[%s419 + $0x14] sm:$0xf]
      %v1285 = vld [vmem:[%s419 + $0x18] sm:$0xf]
      %v1286 = vld [vmem:[%s419 + $0x1c] sm:$0xf]
      %v1287 = vld [vmem:[%s419 + $0x20] sm:$0xf]
      %s1288 = scalar_lea.vmem %s4, 40
      %v1289 = vld [vmem:[%s1288] sm:$0xf]
      %v1290 = vld [vmem:[%s1288 + $0x4] sm:$0xf]
      %v1300 = vunpack.c.l.b16 %v1279
      %v1301 = vunpack.c.l.b16 %v1280
      %v1302 = vunpack.c.l.b16 %v1281
      %v1303 = vunpack.c.l.b16 %v1282
      %v1304 = vunpack.c.l.b16 %v1283
      %v1305 = vunpack.c.l.b16 %v1284
      %v1306 = vunpack.c.l.b16 %v1285
      %v1307 = vunpack.c.l.b16 %v1286
      %v1308 = vunpack.c.l.b16 %v1287
      %v1309 = vpack.c.b16 %v1301, %v1300
      %v1310 = vpack.c.b16 %v1303, %v1302
      %v1311 = vpack.c.b16 %v1305, %v1304
      %v1312 = vpack.c.b16 %v1307, %v1306
      %v1313 = vpack.c.b16 %v1308, %v1308
      %v1316 = vunpack.c.l.b16 %v1289
      %v1317 = vunpack.c.l.b16 %v1290
      %v1318 = vpack.c.b16 %v1317, %v1316
      %v1321 = vsel %vm477, %v1309, 0
      %v1324 = vsel %vm477, %v1310, 0
      %v1327 = vsel %vm477, %v1311, 0
      %v1330 = vsel %vm477, %v1312, 0
      %v1333 = vsel %vm477, %v1313, 0
      %1335 = vmatprep.subr.bf16.mxu0 0
      %1336 = vmatpush1.bf16.msra.mxu0 %v1318
      %1337 = vmatprep.subr.bf16.mxu0 0
      %1338 = vmatpush1.bf16.msra.mxu0 0
      %1339 = vmatprep.subr.bf16.mxu0 0
      %1340 = vmatpush1.bf16.msra.mxu0 0
      %1341 = vmatprep.subr.bf16.mxu0 0
      %1342 = vmatpush1.bf16.msra.mxu0 0
      %1343 = vmatprep.subr.bf16.mxu0 0
      %1344 = vmatpush1.bf16.msra.mxu0 0
      %1345 = vmatprep.subr.bf16.mxu0 0
      %1346 = vmatpush1.bf16.msra.mxu0 0
      %1347 = vmatprep.subr.bf16.mxu0 0
      %1348 = vmatpush1.bf16.msra.mxu0 0
      %1349 = vmatprep.subr.bf16.mxu0 0
      %1350 = vmatpush1.bf16.msra.mxu0 0
      %1351 = vmatprep.subr.bf16.mxu0 0
      %1352 = vmatpush1.bf16.msra.mxu0 0
      %1353 = vmatprep.subr.bf16.mxu0 0
      %1354 = vmatpush1.bf16.msra.mxu0 0
      %1355 = vmatprep.subr.bf16.mxu0 0
      %1356 = vmatpush1.bf16.msra.mxu0 0
      %1357 = vmatprep.subr.bf16.mxu0 0
      %1358 = vmatpush1.bf16.msra.mxu0 0
      %1359 = vmatprep.subr.bf16.mxu0 0
      %1360 = vmatpush1.bf16.msra.mxu0 0
      %1361 = vmatprep.subr.bf16.mxu0 0
      %1362 = vmatpush1.bf16.msra.mxu0 0
      %1363 = vmatprep.subr.bf16.mxu0 0
      %1364 = vmatpush1.bf16.msra.mxu0 0
      %1365 = vmatprep.subr.bf16.mxu0 0
      %1366 = vmatpush1.bf16.msra.mxu0 0
      %1367 = vmatprep.mubr.bf16.mxu0 0
      %1368 = vmatmul.mubr.bf16.gmra.mrb[0].mxu0 %v1321
      %v1369 = vpop.f32.mrb[0].mxu0
      %v1370 = vadd.f32 0.0, %v1369
      %v1371 = vpop.f32.mrb[0].mxu0
      %v1372 = vpop.f32.mrb[0].mxu0
      %v1373 = vadd.f32 0.0, %v1372
      %v1374 = vpop.f32.mrb[0].mxu0
      %1375 = vmatprep.mubr.bf16.mxu0 0
      %1376 = vmatmul.mubr.bf16.gmra.mrb[0].mxu0 %v1324
      %v1377 = vpop.f32.mrb[0].mxu0
      %v1378 = vadd.f32 0.0, %v1377
      %v1379 = vpop.f32.mrb[0].mxu0
      %v1380 = vpop.f32.mrb[0].mxu0
      %v1381 = vadd.f32 0.0, %v1380
      %v1382 = vpop.f32.mrb[0].mxu0
      %1383 = vmatprep.mubr.bf16.mxu0 0
      %1384 = vmatmul.mubr.bf16.gmra.mrb[0].mxu0 %v1327
      %v1385 = vpop.f32.mrb[0].mxu0
      %v1386 = vadd.f32 0.0, %v1385
      %v1387 = vpop.f32.mrb[0].mxu0
      %v1388 = vpop.f32.mrb[0].mxu0
      %v1389 = vadd.f32 0.0, %v1388
      %v1390 = vpop.f32.mrb[0].mxu0
      %1391 = vmatprep.mubr.bf16.mxu0 0
      %1392 = vmatmul.mubr.bf16.gmra.mrb[0].mxu0 %v1330
      %v1393 = vpop.f32.mrb[0].mxu0
      %v1394 = vadd.f32 0.0, %v1393
      %v1395 = vpop.f32.mrb[0].mxu0
      %v1396 = vpop.f32.mrb[0].mxu0
      %v1397 = vadd.f32 0.0, %v1396
      %v1398 = vpop.f32.mrb[0].mxu0
      %1399 = vmatprep.mubr.bf16.mxu0 0
      %1400 = vmatmul.mubr.bf16.gmra.mrb[0].mxu0 %v1333
      %v1401 = vpop.f32.mrb[0].mxu0
      %v1402 = vadd.f32 0.0, %v1401
      %v1403 = vpop.f32.mrb[0].mxu0
      %v1404 = vpop.f32.mrb[0].mxu0
      %v1405 = vpop.f32.mrb[0].mxu0
      %1406 = vdwg.mxu0
      %v1407 = vld [vmem:[%s428] sm:$0xff]
      %v1408 = vld [vmem:[%s428 + $0x8] sm:$0xff]
      %v1409 = vld [vmem:[%s428 + $0x10] sm:$0xff]
      %v1410 = vld [vmem:[%s428 + $0x18] sm:$0xff]
      %v1411 = vld [vmem:[%s428 + $0x20] sm:$0xff]
      %v1412 = vld [vmem:[%s428 + $0x28] sm:$0xff]
      %v1413 = vld [vmem:[%s428 + $0x30] sm:$0xff]
      %v1414 = vld [vmem:[%s428 + $0x38] sm:$0xff]
      %v1415 = vld [vmem:[%s428 + $0x40] sm:$0xff]
      %v1416 = vadd.f32 %v1407, %v1370
      %v1417 = vadd.f32 %v1408, %v1373
      %v1418 = vadd.f32 %v1409, %v1378
      %v1419 = vadd.f32 %v1410, %v1381
      %v1420 = vadd.f32 %v1411, %v1386
      %v1421 = vadd.f32 %v1412, %v1389
      %v1422 = vadd.f32 %v1413, %v1394
      %v1423 = vadd.f32 %v1414, %v1397
      %v1424 = vadd.f32 %v1415, %v1402
      %1425 = vst [vmem:[%s428] sm:$0xff] %v1416
      %1426 = vst [vmem:[%s428 + $0x8] sm:$0xff] %v1417
      %1427 = vst [vmem:[%s428 + $0x10] sm:$0xff] %v1418
      %1428 = vst [vmem:[%s428 + $0x18] sm:$0xff] %v1419
      %1429 = vst [vmem:[%s428 + $0x20] sm:$0xff] %v1420
      %1430 = vst [vmem:[%s428 + $0x28] sm:$0xff] %v1421
      %1431 = vst [vmem:[%s428 + $0x30] sm:$0xff] %v1422
      %1432 = vst [vmem:[%s428 + $0x38] sm:$0xff] %v1423
      %1433 = vst [vmem:[%s428 + $0x40] sm:$0xff] %v1424
      %v1434 = vld [vmem:[%s410] sm:$0xf]
      %v1435 = vld [vmem:[%s410 + $0x4] sm:$0xf]
      %v1436 = vld [vmem:[%s410 + $0x8] sm:$0xf]
      %v1437 = vld [vmem:[%s410 + $0xc] sm:$0xf]
      %v1438 = vld [vmem:[%s410 + $0x10] sm:$0xf]
      %v1439 = vld [vmem:[%s410 + $0x14] sm:$0xf]
      %v1440 = vld [vmem:[%s410 + $0x18] sm:$0xf]
      %v1441 = vld [vmem:[%s410 + $0x1c] sm:$0xf]
      %v1442 = vld [vmem:[%s410 + $0x20] sm:$0xf]
      %v1443 = vld [vmem:[%s410 + $0x24] sm:$0x1]
      %s1444 = scalar_lea.vmem %s4, 48
      %v1445 = vld [vmem:[%s1444] sm:$0xf]
      %v1446 = vld [vmem:[%s1444 + $0x4] sm:$0xf]
      %v1457 = vunpack.c.l.b16 %v1434
      %v1458 = vunpack.c.l.b16 %v1435
      %v1459 = vunpack.c.l.b16 %v1436
      %v1460 = vunpack.c.l.b16 %v1437
      %v1461 = vunpack.c.l.b16 %v1438
      %v1462 = vunpack.c.l.b16 %v1439
      %v1463 = vunpack.c.l.b16 %v1440
      %v1464 = vunpack.c.l.b16 %v1441
      %v1465 = vunpack.c.l.b16 %v1442
      %v1466 = vunpack.c.l.b16 %v1443
      %v1467 = vpack.c.b16 %v1458, %v1457
      %v1468 = vpack.c.b16 %v1460, %v1459
      %v1469 = vpack.c.b16 %v1462, %v1461
      %v1470 = vpack.c.b16 %v1464, %v1463
      %v1471 = vpack.c.b16 %v1466, %v1465
      %v1473 = vshrl.u32 %v1467, 16
      %v1475 = vshll.u32 %v1467, 16
      %v1477 = vrot.slane %v1475, 1
      %v1478 = vor.u32 %v1473, %v1477
      %v1480 = vshll.u32 %v1468, 16
      %v1482 = vrot.slane %v1480, 1
      %v1483 = vsel %vm767, %v1478, %v1482
      %v1484 = vshrl.u32 %v1468, 16
      %v1486 = vor.u32 %v1484, %v1482
      %v1488 = vshll.u32 %v1469, 16
      %v1490 = vrot.slane %v1488, 1
      %v1491 = vsel %vm767, %v1486, %v1490
      %v1492 = vshrl.u32 %v1469, 16
      %v1494 = vor.u32 %v1492, %v1490
      %v1496 = vshll.u32 %v1470, 16
      %v1498 = vrot.slane %v1496, 1
      %v1499 = vsel %vm767, %v1494, %v1498
      %v1500 = vshrl.u32 %v1470, 16
      %v1502 = vor.u32 %v1500, %v1498
      %v1504 = vshll.u32 %v1471, 16
      %v1506 = vrot.slane %v1504, 1
      %v1507 = vsel %vm767, %v1502, %v1506
      %v1508 = vshrl.u32 %v1471, 16
      %v1510 = vor.u32 %v1508, %v1506
      %v1513 = vunpack.c.l.b16 %v1445
      %v1514 = vunpack.c.l.b16 %v1446
      %v1515 = vpack.c.b16 %v1514, %v1513
      %v1518 = vsel %vm477, %v1483, 0
      %v1521 = vsel %vm477, %v1491, 0
      %v1524 = vsel %vm477, %v1499, 0
      %v1527 = vsel %vm477, %v1507, 0
      %v1530 = vsel %vm477, %v1510, 0
      %1532 = vmatprep.subr.bf16.mxu0 0
      %1533 = vmatpush1.bf16.msra.mxu0 %v1515
      %1534 = vmatprep.subr.bf16.mxu0 0
      %1535 = vmatpush1.bf16.msra.mxu0 0
      %1536 = vmatprep.subr.bf16.mxu0 0
      %1537 = vmatpush1.bf16.msra.mxu0 0
      %1538 = vmatprep.subr.bf16.mxu0 0
      %1539 = vmatpush1.bf16.msra.mxu0 0
      %1540 = vmatprep.subr.bf16.mxu0 0
      %1541 = vmatpush1.bf16.msra.mxu0 0
      %1542 = vmatprep.subr.bf16.mxu0 0
      %1543 = vmatpush1.bf16.msra.mxu0 0
      %1544 = vmatprep.subr.bf16.mxu0 0
      %1545 = vmatpush1.bf16.msra.mxu0 0
      %1546 = vmatprep.subr.bf16.mxu0 0
      %1547 = vmatpush1.bf16.msra.mxu0 0
      %1548 = vmatprep.subr.bf16.mxu0 0
      %1549 = vmatpush1.bf16.msra.mxu0 0
      %1550 = vmatprep.subr.bf16.mxu0 0
      %1551 = vmatpush1.bf16.msra.mxu0 0
      %1552 = vmatprep.subr.bf16.mxu0 0
      %1553 = vmatpush1.bf16.msra.mxu0 0
      %1554 = vmatprep.subr.bf16.mxu0 0
      %1555 = vmatpush1.bf16.msra.mxu0 0
      %1556 = vmatprep.subr.bf16.mxu0 0
      %1557 = vmatpush1.bf16.msra.mxu0 0
      %1558 = vmatprep.subr.bf16.mxu0 0
      %1559 = vmatpush1.bf16.msra.mxu0 0
      %1560 = vmatprep.subr.bf16.mxu0 0
      %1561 = vmatpush1.bf16.msra.mxu0 0
      %1562 = vmatprep.subr.bf16.mxu0 0
      %1563 = vmatpush1.bf16.msra.mxu0 0
      %1564 = vmatprep.mubr.bf16.mxu0 0
      %1565 = vmatmul.mubr.bf16.gmra.mrb[0].mxu0 %v1518
      %v1566 = vpop.f32.mrb[0].mxu0
      %v1567 = vadd.f32 0.0, %v1566
      %v1568 = vpop.f32.mrb[0].mxu0
      %v1569 = vpop.f32.mrb[0].mxu0
      %v1570 = vadd.f32 0.0, %v1569
      %v1571 = vpop.f32.mrb[0].mxu0
      %1572 = vmatprep.mubr.bf16.mxu0 0
      %1573 = vmatmul.mubr.bf16.gmra.mrb[0].mxu0 %v1521
      %v1574 = vpop.f32.mrb[0].mxu0
      %v1575 = vadd.f32 0.0, %v1574
      %v1576 = vpop.f32.mrb[0].mxu0
      %v1577 = vpop.f32.mrb[0].mxu0
      %v1578 = vadd.f32 0.0, %v1577
      %v1579 = vpop.f32.mrb[0].mxu0
      %1580 = vmatprep.mubr.bf16.mxu0 0
      %1581 = vmatmul.mubr.bf16.gmra.mrb[0].mxu0 %v1524
      %v1582 = vpop.f32.mrb[0].mxu0
      %v1583 = vadd.f32 0.0, %v1582
      %v1584 = vpop.f32.mrb[0].mxu0
      %v1585 = vpop.f32.mrb[0].mxu0
      %v1586 = vadd.f32 0.0, %v1585
      %v1587 = vpop.f32.mrb[0].mxu0
      %1588 = vmatprep.mubr.bf16.mxu0 0
      %1589 = vmatmul.mubr.bf16.gmra.mrb[0].mxu0 %v1527
      %v1590 = vpop.f32.mrb[0].mxu0
      %v1591 = vadd.f32 0.0, %v1590
      %v1592 = vpop.f32.mrb[0].mxu0
      %v1593 = vpop.f32.mrb[0].mxu0
      %v1594 = vadd.f32 0.0, %v1593
      %v1595 = vpop.f32.mrb[0].mxu0
      %1596 = vmatprep.mubr.bf16.mxu0 0
      %1597 = vmatmul.mubr.bf16.gmra.mrb[0].mxu0 %v1530
      %v1598 = vpop.f32.mrb[0].mxu0
      %v1599 = vadd.f32 0.0, %v1598
      %v1600 = vpop.f32.mrb[0].mxu0
      %v1601 = vpop.f32.mrb[0].mxu0
      %v1602 = vpop.f32.mrb[0].mxu0
      %1603 = vdwg.mxu0
      %v1604 = vld [vmem:[%s428] sm:$0xff]
      %v1605 = vld [vmem:[%s428 + $0x8] sm:$0xff]
      %v1606 = vld [vmem:[%s428 + $0x10] sm:$0xff]
      %v1607 = vld [vmem:[%s428 + $0x18] sm:$0xff]
      %v1608 = vld [vmem:[%s428 + $0x20] sm:$0xff]
      %v1609 = vld [vmem:[%s428 + $0x28] sm:$0xff]
      %v1610 = vld [vmem:[%s428 + $0x30] sm:$0xff]
      %v1611 = vld [vmem:[%s428 + $0x38] sm:$0xff]
      %v1612 = vld [vmem:[%s428 + $0x40] sm:$0xff]
      %v1613 = vadd.f32 %v1604, %v1567
      %v1614 = vadd.f32 %v1605, %v1570
      %v1615 = vadd.f32 %v1606, %v1575
      %v1616 = vadd.f32 %v1607, %v1578
      %v1617 = vadd.f32 %v1608, %v1583
      %v1618 = vadd.f32 %v1609, %v1586
      %v1619 = vadd.f32 %v1610, %v1591
      %v1620 = vadd.f32 %v1611, %v1594
      %v1621 = vadd.f32 %v1612, %v1599
      %1622 = vst [vmem:[%s428] sm:$0xff] %v1613
      %1623 = vst [vmem:[%s428 + $0x8] sm:$0xff] %v1614
      %1624 = vst [vmem:[%s428 + $0x10] sm:$0xff] %v1615
      %1625 = vst [vmem:[%s428 + $0x18] sm:$0xff] %v1616
      %1626 = vst [vmem:[%s428 + $0x20] sm:$0xff] %v1617
      %1627 = vst [vmem:[%s428 + $0x28] sm:$0xff] %v1618
      %1628 = vst [vmem:[%s428 + $0x30] sm:$0xff] %v1619
      %1629 = vst [vmem:[%s428 + $0x38] sm:$0xff] %v1620
      %1630 = vst [vmem:[%s428 + $0x40] sm:$0xff] %v1621
      %v1631 = vld [vmem:[%s419] sm:$0xf]
      %v1632 = vld [vmem:[%s419 + $0x4] sm:$0xf]
      %v1633 = vld [vmem:[%s419 + $0x8] sm:$0xf]
      %v1634 = vld [vmem:[%s419 + $0xc] sm:$0xf]
      %v1635 = vld [vmem:[%s419 + $0x10] sm:$0xf]
      %v1636 = vld [vmem:[%s419 + $0x14] sm:$0xf]
      %v1637 = vld [vmem:[%s419 + $0x18] sm:$0xf]
      %v1638 = vld [vmem:[%s419 + $0x1c] sm:$0xf]
      %v1639 = vld [vmem:[%s419 + $0x20] sm:$0xf]
      %v1640 = vld [vmem:[%s419 + $0x24] sm:$0x1]
      %s1641 = scalar_lea.vmem %s4, 56
      %v1642 = vld [vmem:[%s1641] sm:$0xf]
      %v1643 = vld [vmem:[%s1641 + $0x4] sm:$0xf]
      %v1654 = vunpack.c.l.b16 %v1631
      %v1655 = vunpack.c.l.b16 %v1632
      %v1656 = vunpack.c.l.b16 %v1633
      %v1657 = vunpack.c.l.b16 %v1634
      %v1658 = vunpack.c.l.b16 %v1635
      %v1659 = vunpack.c.l.b16 %v1636
      %v1660 = vunpack.c.l.b16 %v1637
      %v1661 = vunpack.c.l.b16 %v1638
      %v1662 = vunpack.c.l.b16 %v1639
      %v1663 = vunpack.c.l.b16 %v1640
      %v1664 = vpack.c.b16 %v1655, %v1654
      %v1665 = vpack.c.b16 %v1657, %v1656
      %v1666 = vpack.c.b16 %v1659, %v1658
      %v1667 = vpack.c.b16 %v1661, %v1660
      %v1668 = vpack.c.b16 %v1663, %v1662
      %v1670 = vshrl.u32 %v1664, 16
      %v1672 = vshll.u32 %v1664, 16
      %v1674 = vrot.slane %v1672, 1
      %v1675 = vor.u32 %v1670, %v1674
      %v1677 = vshll.u32 %v1665, 16
      %v1679 = vrot.slane %v1677, 1
      %v1680 = vsel %vm767, %v1675, %v1679
      %v1681 = vshrl.u32 %v1665, 16
      %v1683 = vor.u32 %v1681, %v1679
      %v1685 = vshll.u32 %v1666, 16
      %v1687 = vrot.slane %v1685, 1
      %v1688 = vsel %vm767, %v1683, %v1687
      %v1689 = vshrl.u32 %v1666, 16
      %v1691 = vor.u32 %v1689, %v1687
      %v1693 = vshll.u32 %v1667, 16
      %v1695 = vrot.slane %v1693, 1
      %v1696 = vsel %vm767, %v1691, %v1695
      %v1697 = vshrl.u32 %v1667, 16
      %v1699 = vor.u32 %v1697, %v1695
      %v1701 = vshll.u32 %v1668, 16
      %v1703 = vrot.slane %v1701, 1
      %v1704 = vsel %vm767, %v1699, %v1703
      %v1705 = vshrl.u32 %v1668, 16
      %v1707 = vor.u32 %v1705, %v1703
      %v1710 = vunpack.c.l.b16 %v1642
      %v1711 = vunpack.c.l.b16 %v1643
      %v1712 = vpack.c.b16 %v1711, %v1710
      %v1715 = vsel %vm477, %v1680, 0
      %v1718 = vsel %vm477, %v1688, 0
      %v1721 = vsel %vm477, %v1696, 0
      %v1724 = vsel %vm477, %v1704, 0
      %v1727 = vsel %vm477, %v1707, 0
      %1729 = vmatprep.subr.bf16.mxu0 0
      %1730 = vmatpush1.bf16.msra.mxu0 %v1712
      %1731 = vmatprep.subr.bf16.mxu0 0
      %1732 = vmatpush1.bf16.msra.mxu0 0
      %1733 = vmatprep.subr.bf16.mxu0 0
      %1734 = vmatpush1.bf16.msra.mxu0 0
      %1735 = vmatprep.subr.bf16.mxu0 0
      %1736 = vmatpush1.bf16.msra.mxu0 0
      %1737 = vmatprep.subr.bf16.mxu0 0
      %1738 = vmatpush1.bf16.msra.mxu0 0
      %1739 = vmatprep.subr.bf16.mxu0 0
      %1740 = vmatpush1.bf16.msra.mxu0 0
      %1741 = vmatprep.subr.bf16.mxu0 0
      %1742 = vmatpush1.bf16.msra.mxu0 0
      %1743 = vmatprep.subr.bf16.mxu0 0
      %1744 = vmatpush1.bf16.msra.mxu0 0
      %1745 = vmatprep.subr.bf16.mxu0 0
      %1746 = vmatpush1.bf16.msra.mxu0 0
      %1747 = vmatprep.subr.bf16.mxu0 0
      %1748 = vmatpush1.bf16.msra.mxu0 0
      %1749 = vmatprep.subr.bf16.mxu0 0
      %1750 = vmatpush1.bf16.msra.mxu0 0
      %1751 = vmatprep.subr.bf16.mxu0 0
      %1752 = vmatpush1.bf16.msra.mxu0 0
      %1753 = vmatprep.subr.bf16.mxu0 0
      %1754 = vmatpush1.bf16.msra.mxu0 0
      %1755 = vmatprep.subr.bf16.mxu0 0
      %1756 = vmatpush1.bf16.msra.mxu0 0
      %1757 = vmatprep.subr.bf16.mxu0 0
      %1758 = vmatpush1.bf16.msra.mxu0 0
      %1759 = vmatprep.subr.bf16.mxu0 0
      %1760 = vmatpush1.bf16.msra.mxu0 0
      %1761 = vmatprep.mubr.bf16.mxu0 0
      %1762 = vmatmul.mubr.bf16.gmra.mrb[0].mxu0 %v1715
      %v1763 = vpop.f32.mrb[0].mxu0
      %v1764 = vadd.f32 0.0, %v1763
      %v1765 = vpop.f32.mrb[0].mxu0
      %v1766 = vpop.f32.mrb[0].mxu0
      %v1767 = vadd.f32 0.0, %v1766
      %v1768 = vpop.f32.mrb[0].mxu0
      %1769 = vmatprep.mubr.bf16.mxu0 0
      %1770 = vmatmul.mubr.bf16.gmra.mrb[0].mxu0 %v1718
      %v1771 = vpop.f32.mrb[0].mxu0
      %v1772 = vadd.f32 0.0, %v1771
      %v1773 = vpop.f32.mrb[0].mxu0
      %v1774 = vpop.f32.mrb[0].mxu0
      %v1775 = vadd.f32 0.0, %v1774
      %v1776 = vpop.f32.mrb[0].mxu0
      %1777 = vmatprep.mubr.bf16.mxu0 0
      %1778 = vmatmul.mubr.bf16.gmra.mrb[0].mxu0 %v1721
      %v1779 = vpop.f32.mrb[0].mxu0
      %v1780 = vadd.f32 0.0, %v1779
      %v1781 = vpop.f32.mrb[0].mxu0
      %v1782 = vpop.f32.mrb[0].mxu0
      %v1783 = vadd.f32 0.0, %v1782
      %v1784 = vpop.f32.mrb[0].mxu0
      %1785 = vmatprep.mubr.bf16.mxu0 0
      %1786 = vmatmul.mubr.bf16.gmra.mrb[0].mxu0 %v1724
      %v1787 = vpop.f32.mrb[0].mxu0
      %v1788 = vadd.f32 0.0, %v1787
      %v1789 = vpop.f32.mrb[0].mxu0
      %v1790 = vpop.f32.mrb[0].mxu0
      %v1791 = vadd.f32 0.0, %v1790
      %v1792 = vpop.f32.mrb[0].mxu0
      %1793 = vmatprep.mubr.bf16.mxu0 0
      %1794 = vmatmul.mubr.bf16.gmra.mrb[0].mxu0 %v1727
      %v1795 = vpop.f32.mrb[0].mxu0
      %v1796 = vadd.f32 0.0, %v1795
      %v1797 = vpop.f32.mrb[0].mxu0
      %v1798 = vpop.f32.mrb[0].mxu0
      %v1799 = vpop.f32.mrb[0].mxu0
      %1800 = vdwg.mxu0
      %v1801 = vld [vmem:[%s428] sm:$0xff]
      %v1802 = vld [vmem:[%s428 + $0x8] sm:$0xff]
      %v1803 = vld [vmem:[%s428 + $0x10] sm:$0xff]
      %v1804 = vld [vmem:[%s428 + $0x18] sm:$0xff]
      %v1805 = vld [vmem:[%s428 + $0x20] sm:$0xff]
      %v1806 = vld [vmem:[%s428 + $0x28] sm:$0xff]
      %v1807 = vld [vmem:[%s428 + $0x30] sm:$0xff]
      %v1808 = vld [vmem:[%s428 + $0x38] sm:$0xff]
      %v1809 = vld [vmem:[%s428 + $0x40] sm:$0xff]
      %v1810 = vadd.f32 %v1801, %v1764
      %v1811 = vadd.f32 %v1802, %v1767
      %v1812 = vadd.f32 %v1803, %v1772
      %v1813 = vadd.f32 %v1804, %v1775
      %v1814 = vadd.f32 %v1805, %v1780
      %v1815 = vadd.f32 %v1806, %v1783
      %v1816 = vadd.f32 %v1807, %v1788
      %v1817 = vadd.f32 %v1808, %v1791
      %v1818 = vadd.f32 %v1809, %v1796
      %1819 = vst [vmem:[%s428] sm:$0xff] %v1810
      %1820 = vst [vmem:[%s428 + $0x8] sm:$0xff] %v1811
      %1821 = vst [vmem:[%s428 + $0x10] sm:$0xff] %v1812
      %1822 = vst [vmem:[%s428 + $0x18] sm:$0xff] %v1813
      %1823 = vst [vmem:[%s428 + $0x20] sm:$0xff] %v1814
      %1824 = vst [vmem:[%s428 + $0x28] sm:$0xff] %v1815
      %1825 = vst [vmem:[%s428 + $0x30] sm:$0xff] %v1816
      %1826 = vst [vmem:[%s428 + $0x38] sm:$0xff] %v1817
      %1827 = vst [vmem:[%s428 + $0x40] sm:$0xff] %v1818
      %v1828 = vld [vmem:[%s392 + $0x4] sm:$0xf]
      %v1829 = vld [vmem:[%s392 + $0x8] sm:$0xf]
      %v1830 = vld [vmem:[%s392 + $0xc] sm:$0xf]
      %v1831 = vld [vmem:[%s392 + $0x10] sm:$0xf]
      %v1832 = vld [vmem:[%s392 + $0x14] sm:$0xf]
      %v1833 = vld [vmem:[%s392 + $0x18] sm:$0xf]
      %v1834 = vld [vmem:[%s392 + $0x1c] sm:$0xf]
      %v1835 = vld [vmem:[%s392 + $0x20] sm:$0xf]
      %v1836 = vld [vmem:[%s392 + $0x24] sm:$0xf]
      %v1837 = vld [vmem:[%s392 + $0x28] sm:$0x1]
      %s1838 = scalar_lea.vmem %s4, 64
      %v1839 = vld [vmem:[%s1838] sm:$0xf]
      %v1840 = vld [vmem:[%s1838 + $0x4] sm:$0xf]
      %v1851 = vunpack.c.l.b16 %v1828
      %v1852 = vunpack.c.l.b16 %v1829
      %v1853 = vunpack.c.l.b16 %v1830
      %v1854 = vunpack.c.l.b16 %v1831
      %v1855 = vunpack.c.l.b16 %v1832
      %v1856 = vunpack.c.l.b16 %v1833
      %v1857 = vunpack.c.l.b16 %v1834
      %v1858 = vunpack.c.l.b16 %v1835
      %v1859 = vunpack.c.l.b16 %v1836
      %v1860 = vunpack.c.l.b16 %v1837
      %v1861 = vpack.c.b16 %v1852, %v1851
      %v1862 = vpack.c.b16 %v1854, %v1853
      %v1863 = vpack.c.b16 %v1856, %v1855
      %v1864 = vpack.c.b16 %v1858, %v1857
      %v1865 = vpack.c.b16 %v1860, %v1859
      %v1867 = vshrl.u32 %v1861, 16
      %v1869 = vshll.u32 %v1861, 16
      %v1871 = vrot.slane %v1869, 1
      %v1872 = vor.u32 %v1867, %v1871
      %v1874 = vshll.u32 %v1862, 16
      %v1876 = vrot.slane %v1874, 1
      %v1877 = vsel %vm767, %v1872, %v1876
      %v1878 = vshrl.u32 %v1862, 16
      %v1880 = vor.u32 %v1878, %v1876
      %v1882 = vshll.u32 %v1863, 16
      %v1884 = vrot.slane %v1882, 1
      %v1885 = vsel %vm767, %v1880, %v1884
      %v1886 = vshrl.u32 %v1863, 16
      %v1888 = vor.u32 %v1886, %v1884
      %v1890 = vshll.u32 %v1864, 16
      %v1892 = vrot.slane %v1890, 1
      %v1893 = vsel %vm767, %v1888, %v1892
      %v1894 = vshrl.u32 %v1864, 16
      %v1896 = vor.u32 %v1894, %v1892
      %v1898 = vshll.u32 %v1865, 16
      %v1900 = vrot.slane %v1898, 1
      %v1901 = vsel %vm767, %v1896, %v1900
      %v1902 = vshrl.u32 %v1865, 16
      %v1904 = vor.u32 %v1902, %v1900
      %v1907 = vunpack.c.l.b16 %v1839
      %v1908 = vunpack.c.l.b16 %v1840
      %v1909 = vpack.c.b16 %v1908, %v1907
      %v1912 = vsel %vm477, %v1877, 0
      %v1915 = vsel %vm477, %v1885, 0
      %v1918 = vsel %vm477, %v1893, 0
      %v1921 = vsel %vm477, %v1901, 0
      %v1924 = vsel %vm477, %v1904, 0
      %1926 = vmatprep.subr.bf16.mxu0 0
      %1927 = vmatpush1.bf16.msra.mxu0 %v1909
      %1928 = vmatprep.subr.bf16.mxu0 0
      %1929 = vmatpush1.bf16.msra.mxu0 0
      %1930 = vmatprep.subr.bf16.mxu0 0
      %1931 = vmatpush1.bf16.msra.mxu0 0
      %1932 = vmatprep.subr.bf16.mxu0 0
      %1933 = vmatpush1.bf16.msra.mxu0 0
      %1934 = vmatprep.subr.bf16.mxu0 0
      %1935 = vmatpush1.bf16.msra.mxu0 0
      %1936 = vmatprep.subr.bf16.mxu0 0
      %1937 = vmatpush1.bf16.msra.mxu0 0
      %1938 = vmatprep.subr.bf16.mxu0 0
      %1939 = vmatpush1.bf16.msra.mxu0 0
      %1940 = vmatprep.subr.bf16.mxu0 0
      %1941 = vmatpush1.bf16.msra.mxu0 0
      %1942 = vmatprep.subr.bf16.mxu0 0
      %1943 = vmatpush1.bf16.msra.mxu0 0
      %1944 = vmatprep.subr.bf16.mxu0 0
      %1945 = vmatpush1.bf16.msra.mxu0 0
      %1946 = vmatprep.subr.bf16.mxu0 0
      %1947 = vmatpush1.bf16.msra.mxu0 0
      %1948 = vmatprep.subr.bf16.mxu0 0
      %1949 = vmatpush1.bf16.msra.mxu0 0
      %1950 = vmatprep.subr.bf16.mxu0 0
      %1951 = vmatpush1.bf16.msra.mxu0 0
      %1952 = vmatprep.subr.bf16.mxu0 0
      %1953 = vmatpush1.bf16.msra.mxu0 0
      %1954 = vmatprep.subr.bf16.mxu0 0
      %1955 = vmatpush1.bf16.msra.mxu0 0
      %1956 = vmatprep.subr.bf16.mxu0 0
      %1957 = vmatpush1.bf16.msra.mxu0 0
      %1958 = vmatprep.mubr.bf16.mxu0 0
      %1959 = vmatmul.mubr.bf16.gmra.mrb[0].mxu0 %v1912
      %v1960 = vpop.f32.mrb[0].mxu0
      %v1961 = vadd.f32 0.0, %v1960
      %v1962 = vpop.f32.mrb[0].mxu0
      %v1963 = vpop.f32.mrb[0].mxu0
      %v1964 = vadd.f32 0.0, %v1963
      %v1965 = vpop.f32.mrb[0].mxu0
      %1966 = vmatprep.mubr.bf16.mxu0 0
      %1967 = vmatmul.mubr.bf16.gmra.mrb[0].mxu0 %v1915
      %v1968 = vpop.f32.mrb[0].mxu0
      %v1969 = vadd.f32 0.0, %v1968
      %v1970 = vpop.f32.mrb[0].mxu0
      %v1971 = vpop.f32.mrb[0].mxu0
      %v1972 = vadd.f32 0.0, %v1971
      %v1973 = vpop.f32.mrb[0].mxu0
      %1974 = vmatprep.mubr.bf16.mxu0 0
      %1975 = vmatmul.mubr.bf16.gmra.mrb[0].mxu0 %v1918
      %v1976 = vpop.f32.mrb[0].mxu0
      %v1977 = vadd.f32 0.0, %v1976
      %v1978 = vpop.f32.mrb[0].mxu0
      %v1979 = vpop.f32.mrb[0].mxu0
      %v1980 = vadd.f32 0.0, %v1979
      %v1981 = vpop.f32.mrb[0].mxu0
      %1982 = vmatprep.mubr.bf16.mxu0 0
      %1983 = vmatmul.mubr.bf16.gmra.mrb[0].mxu0 %v1921
      %v1984 = vpop.f32.mrb[0].mxu0
      %v1985 = vadd.f32 0.0, %v1984
      %v1986 = vpop.f32.mrb[0].mxu0
      %v1987 = vpop.f32.mrb[0].mxu0
      %v1988 = vadd.f32 0.0, %v1987
      %v1989 = vpop.f32.mrb[0].mxu0
      %1990 = vmatprep.mubr.bf16.mxu0 0
      %1991 = vmatmul.mubr.bf16.gmra.mrb[0].mxu0 %v1924
      %v1992 = vpop.f32.mrb[0].mxu0
      %v1993 = vadd.f32 0.0, %v1992
      %v1994 = vpop.f32.mrb[0].mxu0
      %v1995 = vpop.f32.mrb[0].mxu0
      %v1996 = vpop.f32.mrb[0].mxu0
      %1997 = vdwg.mxu0
      %v1998 = vld [vmem:[%s428] sm:$0xff]
      %v1999 = vld [vmem:[%s428 + $0x8] sm:$0xff]
      %v2000 = vld [vmem:[%s428 + $0x10] sm:$0xff]
      %v2001 = vld [vmem:[%s428 + $0x18] sm:$0xff]
      %v2002 = vld [vmem:[%s428 + $0x20] sm:$0xff]
      %v2003 = vld [vmem:[%s428 + $0x28] sm:$0xff]
      %v2004 = vld [vmem:[%s428 + $0x30] sm:$0xff]
      %v2005 = vld [vmem:[%s428 + $0x38] sm:$0xff]
      %v2006 = vld [vmem:[%s428 + $0x40] sm:$0xff]
      %v2007 = vadd.f32 %v1998, %v1961
      %v2008 = vadd.f32 %v1999, %v1964
      %v2009 = vadd.f32 %v2000, %v1969
      %v2010 = vadd.f32 %v2001, %v1972
      %v2011 = vadd.f32 %v2002, %v1977
      %v2012 = vadd.f32 %v2003, %v1980
      %v2013 = vadd.f32 %v2004, %v1985
      %v2014 = vadd.f32 %v2005, %v1988
      %v2015 = vadd.f32 %v2006, %v1993
      %2016 = vst [vmem:[%s428] sm:$0xff] %v2007
      %2017 = vst [vmem:[%s428 + $0x8] sm:$0xff] %v2008
      %2018 = vst [vmem:[%s428 + $0x10] sm:$0xff] %v2009
      %2019 = vst [vmem:[%s428 + $0x18] sm:$0xff] %v2010
      %2020 = vst [vmem:[%s428 + $0x20] sm:$0xff] %v2011
      %2021 = vst [vmem:[%s428 + $0x28] sm:$0xff] %v2012
      %2022 = vst [vmem:[%s428 + $0x30] sm:$0xff] %v2013
      %2023 = vst [vmem:[%s428 + $0x38] sm:$0xff] %v2014
      %2024 = vst [vmem:[%s428 + $0x40] sm:$0xff] %v2015
      %v2025 = vld [vmem:[%s401 + $0x4] sm:$0xf]
      %v2026 = vld [vmem:[%s401 + $0x8] sm:$0xf]
      %v2027 = vld [vmem:[%s401 + $0xc] sm:$0xf]
      %v2028 = vld [vmem:[%s401 + $0x10] sm:$0xf]
      %v2029 = vld [vmem:[%s401 + $0x14] sm:$0xf]
      %v2030 = vld [vmem:[%s401 + $0x18] sm:$0xf]
      %v2031 = vld [vmem:[%s401 + $0x1c] sm:$0xf]
      %v2032 = vld [vmem:[%s401 + $0x20] sm:$0xf]
      %v2033 = vld [vmem:[%s401 + $0x24] sm:$0xf]
      %v2034 = vld [vmem:[%s401 + $0x28] sm:$0x1]
      %s2035 = scalar_lea.vmem %s4, 72
      %v2036 = vld [vmem:[%s2035] sm:$0xf]
      %v2037 = vld [vmem:[%s2035 + $0x4] sm:$0xf]
      %v2048 = vunpack.c.l.b16 %v2025
      %v2049 = vunpack.c.l.b16 %v2026
      %v2050 = vunpack.c.l.b16 %v2027
      %v2051 = vunpack.c.l.b16 %v2028
      %v2052 = vunpack.c.l.b16 %v2029
      %v2053 = vunpack.c.l.b16 %v2030
      %v2054 = vunpack.c.l.b16 %v2031
      %v2055 = vunpack.c.l.b16 %v2032
      %v2056 = vunpack.c.l.b16 %v2033
      %v2057 = vunpack.c.l.b16 %v2034
      %v2058 = vpack.c.b16 %v2049, %v2048
      %v2059 = vpack.c.b16 %v2051, %v2050
      %v2060 = vpack.c.b16 %v2053, %v2052
      %v2061 = vpack.c.b16 %v2055, %v2054
      %v2062 = vpack.c.b16 %v2057, %v2056
      %v2064 = vshrl.u32 %v2058, 16
      %v2066 = vshll.u32 %v2058, 16
      %v2068 = vrot.slane %v2066, 1
      %v2069 = vor.u32 %v2064, %v2068
      %v2071 = vshll.u32 %v2059, 16
      %v2073 = vrot.slane %v2071, 1
      %v2074 = vsel %vm767, %v2069, %v2073
      %v2075 = vshrl.u32 %v2059, 16
      %v2077 = vor.u32 %v2075, %v2073
      %v2079 = vshll.u32 %v2060, 16
      %v2081 = vrot.slane %v2079, 1
      %v2082 = vsel %vm767, %v2077, %v2081
      %v2083 = vshrl.u32 %v2060, 16
      %v2085 = vor.u32 %v2083, %v2081
      %v2087 = vshll.u32 %v2061, 16
      %v2089 = vrot.slane %v2087, 1
      %v2090 = vsel %vm767, %v2085, %v2089
      %v2091 = vshrl.u32 %v2061, 16
      %v2093 = vor.u32 %v2091, %v2089
      %v2095 = vshll.u32 %v2062, 16
      %v2097 = vrot.slane %v2095, 1
      %v2098 = vsel %vm767, %v2093, %v2097
      %v2099 = vshrl.u32 %v2062, 16
      %v2101 = vor.u32 %v2099, %v2097
      %v2104 = vunpack.c.l.b16 %v2036
      %v2105 = vunpack.c.l.b16 %v2037
      %v2106 = vpack.c.b16 %v2105, %v2104
      %v2109 = vsel %vm477, %v2074, 0
      %v2112 = vsel %vm477, %v2082, 0
      %v2115 = vsel %vm477, %v2090, 0
      %v2118 = vsel %vm477, %v2098, 0
      %v2121 = vsel %vm477, %v2101, 0
      %2123 = vmatprep.subr.bf16.mxu0 0
      %2124 = vmatpush1.bf16.msra.mxu0 %v2106
      %2125 = vmatprep.subr.bf16.mxu0 0
      %2126 = vmatpush1.bf16.msra.mxu0 0
      %2127 = vmatprep.subr.bf16.mxu0 0
      %2128 = vmatpush1.bf16.msra.mxu0 0
      %2129 = vmatprep.subr.bf16.mxu0 0
      %2130 = vmatpush1.bf16.msra.mxu0 0
      %2131 = vmatprep.subr.bf16.mxu0 0
      %2132 = vmatpush1.bf16.msra.mxu0 0
      %2133 = vmatprep.subr.bf16.mxu0 0
      %2134 = vmatpush1.bf16.msra.mxu0 0
      %2135 = vmatprep.subr.bf16.mxu0 0
      %2136 = vmatpush1.bf16.msra.mxu0 0
      %2137 = vmatprep.subr.bf16.mxu0 0
      %2138 = vmatpush1.bf16.msra.mxu0 0
      %2139 = vmatprep.subr.bf16.mxu0 0
      %2140 = vmatpush1.bf16.msra.mxu0 0
      %2141 = vmatprep.subr.bf16.mxu0 0
      %2142 = vmatpush1.bf16.msra.mxu0 0
      %2143 = vmatprep.subr.bf16.mxu0 0
      %2144 = vmatpush1.bf16.msra.mxu0 0
      %2145 = vmatprep.subr.bf16.mxu0 0
      %2146 = vmatpush1.bf16.msra.mxu0 0
      %2147 = vmatprep.subr.bf16.mxu0 0
      %2148 = vmatpush1.bf16.msra.mxu0 0
      %2149 = vmatprep.subr.bf16.mxu0 0
      %2150 = vmatpush1.bf16.msra.mxu0 0
      %2151 = vmatprep.subr.bf16.mxu0 0
      %2152 = vmatpush1.bf16.msra.mxu0 0
      %2153 = vmatprep.subr.bf16.mxu0 0
      %2154 = vmatpush1.bf16.msra.mxu0 0
      %2155 = vmatprep.mubr.bf16.mxu0 0
      %2156 = vmatmul.mubr.bf16.gmra.mrb[0].mxu0 %v2109
      %v2157 = vpop.f32.mrb[0].mxu0
      %v2158 = vadd.f32 0.0, %v2157
      %v2159 = vpop.f32.mrb[0].mxu0
      %v2160 = vpop.f32.mrb[0].mxu0
      %v2161 = vadd.f32 0.0, %v2160
      %v2162 = vpop.f32.mrb[0].mxu0
      %2163 = vmatprep.mubr.bf16.mxu0 0
      %2164 = vmatmul.mubr.bf16.gmra.mrb[0].mxu0 %v2112
      %v2165 = vpop.f32.mrb[0].mxu0
      %v2166 = vadd.f32 0.0, %v2165
      %v2167 = vpop.f32.mrb[0].mxu0
      %v2168 = vpop.f32.mrb[0].mxu0
      %v2169 = vadd.f32 0.0, %v2168
      %v2170 = vpop.f32.mrb[0].mxu0
      %2171 = vmatprep.mubr.bf16.mxu0 0
      %2172 = vmatmul.mubr.bf16.gmra.mrb[0].mxu0 %v2115
      %v2173 = vpop.f32.mrb[0].mxu0
      %v2174 = vadd.f32 0.0, %v2173
      %v2175 = vpop.f32.mrb[0].mxu0
      %v2176 = vpop.f32.mrb[0].mxu0
      %v2177 = vadd.f32 0.0, %v2176
      %v2178 = vpop.f32.mrb[0].mxu0
      %2179 = vmatprep.mubr.bf16.mxu0 0
      %2180 = vmatmul.mubr.bf16.gmra.mrb[0].mxu0 %v2118
      %v2181 = vpop.f32.mrb[0].mxu0
      %v2182 = vadd.f32 0.0, %v2181
      %v2183 = vpop.f32.mrb[0].mxu0
      %v2184 = vpop.f32.mrb[0].mxu0
      %v2185 = vadd.f32 0.0, %v2184
      %v2186 = vpop.f32.mrb[0].mxu0
      %2187 = vmatprep.mubr.bf16.mxu0 0
      %2188 = vmatmul.mubr.bf16.gmra.mrb[0].mxu0 %v2121
      %v2189 = vpop.f32.mrb[0].mxu0
      %v2190 = vadd.f32 0.0, %v2189
      %v2191 = vpop.f32.mrb[0].mxu0
      %v2192 = vpop.f32.mrb[0].mxu0
      %v2193 = vpop.f32.mrb[0].mxu0
      %2194 = vdwg.mxu0
      %v2195 = vld [vmem:[%s428] sm:$0xff]
      %v2196 = vld [vmem:[%s428 + $0x8] sm:$0xff]
      %v2197 = vld [vmem:[%s428 + $0x10] sm:$0xff]
      %v2198 = vld [vmem:[%s428 + $0x18] sm:$0xff]
      %v2199 = vld [vmem:[%s428 + $0x20] sm:$0xff]
      %v2200 = vld [vmem:[%s428 + $0x28] sm:$0xff]
      %v2201 = vld [vmem:[%s428 + $0x30] sm:$0xff]
      %v2202 = vld [vmem:[%s428 + $0x38] sm:$0xff]
      %v2203 = vld [vmem:[%s428 + $0x40] sm:$0xff]
      %v2204 = vadd.f32 %v2195, %v2158
      %v2205 = vadd.f32 %v2196, %v2161
      %v2206 = vadd.f32 %v2197, %v2166
      %v2207 = vadd.f32 %v2198, %v2169
      %v2208 = vadd.f32 %v2199, %v2174
      %v2209 = vadd.f32 %v2200, %v2177
      %v2210 = vadd.f32 %v2201, %v2182
      %v2211 = vadd.f32 %v2202, %v2185
      %v2212 = vadd.f32 %v2203, %v2190
      %2213 = vst [vmem:[%s428] sm:$0xff] %v2204
      %2214 = vst [vmem:[%s428 + $0x8] sm:$0xff] %v2205
      %2215 = vst [vmem:[%s428 + $0x10] sm:$0xff] %v2206
      %2216 = vst [vmem:[%s428 + $0x18] sm:$0xff] %v2207
      %2217 = vst [vmem:[%s428 + $0x20] sm:$0xff] %v2208
      %2218 = vst [vmem:[%s428 + $0x28] sm:$0xff] %v2209
      %2219 = vst [vmem:[%s428 + $0x30] sm:$0xff] %v2210
      %2220 = vst [vmem:[%s428 + $0x38] sm:$0xff] %v2211
      %2221 = vst [vmem:[%s428 + $0x40] sm:$0xff] %v2212
      %v2222 = vld [vmem:[%s392 + $0x4] sm:$0xe]
      %v2223 = vld [vmem:[%s392 + $0x8] sm:$0xf]
      %v2224 = vld [vmem:[%s392 + $0xc] sm:$0xf]
      %v2225 = vld [vmem:[%s392 + $0x10] sm:$0xf]
      %v2226 = vld [vmem:[%s392 + $0x14] sm:$0xf]
      %v2227 = vld [vmem:[%s392 + $0x18] sm:$0xf]
      %v2228 = vld [vmem:[%s392 + $0x1c] sm:$0xf]
      %v2229 = vld [vmem:[%s392 + $0x20] sm:$0xf]
      %v2230 = vld [vmem:[%s392 + $0x24] sm:$0xf]
      %v2231 = vld [vmem:[%s392 + $0x28] sm:$0x1]
      %s2232 = scalar_lea.vmem %s4, 80
      %v2233 = vld [vmem:[%s2232] sm:$0xf]
      %v2234 = vld [vmem:[%s2232 + $0x4] sm:$0xf]
      %v2245 = vunpack.c.l.b16 %v2222
      %v2246 = vunpack.c.l.b16 %v2223
      %v2247 = vunpack.c.l.b16 %v2224
      %v2248 = vunpack.c.l.b16 %v2225
      %v2249 = vunpack.c.l.b16 %v2226
      %v2250 = vunpack.c.l.b16 %v2227
      %v2251 = vunpack.c.l.b16 %v2228
      %v2252 = vunpack.c.l.b16 %v2229
      %v2253 = vunpack.c.l.b16 %v2230
      %v2254 = vunpack.c.l.b16 %v2231
      %v2255 = vpack.c.b16 %v2246, %v2245
      %v2256 = vpack.c.b16 %v2248, %v2247
      %v2257 = vpack.c.b16 %v2250, %v2249
      %v2258 = vpack.c.b16 %v2252, %v2251
      %v2259 = vpack.c.b16 %v2254, %v2253
      %vm2260 = vcmask 1046528
      %v2261 = vrot.slane %v2255, 1
      %v2262 = vrot.slane %v2256, 1
      %v2263 = vsel %vm2260, %v2261, %v2262
      %v2264 = vrot.slane %v2257, 1
      %v2265 = vsel %vm2260, %v2262, %v2264
      %v2266 = vrot.slane %v2258, 1
      %v2267 = vsel %vm2260, %v2264, %v2266
      %v2268 = vrot.slane %v2259, 1
      %v2269 = vsel %vm2260, %v2266, %v2268
      %v2272 = vunpack.c.l.b16 %v2233
      %v2273 = vunpack.c.l.b16 %v2234
      %v2274 = vpack.c.b16 %v2273, %v2272
      %v2277 = vsel %vm477, %v2263, 0
      %v2280 = vsel %vm477, %v2265, 0
      %v2283 = vsel %vm477, %v2267, 0
      %v2286 = vsel %vm477, %v2269, 0
      %v2289 = vsel %vm477, %v2268, 0
      %2291 = vmatprep.subr.bf16.mxu0 0
      %2292 = vmatpush1.bf16.msra.mxu0 %v2274
      %2293 = vmatprep.subr.bf16.mxu0 0
      %2294 = vmatpush1.bf16.msra.mxu0 0
      %2295 = vmatprep.subr.bf16.mxu0 0
      %2296 = vmatpush1.bf16.msra.mxu0 0
      %2297 = vmatprep.subr.bf16.mxu0 0
      %2298 = vmatpush1.bf16.msra.mxu0 0
      %2299 = vmatprep.subr.bf16.mxu0 0
      %2300 = vmatpush1.bf16.msra.mxu0 0
      %2301 = vmatprep.subr.bf16.mxu0 0
      %2302 = vmatpush1.bf16.msra.mxu0 0
      %2303 = vmatprep.subr.bf16.mxu0 0
      %2304 = vmatpush1.bf16.msra.mxu0 0
      %2305 = vmatprep.subr.bf16.mxu0 0
      %2306 = vmatpush1.bf16.msra.mxu0 0
      %2307 = vmatprep.subr.bf16.mxu0 0
      %2308 = vmatpush1.bf16.msra.mxu0 0
      %2309 = vmatprep.subr.bf16.mxu0 0
      %2310 = vmatpush1.bf16.msra.mxu0 0
      %2311 = vmatprep.subr.bf16.mxu0 0
      %2312 = vmatpush1.bf16.msra.mxu0 0
      %2313 = vmatprep.subr.bf16.mxu0 0
      %2314 = vmatpush1.bf16.msra.mxu0 0
      %2315 = vmatprep.subr.bf16.mxu0 0
      %2316 = vmatpush1.bf16.msra.mxu0 0
      %2317 = vmatprep.subr.bf16.mxu0 0
      %2318 = vmatpush1.bf16.msra.mxu0 0
      %2319 = vmatprep.subr.bf16.mxu0 0
      %2320 = vmatpush1.bf16.msra.mxu0 0
      %2321 = vmatprep.subr.bf16.mxu0 0
      %2322 = vmatpush1.bf16.msra.mxu0 0
      %2323 = vmatprep.mubr.bf16.mxu0 0
      %2324 = vmatmul.mubr.bf16.gmra.mrb[0].mxu0 %v2277
      %v2325 = vpop.f32.mrb[0].mxu0
      %v2326 = vadd.f32 0.0, %v2325
      %v2327 = vpop.f32.mrb[0].mxu0
      %v2328 = vpop.f32.mrb[0].mxu0
      %v2329 = vadd.f32 0.0, %v2328
      %v2330 = vpop.f32.mrb[0].mxu0
      %2331 = vmatprep.mubr.bf16.mxu0 0
      %2332 = vmatmul.mubr.bf16.gmra.mrb[0].mxu0 %v2280
      %v2333 = vpop.f32.mrb[0].mxu0
      %v2334 = vadd.f32 0.0, %v2333
      %v2335 = vpop.f32.mrb[0].mxu0
      %v2336 = vpop.f32.mrb[0].mxu0
      %v2337 = vadd.f32 0.0, %v2336
      %v2338 = vpop.f32.mrb[0].mxu0
      %2339 = vmatprep.mubr.bf16.mxu0 0
      %2340 = vmatmul.mubr.bf16.gmra.mrb[0].mxu0 %v2283
      %v2341 = vpop.f32.mrb[0].mxu0
      %v2342 = vadd.f32 0.0, %v2341
      %v2343 = vpop.f32.mrb[0].mxu0
      %v2344 = vpop.f32.mrb[0].mxu0
      %v2345 = vadd.f32 0.0, %v2344
      %v2346 = vpop.f32.mrb[0].mxu0
      %2347 = vmatprep.mubr.bf16.mxu0 0
      %2348 = vmatmul.mubr.bf16.gmra.mrb[0].mxu0 %v2286
      %v2349 = vpop.f32.mrb[0].mxu0
      %v2350 = vadd.f32 0.0, %v2349
      %v2351 = vpop.f32.mrb[0].mxu0
      %v2352 = vpop.f32.mrb[0].mxu0
      %v2353 = vadd.f32 0.0, %v2352
      %v2354 = vpop.f32.mrb[0].mxu0
      %2355 = vmatprep.mubr.bf16.mxu0 0
      %2356 = vmatmul.mubr.bf16.gmra.mrb[0].mxu0 %v2289
      %v2357 = vpop.f32.mrb[0].mxu0
      %v2358 = vadd.f32 0.0, %v2357
      %v2359 = vpop.f32.mrb[0].mxu0
      %v2360 = vpop.f32.mrb[0].mxu0
      %v2361 = vpop.f32.mrb[0].mxu0
      %2362 = vdwg.mxu0
      %v2363 = vld [vmem:[%s428] sm:$0xff]
      %v2364 = vld [vmem:[%s428 + $0x8] sm:$0xff]
      %v2365 = vld [vmem:[%s428 + $0x10] sm:$0xff]
      %v2366 = vld [vmem:[%s428 + $0x18] sm:$0xff]
      %v2367 = vld [vmem:[%s428 + $0x20] sm:$0xff]
      %v2368 = vld [vmem:[%s428 + $0x28] sm:$0xff]
      %v2369 = vld [vmem:[%s428 + $0x30] sm:$0xff]
      %v2370 = vld [vmem:[%s428 + $0x38] sm:$0xff]
      %v2371 = vld [vmem:[%s428 + $0x40] sm:$0xff]
      %v2372 = vadd.f32 %v2363, %v2326
      %v2373 = vadd.f32 %v2364, %v2329
      %v2374 = vadd.f32 %v2365, %v2334
      %v2375 = vadd.f32 %v2366, %v2337
      %v2376 = vadd.f32 %v2367, %v2342
      %v2377 = vadd.f32 %v2368, %v2345
      %v2378 = vadd.f32 %v2369, %v2350
      %v2379 = vadd.f32 %v2370, %v2353
      %v2380 = vadd.f32 %v2371, %v2358
      %2381 = vst [vmem:[%s428] sm:$0xff] %v2372
      %2382 = vst [vmem:[%s428 + $0x8] sm:$0xff] %v2373
      %2383 = vst [vmem:[%s428 + $0x10] sm:$0xff] %v2374
      %2384 = vst [vmem:[%s428 + $0x18] sm:$0xff] %v2375
      %2385 = vst [vmem:[%s428 + $0x20] sm:$0xff] %v2376
      %2386 = vst [vmem:[%s428 + $0x28] sm:$0xff] %v2377
      %2387 = vst [vmem:[%s428 + $0x30] sm:$0xff] %v2378
      %2388 = vst [vmem:[%s428 + $0x38] sm:$0xff] %v2379
      %2389 = vst [vmem:[%s428 + $0x40] sm:$0xff] %v2380
      %v2390 = vld [vmem:[%s401 + $0x4] sm:$0xe]
      %v2391 = vld [vmem:[%s401 + $0x8] sm:$0xf]
      %v2392 = vld [vmem:[%s401 + $0xc] sm:$0xf]
      %v2393 = vld [vmem:[%s401 + $0x10] sm:$0xf]
      %v2394 = vld [vmem:[%s401 + $0x14] sm:$0xf]
      %v2395 = vld [vmem:[%s401 + $0x18] sm:$0xf]
      %v2396 = vld [vmem:[%s401 + $0x1c] sm:$0xf]
      %v2397 = vld [vmem:[%s401 + $0x20] sm:$0xf]
      %v2398 = vld [vmem:[%s401 + $0x24] sm:$0xf]
      %v2399 = vld [vmem:[%s401 + $0x28] sm:$0x1]
      %s2400 = scalar_lea.vmem %s4, 88
      %v2401 = vld [vmem:[%s2400] sm:$0xf]
      %v2402 = vld [vmem:[%s2400 + $0x4] sm:$0xf]
      %v2413 = vunpack.c.l.b16 %v2390
      %v2414 = vunpack.c.l.b16 %v2391
      %v2415 = vunpack.c.l.b16 %v2392
      %v2416 = vunpack.c.l.b16 %v2393
      %v2417 = vunpack.c.l.b16 %v2394
      %v2418 = vunpack.c.l.b16 %v2395
      %v2419 = vunpack.c.l.b16 %v2396
      %v2420 = vunpack.c.l.b16 %v2397
      %v2421 = vunpack.c.l.b16 %v2398
      %v2422 = vunpack.c.l.b16 %v2399
      %v2423 = vpack.c.b16 %v2414, %v2413
      %v2424 = vpack.c.b16 %v2416, %v2415
      %v2425 = vpack.c.b16 %v2418, %v2417
      %v2426 = vpack.c.b16 %v2420, %v2419
      %v2427 = vpack.c.b16 %v2422, %v2421
      %v2428 = vrot.slane %v2423, 1
      %v2429 = vrot.slane %v2424, 1
      %v2430 = vsel %vm2260, %v2428, %v2429
      %v2431 = vrot.slane %v2425, 1
      %v2432 = vsel %vm2260, %v2429, %v2431
      %v2433 = vrot.slane %v2426, 1
      %v2434 = vsel %vm2260, %v2431, %v2433
      %v2435 = vrot.slane %v2427, 1
      %v2436 = vsel %vm2260, %v2433, %v2435
      %v2439 = vunpack.c.l.b16 %v2401
      %v2440 = vunpack.c.l.b16 %v2402
      %v2441 = vpack.c.b16 %v2440, %v2439
      %v2444 = vsel %vm477, %v2430, 0
      %v2447 = vsel %vm477, %v2432, 0
      %v2450 = vsel %vm477, %v2434, 0
      %v2453 = vsel %vm477, %v2436, 0
      %v2456 = vsel %vm477, %v2435, 0
      %2458 = vmatprep.subr.bf16.mxu0 0
      %2459 = vmatpush1.bf16.msra.mxu0 %v2441
      %2460 = vmatprep.subr.bf16.mxu0 0
      %2461 = vmatpush1.bf16.msra.mxu0 0
      %2462 = vmatprep.subr.bf16.mxu0 0
      %2463 = vmatpush1.bf16.msra.mxu0 0
      %2464 = vmatprep.subr.bf16.mxu0 0
      %2465 = vmatpush1.bf16.msra.mxu0 0
      %2466 = vmatprep.subr.bf16.mxu0 0
      %2467 = vmatpush1.bf16.msra.mxu0 0
      %2468 = vmatprep.subr.bf16.mxu0 0
      %2469 = vmatpush1.bf16.msra.mxu0 0
      %2470 = vmatprep.subr.bf16.mxu0 0
      %2471 = vmatpush1.bf16.msra.mxu0 0
      %2472 = vmatprep.subr.bf16.mxu0 0
      %2473 = vmatpush1.bf16.msra.mxu0 0
      %2474 = vmatprep.subr.bf16.mxu0 0
      %2475 = vmatpush1.bf16.msra.mxu0 0
      %2476 = vmatprep.subr.bf16.mxu0 0
      %2477 = vmatpush1.bf16.msra.mxu0 0
      %2478 = vmatprep.subr.bf16.mxu0 0
      %2479 = vmatpush1.bf16.msra.mxu0 0
      %2480 = vmatprep.subr.bf16.mxu0 0
      %2481 = vmatpush1.bf16.msra.mxu0 0
      %2482 = vmatprep.subr.bf16.mxu0 0
      %2483 = vmatpush1.bf16.msra.mxu0 0
      %2484 = vmatprep.subr.bf16.mxu0 0
      %2485 = vmatpush1.bf16.msra.mxu0 0
      %2486 = vmatprep.subr.bf16.mxu0 0
      %2487 = vmatpush1.bf16.msra.mxu0 0
      %2488 = vmatprep.subr.bf16.mxu0 0
      %2489 = vmatpush1.bf16.msra.mxu0 0
      %2490 = vmatprep.mubr.bf16.mxu0 0
      %2491 = vmatmul.mubr.bf16.gmra.mrb[0].mxu0 %v2444
      %v2492 = vpop.f32.mrb[0].mxu0
      %v2493 = vadd.f32 0.0, %v2492
      %v2494 = vpop.f32.mrb[0].mxu0
      %v2495 = vpop.f32.mrb[0].mxu0
      %v2496 = vadd.f32 0.0, %v2495
      %v2497 = vpop.f32.mrb[0].mxu0
      %2498 = vmatprep.mubr.bf16.mxu0 0
      %2499 = vmatmul.mubr.bf16.gmra.mrb[0].mxu0 %v2447
      %v2500 = vpop.f32.mrb[0].mxu0
      %v2501 = vadd.f32 0.0, %v2500
      %v2502 = vpop.f32.mrb[0].mxu0
      %v2503 = vpop.f32.mrb[0].mxu0
      %v2504 = vadd.f32 0.0, %v2503
      %v2505 = vpop.f32.mrb[0].mxu0
      %2506 = vmatprep.mubr.bf16.mxu0 0
      %2507 = vmatmul.mubr.bf16.gmra.mrb[0].mxu0 %v2450
      %v2508 = vpop.f32.mrb[0].mxu0
      %v2509 = vadd.f32 0.0, %v2508
      %v2510 = vpop.f32.mrb[0].mxu0
      %v2511 = vpop.f32.mrb[0].mxu0
      %v2512 = vadd.f32 0.0, %v2511
      %v2513 = vpop.f32.mrb[0].mxu0
      %2514 = vmatprep.mubr.bf16.mxu0 0
      %2515 = vmatmul.mubr.bf16.gmra.mrb[0].mxu0 %v2453
      %v2516 = vpop.f32.mrb[0].mxu0
      %v2517 = vadd.f32 0.0, %v2516
      %v2518 = vpop.f32.mrb[0].mxu0
      %v2519 = vpop.f32.mrb[0].mxu0
      %v2520 = vadd.f32 0.0, %v2519
      %v2521 = vpop.f32.mrb[0].mxu0
      %2522 = vmatprep.mubr.bf16.mxu0 0
      %2523 = vmatmul.mubr.bf16.gmra.mrb[0].mxu0 %v2456
      %v2524 = vpop.f32.mrb[0].mxu0
      %v2525 = vadd.f32 0.0, %v2524
      %v2526 = vpop.f32.mrb[0].mxu0
      %v2527 = vpop.f32.mrb[0].mxu0
      %v2528 = vpop.f32.mrb[0].mxu0
      %2529 = vdwg.mxu0
      %v2530 = vld [vmem:[%s428] sm:$0xff]
      %v2531 = vld [vmem:[%s428 + $0x8] sm:$0xff]
      %v2532 = vld [vmem:[%s428 + $0x10] sm:$0xff]
      %v2533 = vld [vmem:[%s428 + $0x18] sm:$0xff]
      %v2534 = vld [vmem:[%s428 + $0x20] sm:$0xff]
      %v2535 = vld [vmem:[%s428 + $0x28] sm:$0xff]
      %v2536 = vld [vmem:[%s428 + $0x30] sm:$0xff]
      %v2537 = vld [vmem:[%s428 + $0x38] sm:$0xff]
      %v2538 = vld [vmem:[%s428 + $0x40] sm:$0xff]
      %v2539 = vadd.f32 %v2530, %v2493
      %v2540 = vadd.f32 %v2531, %v2496
      %v2541 = vadd.f32 %v2532, %v2501
      %v2542 = vadd.f32 %v2533, %v2504
      %v2543 = vadd.f32 %v2534, %v2509
      %v2544 = vadd.f32 %v2535, %v2512
      %v2545 = vadd.f32 %v2536, %v2517
      %v2546 = vadd.f32 %v2537, %v2520
      %v2547 = vadd.f32 %v2538, %v2525
      %2548 = vst [vmem:[%s428] sm:$0xff] %v2539
      %2549 = vst [vmem:[%s428 + $0x8] sm:$0xff] %v2540
      %2550 = vst [vmem:[%s428 + $0x10] sm:$0xff] %v2541
      %2551 = vst [vmem:[%s428 + $0x18] sm:$0xff] %v2542
      %2552 = vst [vmem:[%s428 + $0x20] sm:$0xff] %v2543
      %2553 = vst [vmem:[%s428 + $0x28] sm:$0xff] %v2544
      %2554 = vst [vmem:[%s428 + $0x30] sm:$0xff] %v2545
      %2555 = vst [vmem:[%s428 + $0x38] sm:$0xff] %v2546
      %2556 = vst [vmem:[%s428 + $0x40] sm:$0xff] %v2547
      %v2557 = vld [vmem:[%s410 + $0x4] sm:$0xf]
      %v2558 = vld [vmem:[%s410 + $0x8] sm:$0xf]
      %v2559 = vld [vmem:[%s410 + $0xc] sm:$0xf]
      %v2560 = vld [vmem:[%s410 + $0x10] sm:$0xf]
      %v2561 = vld [vmem:[%s410 + $0x14] sm:$0xf]
      %v2562 = vld [vmem:[%s410 + $0x18] sm:$0xf]
      %v2563 = vld [vmem:[%s410 + $0x1c] sm:$0xf]
      %v2564 = vld [vmem:[%s410 + $0x20] sm:$0xf]
      %v2565 = vld [vmem:[%s410 + $0x24] sm:$0xf]
      %v2566 = vld [vmem:[%s410 + $0x28] sm:$0x1]
      %s2567 = scalar_lea.vmem %s4, 96
      %v2568 = vld [vmem:[%s2567] sm:$0xf]
      %v2569 = vld [vmem:[%s2567 + $0x4] sm:$0xf]
      %v2580 = vunpack.c.l.b16 %v2557
      %v2581 = vunpack.c.l.b16 %v2558
      %v2582 = vunpack.c.l.b16 %v2559
      %v2583 = vunpack.c.l.b16 %v2560
      %v2584 = vunpack.c.l.b16 %v2561
      %v2585 = vunpack.c.l.b16 %v2562
      %v2586 = vunpack.c.l.b16 %v2563
      %v2587 = vunpack.c.l.b16 %v2564
      %v2588 = vunpack.c.l.b16 %v2565
      %v2589 = vunpack.c.l.b16 %v2566
      %v2590 = vpack.c.b16 %v2581, %v2580
      %v2591 = vpack.c.b16 %v2583, %v2582
      %v2592 = vpack.c.b16 %v2585, %v2584
      %v2593 = vpack.c.b16 %v2587, %v2586
      %v2594 = vpack.c.b16 %v2589, %v2588
      %v2596 = vshrl.u32 %v2590, 16
      %v2598 = vshll.u32 %v2590, 16
      %v2600 = vrot.slane %v2598, 1
      %v2601 = vor.u32 %v2596, %v2600
      %v2603 = vshll.u32 %v2591, 16
      %v2605 = vrot.slane %v2603, 1
      %v2606 = vsel %vm767, %v2601, %v2605
      %v2607 = vshrl.u32 %v2591, 16
      %v2609 = vor.u32 %v2607, %v2605
      %v2611 = vshll.u32 %v2592, 16
      %v2613 = vrot.slane %v2611, 1
      %v2614 = vsel %vm767, %v2609, %v2613
      %v2615 = vshrl.u32 %v2592, 16
      %v2617 = vor.u32 %v2615, %v2613
      %v2619 = vshll.u32 %v2593, 16
      %v2621 = vrot.slane %v2619, 1
      %v2622 = vsel %vm767, %v2617, %v2621
      %v2623 = vshrl.u32 %v2593, 16
      %v2625 = vor.u32 %v2623, %v2621
      %v2627 = vshll.u32 %v2594, 16
      %v2629 = vrot.slane %v2627, 1
      %v2630 = vsel %vm767, %v2625, %v2629
      %v2631 = vshrl.u32 %v2594, 16
      %v2633 = vor.u32 %v2631, %v2629
      %v2636 = vunpack.c.l.b16 %v2568
      %v2637 = vunpack.c.l.b16 %v2569
      %v2638 = vpack.c.b16 %v2637, %v2636
      %v2641 = vsel %vm477, %v2606, 0
      %v2644 = vsel %vm477, %v2614, 0
      %v2647 = vsel %vm477, %v2622, 0
      %v2650 = vsel %vm477, %v2630, 0
      %v2653 = vsel %vm477, %v2633, 0
      %2655 = vmatprep.subr.bf16.mxu0 0
      %2656 = vmatpush1.bf16.msra.mxu0 %v2638
      %2657 = vmatprep.subr.bf16.mxu0 0
      %2658 = vmatpush1.bf16.msra.mxu0 0
      %2659 = vmatprep.subr.bf16.mxu0 0
      %2660 = vmatpush1.bf16.msra.mxu0 0
      %2661 = vmatprep.subr.bf16.mxu0 0
      %2662 = vmatpush1.bf16.msra.mxu0 0
      %2663 = vmatprep.subr.bf16.mxu0 0
      %2664 = vmatpush1.bf16.msra.mxu0 0
      %2665 = vmatprep.subr.bf16.mxu0 0
      %2666 = vmatpush1.bf16.msra.mxu0 0
      %2667 = vmatprep.subr.bf16.mxu0 0
      %2668 = vmatpush1.bf16.msra.mxu0 0
      %2669 = vmatprep.subr.bf16.mxu0 0
      %2670 = vmatpush1.bf16.msra.mxu0 0
      %2671 = vmatprep.subr.bf16.mxu0 0
      %2672 = vmatpush1.bf16.msra.mxu0 0
      %2673 = vmatprep.subr.bf16.mxu0 0
      %2674 = vmatpush1.bf16.msra.mxu0 0
      %2675 = vmatprep.subr.bf16.mxu0 0
      %2676 = vmatpush1.bf16.msra.mxu0 0
      %2677 = vmatprep.subr.bf16.mxu0 0
      %2678 = vmatpush1.bf16.msra.mxu0 0
      %2679 = vmatprep.subr.bf16.mxu0 0
      %2680 = vmatpush1.bf16.msra.mxu0 0
      %2681 = vmatprep.subr.bf16.mxu0 0
      %2682 = vmatpush1.bf16.msra.mxu0 0
      %2683 = vmatprep.subr.bf16.mxu0 0
      %2684 = vmatpush1.bf16.msra.mxu0 0
      %2685 = vmatprep.subr.bf16.mxu0 0
      %2686 = vmatpush1.bf16.msra.mxu0 0
      %2687 = vmatprep.mubr.bf16.mxu0 0
      %2688 = vmatmul.mubr.bf16.gmra.mrb[0].mxu0 %v2641
      %v2689 = vpop.f32.mrb[0].mxu0
      %v2690 = vadd.f32 0.0, %v2689
      %v2691 = vpop.f32.mrb[0].mxu0
      %v2692 = vpop.f32.mrb[0].mxu0
      %v2693 = vadd.f32 0.0, %v2692
      %v2694 = vpop.f32.mrb[0].mxu0
      %2695 = vmatprep.mubr.bf16.mxu0 0
      %2696 = vmatmul.mubr.bf16.gmra.mrb[0].mxu0 %v2644
      %v2697 = vpop.f32.mrb[0].mxu0
      %v2698 = vadd.f32 0.0, %v2697
      %v2699 = vpop.f32.mrb[0].mxu0
      %v2700 = vpop.f32.mrb[0].mxu0
      %v2701 = vadd.f32 0.0, %v2700
      %v2702 = vpop.f32.mrb[0].mxu0
      %2703 = vmatprep.mubr.bf16.mxu0 0
      %2704 = vmatmul.mubr.bf16.gmra.mrb[0].mxu0 %v2647
      %v2705 = vpop.f32.mrb[0].mxu0
      %v2706 = vadd.f32 0.0, %v2705
      %v2707 = vpop.f32.mrb[0].mxu0
      %v2708 = vpop.f32.mrb[0].mxu0
      %v2709 = vadd.f32 0.0, %v2708
      %v2710 = vpop.f32.mrb[0].mxu0
      %2711 = vmatprep.mubr.bf16.mxu0 0
      %2712 = vmatmul.mubr.bf16.gmra.mrb[0].mxu0 %v2650
      %v2713 = vpop.f32.mrb[0].mxu0
      %v2714 = vadd.f32 0.0, %v2713
      %v2715 = vpop.f32.mrb[0].mxu0
      %v2716 = vpop.f32.mrb[0].mxu0
      %v2717 = vadd.f32 0.0, %v2716
      %v2718 = vpop.f32.mrb[0].mxu0
      %2719 = vmatprep.mubr.bf16.mxu0 0
      %2720 = vmatmul.mubr.bf16.gmra.mrb[0].mxu0 %v2653
      %v2721 = vpop.f32.mrb[0].mxu0
      %v2722 = vadd.f32 0.0, %v2721
      %v2723 = vpop.f32.mrb[0].mxu0
      %v2724 = vpop.f32.mrb[0].mxu0
      %v2725 = vpop.f32.mrb[0].mxu0
      %2726 = vdwg.mxu0
      %v2727 = vld [vmem:[%s428] sm:$0xff]
      %v2728 = vld [vmem:[%s428 + $0x8] sm:$0xff]
      %v2729 = vld [vmem:[%s428 + $0x10] sm:$0xff]
      %v2730 = vld [vmem:[%s428 + $0x18] sm:$0xff]
      %v2731 = vld [vmem:[%s428 + $0x20] sm:$0xff]
      %v2732 = vld [vmem:[%s428 + $0x28] sm:$0xff]
      %v2733 = vld [vmem:[%s428 + $0x30] sm:$0xff]
      %v2734 = vld [vmem:[%s428 + $0x38] sm:$0xff]
      %v2735 = vld [vmem:[%s428 + $0x40] sm:$0xff]
      %v2736 = vadd.f32 %v2727, %v2690
      %v2737 = vadd.f32 %v2728, %v2693
      %v2738 = vadd.f32 %v2729, %v2698
      %v2739 = vadd.f32 %v2730, %v2701
      %v2740 = vadd.f32 %v2731, %v2706
      %v2741 = vadd.f32 %v2732, %v2709
      %v2742 = vadd.f32 %v2733, %v2714
      %v2743 = vadd.f32 %v2734, %v2717
      %v2744 = vadd.f32 %v2735, %v2722
      %2745 = vst [vmem:[%s428] sm:$0xff] %v2736
      %2746 = vst [vmem:[%s428 + $0x8] sm:$0xff] %v2737
      %2747 = vst [vmem:[%s428 + $0x10] sm:$0xff] %v2738
      %2748 = vst [vmem:[%s428 + $0x18] sm:$0xff] %v2739
      %2749 = vst [vmem:[%s428 + $0x20] sm:$0xff] %v2740
      %2750 = vst [vmem:[%s428 + $0x28] sm:$0xff] %v2741
      %2751 = vst [vmem:[%s428 + $0x30] sm:$0xff] %v2742
      %2752 = vst [vmem:[%s428 + $0x38] sm:$0xff] %v2743
      %2753 = vst [vmem:[%s428 + $0x40] sm:$0xff] %v2744
      %v2754 = vld [vmem:[%s419 + $0x4] sm:$0xf]
      %v2755 = vld [vmem:[%s419 + $0x8] sm:$0xf]
      %v2756 = vld [vmem:[%s419 + $0xc] sm:$0xf]
      %v2757 = vld [vmem:[%s419 + $0x10] sm:$0xf]
      %v2758 = vld [vmem:[%s419 + $0x14] sm:$0xf]
      %v2759 = vld [vmem:[%s419 + $0x18] sm:$0xf]
      %v2760 = vld [vmem:[%s419 + $0x1c] sm:$0xf]
      %v2761 = vld [vmem:[%s419 + $0x20] sm:$0xf]
      %v2762 = vld [vmem:[%s419 + $0x24] sm:$0xf]
      %v2763 = vld [vmem:[%s419 + $0x28] sm:$0x1]
      %s2764 = scalar_lea.vmem %s4, 104
      %v2765 = vld [vmem:[%s2764] sm:$0xf]
      %v2766 = vld [vmem:[%s2764 + $0x4] sm:$0xf]
      %v2777 = vunpack.c.l.b16 %v2754
      %v2778 = vunpack.c.l.b16 %v2755
      %v2779 = vunpack.c.l.b16 %v2756
      %v2780 = vunpack.c.l.b16 %v2757
      %v2781 = vunpack.c.l.b16 %v2758
      %v2782 = vunpack.c.l.b16 %v2759
      %v2783 = vunpack.c.l.b16 %v2760
      %v2784 = vunpack.c.l.b16 %v2761
      %v2785 = vunpack.c.l.b16 %v2762
      %v2786 = vunpack.c.l.b16 %v2763
      %v2787 = vpack.c.b16 %v2778, %v2777
      %v2788 = vpack.c.b16 %v2780, %v2779
      %v2789 = vpack.c.b16 %v2782, %v2781
      %v2790 = vpack.c.b16 %v2784, %v2783
      %v2791 = vpack.c.b16 %v2786, %v2785
      %v2793 = vshrl.u32 %v2787, 16
      %v2795 = vshll.u32 %v2787, 16
      %v2797 = vrot.slane %v2795, 1
      %v2798 = vor.u32 %v2793, %v2797
      %v2800 = vshll.u32 %v2788, 16
      %v2802 = vrot.slane %v2800, 1
      %v2803 = vsel %vm767, %v2798, %v2802
      %v2804 = vshrl.u32 %v2788, 16
      %v2806 = vor.u32 %v2804, %v2802
      %v2808 = vshll.u32 %v2789, 16
      %v2810 = vrot.slane %v2808, 1
      %v2811 = vsel %vm767, %v2806, %v2810
      %v2812 = vshrl.u32 %v2789, 16
      %v2814 = vor.u32 %v2812, %v2810
      %v2816 = vshll.u32 %v2790, 16
      %v2818 = vrot.slane %v2816, 1
      %v2819 = vsel %vm767, %v2814, %v2818
      %v2820 = vshrl.u32 %v2790, 16
      %v2822 = vor.u32 %v2820, %v2818
      %v2824 = vshll.u32 %v2791, 16
      %v2826 = vrot.slane %v2824, 1
      %v2827 = vsel %vm767, %v2822, %v2826
      %v2828 = vshrl.u32 %v2791, 16
      %v2830 = vor.u32 %v2828, %v2826
      %v2833 = vunpack.c.l.b16 %v2765
      %v2834 = vunpack.c.l.b16 %v2766
      %v2835 = vpack.c.b16 %v2834, %v2833
      %v2838 = vsel %vm477, %v2803, 0
      %v2841 = vsel %vm477, %v2811, 0
      %v2844 = vsel %vm477, %v2819, 0
      %v2847 = vsel %vm477, %v2827, 0
      %v2850 = vsel %vm477, %v2830, 0
      %2852 = vmatprep.subr.bf16.mxu0 0
      %2853 = vmatpush1.bf16.msra.mxu0 %v2835
      %2854 = vmatprep.subr.bf16.mxu0 0
      %2855 = vmatpush1.bf16.msra.mxu0 0
      %2856 = vmatprep.subr.bf16.mxu0 0
      %2857 = vmatpush1.bf16.msra.mxu0 0
      %2858 = vmatprep.subr.bf16.mxu0 0
      %2859 = vmatpush1.bf16.msra.mxu0 0
      %2860 = vmatprep.subr.bf16.mxu0 0
      %2861 = vmatpush1.bf16.msra.mxu0 0
      %2862 = vmatprep.subr.bf16.mxu0 0
      %2863 = vmatpush1.bf16.msra.mxu0 0
      %2864 = vmatprep.subr.bf16.mxu0 0
      %2865 = vmatpush1.bf16.msra.mxu0 0
      %2866 = vmatprep.subr.bf16.mxu0 0
      %2867 = vmatpush1.bf16.msra.mxu0 0
      %2868 = vmatprep.subr.bf16.mxu0 0
      %2869 = vmatpush1.bf16.msra.mxu0 0
      %2870 = vmatprep.subr.bf16.mxu0 0
      %2871 = vmatpush1.bf16.msra.mxu0 0
      %2872 = vmatprep.subr.bf16.mxu0 0
      %2873 = vmatpush1.bf16.msra.mxu0 0
      %2874 = vmatprep.subr.bf16.mxu0 0
      %2875 = vmatpush1.bf16.msra.mxu0 0
      %2876 = vmatprep.subr.bf16.mxu0 0
      %2877 = vmatpush1.bf16.msra.mxu0 0
      %2878 = vmatprep.subr.bf16.mxu0 0
      %2879 = vmatpush1.bf16.msra.mxu0 0
      %2880 = vmatprep.subr.bf16.mxu0 0
      %2881 = vmatpush1.bf16.msra.mxu0 0
      %2882 = vmatprep.subr.bf16.mxu0 0
      %2883 = vmatpush1.bf16.msra.mxu0 0
      %2884 = vmatprep.mubr.bf16.mxu0 0
      %2885 = vmatmul.mubr.bf16.gmra.mrb[0].mxu0 %v2838
      %v2886 = vpop.f32.mrb[0].mxu0
      %v2887 = vadd.f32 0.0, %v2886
      %v2888 = vpop.f32.mrb[0].mxu0
      %v2889 = vpop.f32.mrb[0].mxu0
      %v2890 = vadd.f32 0.0, %v2889
      %v2891 = vpop.f32.mrb[0].mxu0
      %2892 = vmatprep.mubr.bf16.mxu0 0
      %2893 = vmatmul.mubr.bf16.gmra.mrb[0].mxu0 %v2841
      %v2894 = vpop.f32.mrb[0].mxu0
      %v2895 = vadd.f32 0.0, %v2894
      %v2896 = vpop.f32.mrb[0].mxu0
      %v2897 = vpop.f32.mrb[0].mxu0
      %v2898 = vadd.f32 0.0, %v2897
      %v2899 = vpop.f32.mrb[0].mxu0
      %2900 = vmatprep.mubr.bf16.mxu0 0
      %2901 = vmatmul.mubr.bf16.gmra.mrb[0].mxu0 %v2844
      %v2902 = vpop.f32.mrb[0].mxu0
      %v2903 = vadd.f32 0.0, %v2902
      %v2904 = vpop.f32.mrb[0].mxu0
      %v2905 = vpop.f32.mrb[0].mxu0
      %v2906 = vadd.f32 0.0, %v2905
      %v2907 = vpop.f32.mrb[0].mxu0
      %2908 = vmatprep.mubr.bf16.mxu0 0
      %2909 = vmatmul.mubr.bf16.gmra.mrb[0].mxu0 %v2847
      %v2910 = vpop.f32.mrb[0].mxu0
      %v2911 = vadd.f32 0.0, %v2910
      %v2912 = vpop.f32.mrb[0].mxu0
      %v2913 = vpop.f32.mrb[0].mxu0
      %v2914 = vadd.f32 0.0, %v2913
      %v2915 = vpop.f32.mrb[0].mxu0
      %2916 = vmatprep.mubr.bf16.mxu0 0
      %2917 = vmatmul.mubr.bf16.gmra.mrb[0].mxu0 %v2850
      %v2918 = vpop.f32.mrb[0].mxu0
      %v2919 = vadd.f32 0.0, %v2918
      %v2920 = vpop.f32.mrb[0].mxu0
      %v2921 = vpop.f32.mrb[0].mxu0
      %v2922 = vpop.f32.mrb[0].mxu0
      %2923 = vdwg.mxu0
      %v2924 = vld [vmem:[%s428] sm:$0xff]
      %v2925 = vld [vmem:[%s428 + $0x8] sm:$0xff]
      %v2926 = vld [vmem:[%s428 + $0x10] sm:$0xff]
      %v2927 = vld [vmem:[%s428 + $0x18] sm:$0xff]
      %v2928 = vld [vmem:[%s428 + $0x20] sm:$0xff]
      %v2929 = vld [vmem:[%s428 + $0x28] sm:$0xff]
      %v2930 = vld [vmem:[%s428 + $0x30] sm:$0xff]
      %v2931 = vld [vmem:[%s428 + $0x38] sm:$0xff]
      %v2932 = vld [vmem:[%s428 + $0x40] sm:$0xff]
      %v2933 = vadd.f32 %v2924, %v2887
      %v2934 = vadd.f32 %v2925, %v2890
      %v2935 = vadd.f32 %v2926, %v2895
      %v2936 = vadd.f32 %v2927, %v2898
      %v2937 = vadd.f32 %v2928, %v2903
      %v2938 = vadd.f32 %v2929, %v2906
      %v2939 = vadd.f32 %v2930, %v2911
      %v2940 = vadd.f32 %v2931, %v2914
      %v2941 = vadd.f32 %v2932, %v2919
      %2942 = vst [vmem:[%s428] sm:$0xff] %v2933
      %2943 = vst [vmem:[%s428 + $0x8] sm:$0xff] %v2934
      %2944 = vst [vmem:[%s428 + $0x10] sm:$0xff] %v2935
      %2945 = vst [vmem:[%s428 + $0x18] sm:$0xff] %v2936
      %2946 = vst [vmem:[%s428 + $0x20] sm:$0xff] %v2937
      %2947 = vst [vmem:[%s428 + $0x28] sm:$0xff] %v2938
      %2948 = vst [vmem:[%s428 + $0x30] sm:$0xff] %v2939
      %2949 = vst [vmem:[%s428 + $0x38] sm:$0xff] %v2940
      %2950 = vst [vmem:[%s428 + $0x40] sm:$0xff] %v2941
      %v2951 = vld [vmem:[%s410 + $0x4] sm:$0xe]
      %v2952 = vld [vmem:[%s410 + $0x8] sm:$0xf]
      %v2953 = vld [vmem:[%s410 + $0xc] sm:$0xf]
      %v2954 = vld [vmem:[%s410 + $0x10] sm:$0xf]
      %v2955 = vld [vmem:[%s410 + $0x14] sm:$0xf]
      %v2956 = vld [vmem:[%s410 + $0x18] sm:$0xf]
      %v2957 = vld [vmem:[%s410 + $0x1c] sm:$0xf]
      %v2958 = vld [vmem:[%s410 + $0x20] sm:$0xf]
      %v2959 = vld [vmem:[%s410 + $0x24] sm:$0xf]
      %v2960 = vld [vmem:[%s410 + $0x28] sm:$0x1]
      %s2961 = scalar_lea.vmem %s4, 112
      %v2962 = vld [vmem:[%s2961] sm:$0xf]
      %v2963 = vld [vmem:[%s2961 + $0x4] sm:$0xf]
      %v2974 = vunpack.c.l.b16 %v2951
      %v2975 = vunpack.c.l.b16 %v2952
      %v2976 = vunpack.c.l.b16 %v2953
      %v2977 = vunpack.c.l.b16 %v2954
      %v2978 = vunpack.c.l.b16 %v2955
      %v2979 = vunpack.c.l.b16 %v2956
      %v2980 = vunpack.c.l.b16 %v2957
      %v2981 = vunpack.c.l.b16 %v2958
      %v2982 = vunpack.c.l.b16 %v2959
      %v2983 = vunpack.c.l.b16 %v2960
      %v2984 = vpack.c.b16 %v2975, %v2974
      %v2985 = vpack.c.b16 %v2977, %v2976
      %v2986 = vpack.c.b16 %v2979, %v2978
      %v2987 = vpack.c.b16 %v2981, %v2980
      %v2988 = vpack.c.b16 %v2983, %v2982
      %v2989 = vrot.slane %v2984, 1
      %v2990 = vrot.slane %v2985, 1
      %v2991 = vsel %vm2260, %v2989, %v2990
      %v2992 = vrot.slane %v2986, 1
      %v2993 = vsel %vm2260, %v2990, %v2992
      %v2994 = vrot.slane %v2987, 1
      %v2995 = vsel %vm2260, %v2992, %v2994
      %v2996 = vrot.slane %v2988, 1
      %v2997 = vsel %vm2260, %v2994, %v2996
      %v3000 = vunpack.c.l.b16 %v2962
      %v3001 = vunpack.c.l.b16 %v2963
      %v3002 = vpack.c.b16 %v3001, %v3000
      %v3005 = vsel %vm477, %v2991, 0
      %v3008 = vsel %vm477, %v2993, 0
      %v3011 = vsel %vm477, %v2995, 0
      %v3014 = vsel %vm477, %v2997, 0
      %v3017 = vsel %vm477, %v2996, 0
      %3019 = vmatprep.subr.bf16.mxu0 0
      %3020 = vmatpush1.bf16.msra.mxu0 %v3002
      %3021 = vmatprep.subr.bf16.mxu0 0
      %3022 = vmatpush1.bf16.msra.mxu0 0
      %3023 = vmatprep.subr.bf16.mxu0 0
      %3024 = vmatpush1.bf16.msra.mxu0 0
      %3025 = vmatprep.subr.bf16.mxu0 0
      %3026 = vmatpush1.bf16.msra.mxu0 0
      %3027 = vmatprep.subr.bf16.mxu0 0
      %3028 = vmatpush1.bf16.msra.mxu0 0
      %3029 = vmatprep.subr.bf16.mxu0 0
      %3030 = vmatpush1.bf16.msra.mxu0 0
      %3031 = vmatprep.subr.bf16.mxu0 0
      %3032 = vmatpush1.bf16.msra.mxu0 0
      %3033 = vmatprep.subr.bf16.mxu0 0
      %3034 = vmatpush1.bf16.msra.mxu0 0
      %3035 = vmatprep.subr.bf16.mxu0 0
      %3036 = vmatpush1.bf16.msra.mxu0 0
      %3037 = vmatprep.subr.bf16.mxu0 0
      %3038 = vmatpush1.bf16.msra.mxu0 0
      %3039 = vmatprep.subr.bf16.mxu0 0
      %3040 = vmatpush1.bf16.msra.mxu0 0
      %3041 = vmatprep.subr.bf16.mxu0 0
      %3042 = vmatpush1.bf16.msra.mxu0 0
      %3043 = vmatprep.subr.bf16.mxu0 0
      %3044 = vmatpush1.bf16.msra.mxu0 0
      %3045 = vmatprep.subr.bf16.mxu0 0
      %3046 = vmatpush1.bf16.msra.mxu0 0
      %3047 = vmatprep.subr.bf16.mxu0 0
      %3048 = vmatpush1.bf16.msra.mxu0 0
      %3049 = vmatprep.subr.bf16.mxu0 0
      %3050 = vmatpush1.bf16.msra.mxu0 0
      %3051 = vmatprep.mubr.bf16.mxu0 0
      %3052 = vmatmul.mubr.bf16.gmra.mrb[0].mxu0 %v3005
      %v3053 = vpop.f32.mrb[0].mxu0
      %v3054 = vadd.f32 0.0, %v3053
      %v3055 = vpop.f32.mrb[0].mxu0
      %v3056 = vpop.f32.mrb[0].mxu0
      %v3057 = vadd.f32 0.0, %v3056
      %v3058 = vpop.f32.mrb[0].mxu0
      %3059 = vmatprep.mubr.bf16.mxu0 0
      %3060 = vmatmul.mubr.bf16.gmra.mrb[0].mxu0 %v3008
      %v3061 = vpop.f32.mrb[0].mxu0
      %v3062 = vadd.f32 0.0, %v3061
      %v3063 = vpop.f32.mrb[0].mxu0
      %v3064 = vpop.f32.mrb[0].mxu0
      %v3065 = vadd.f32 0.0, %v3064
      %v3066 = vpop.f32.mrb[0].mxu0
      %3067 = vmatprep.mubr.bf16.mxu0 0
      %3068 = vmatmul.mubr.bf16.gmra.mrb[0].mxu0 %v3011
      %v3069 = vpop.f32.mrb[0].mxu0
      %v3070 = vadd.f32 0.0, %v3069
      %v3071 = vpop.f32.mrb[0].mxu0
      %v3072 = vpop.f32.mrb[0].mxu0
      %v3073 = vadd.f32 0.0, %v3072
      %v3074 = vpop.f32.mrb[0].mxu0
      %3075 = vmatprep.mubr.bf16.mxu0 0
      %3076 = vmatmul.mubr.bf16.gmra.mrb[0].mxu0 %v3014
      %v3077 = vpop.f32.mrb[0].mxu0
      %v3078 = vadd.f32 0.0, %v3077
      %v3079 = vpop.f32.mrb[0].mxu0
      %v3080 = vpop.f32.mrb[0].mxu0
      %v3081 = vadd.f32 0.0, %v3080
      %v3082 = vpop.f32.mrb[0].mxu0
      %3083 = vmatprep.mubr.bf16.mxu0 0
      %3084 = vmatmul.mubr.bf16.gmra.mrb[0].mxu0 %v3017
      %v3085 = vpop.f32.mrb[0].mxu0
      %v3086 = vadd.f32 0.0, %v3085
      %v3087 = vpop.f32.mrb[0].mxu0
      %v3088 = vpop.f32.mrb[0].mxu0
      %v3089 = vpop.f32.mrb[0].mxu0
      %3090 = vdwg.mxu0
      %v3091 = vld [vmem:[%s428] sm:$0xff]
      %v3092 = vld [vmem:[%s428 + $0x8] sm:$0xff]
      %v3093 = vld [vmem:[%s428 + $0x10] sm:$0xff]
      %v3094 = vld [vmem:[%s428 + $0x18] sm:$0xff]
      %v3095 = vld [vmem:[%s428 + $0x20] sm:$0xff]
      %v3096 = vld [vmem:[%s428 + $0x28] sm:$0xff]
      %v3097 = vld [vmem:[%s428 + $0x30] sm:$0xff]
      %v3098 = vld [vmem:[%s428 + $0x38] sm:$0xff]
      %v3099 = vld [vmem:[%s428 + $0x40] sm:$0xff]
      %v3100 = vadd.f32 %v3091, %v3054
      %v3101 = vadd.f32 %v3092, %v3057
      %v3102 = vadd.f32 %v3093, %v3062
      %v3103 = vadd.f32 %v3094, %v3065
      %v3104 = vadd.f32 %v3095, %v3070
      %v3105 = vadd.f32 %v3096, %v3073
      %v3106 = vadd.f32 %v3097, %v3078
      %v3107 = vadd.f32 %v3098, %v3081
      %v3108 = vadd.f32 %v3099, %v3086
      %3109 = vst [vmem:[%s428] sm:$0xff] %v3100
      %3110 = vst [vmem:[%s428 + $0x8] sm:$0xff] %v3101
      %3111 = vst [vmem:[%s428 + $0x10] sm:$0xff] %v3102
      %3112 = vst [vmem:[%s428 + $0x18] sm:$0xff] %v3103
      %3113 = vst [vmem:[%s428 + $0x20] sm:$0xff] %v3104
      %3114 = vst [vmem:[%s428 + $0x28] sm:$0xff] %v3105
      %3115 = vst [vmem:[%s428 + $0x30] sm:$0xff] %v3106
      %3116 = vst [vmem:[%s428 + $0x38] sm:$0xff] %v3107
      %3117 = vst [vmem:[%s428 + $0x40] sm:$0xff] %v3108
      %v3118 = vld [vmem:[%s419 + $0x4] sm:$0xe]
      %v3119 = vld [vmem:[%s419 + $0x8] sm:$0xf]
      %v3120 = vld [vmem:[%s419 + $0xc] sm:$0xf]
      %v3121 = vld [vmem:[%s419 + $0x10] sm:$0xf]
      %v3122 = vld [vmem:[%s419 + $0x14] sm:$0xf]
      %v3123 = vld [vmem:[%s419 + $0x18] sm:$0xf]
      %v3124 = vld [vmem:[%s419 + $0x1c] sm:$0xf]
      %v3125 = vld [vmem:[%s419 + $0x20] sm:$0xf]
      %v3126 = vld [vmem:[%s419 + $0x24] sm:$0xf]
      %v3127 = vld [vmem:[%s419 + $0x28] sm:$0x1]
      %s3128 = scalar_lea.vmem %s4, 120
      %v3129 = vld [vmem:[%s3128] sm:$0xf]
      %v3130 = vld [vmem:[%s3128 + $0x4] sm:$0xf]
      %v3141 = vunpack.c.l.b16 %v3118
      %v3142 = vunpack.c.l.b16 %v3119
      %v3143 = vunpack.c.l.b16 %v3120
      %v3144 = vunpack.c.l.b16 %v3121
      %v3145 = vunpack.c.l.b16 %v3122
      %v3146 = vunpack.c.l.b16 %v3123
      %v3147 = vunpack.c.l.b16 %v3124
      %v3148 = vunpack.c.l.b16 %v3125
      %v3149 = vunpack.c.l.b16 %v3126
      %v3150 = vunpack.c.l.b16 %v3127
      %v3151 = vpack.c.b16 %v3142, %v3141
      %v3152 = vpack.c.b16 %v3144, %v3143
      %v3153 = vpack.c.b16 %v3146, %v3145
      %v3154 = vpack.c.b16 %v3148, %v3147
      %v3155 = vpack.c.b16 %v3150, %v3149
      %v3156 = vrot.slane %v3151, 1
      %v3157 = vrot.slane %v3152, 1
      %v3158 = vsel %vm2260, %v3156, %v3157
      %v3159 = vrot.slane %v3153, 1
      %v3160 = vsel %vm2260, %v3157, %v3159
      %v3161 = vrot.slane %v3154, 1
      %v3162 = vsel %vm2260, %v3159, %v3161
      %v3163 = vrot.slane %v3155, 1
      %v3164 = vsel %vm2260, %v3161, %v3163
      %v3167 = vunpack.c.l.b16 %v3129
      %v3168 = vunpack.c.l.b16 %v3130
      %v3169 = vpack.c.b16 %v3168, %v3167
      %v3172 = vsel %vm477, %v3158, 0
      %v3175 = vsel %vm477, %v3160, 0
      %v3178 = vsel %vm477, %v3162, 0
      %v3181 = vsel %vm477, %v3164, 0
      %v3184 = vsel %vm477, %v3163, 0
      %3186 = vmatprep.subr.bf16.mxu0 0
      %3187 = vmatpush1.bf16.msra.mxu0 %v3169
      %3188 = vmatprep.subr.bf16.mxu0 0
      %3189 = vmatpush1.bf16.msra.mxu0 0
      %3190 = vmatprep.subr.bf16.mxu0 0
      %3191 = vmatpush1.bf16.msra.mxu0 0
      %3192 = vmatprep.subr.bf16.mxu0 0
      %3193 = vmatpush1.bf16.msra.mxu0 0
      %3194 = vmatprep.subr.bf16.mxu0 0
      %3195 = vmatpush1.bf16.msra.mxu0 0
      %3196 = vmatprep.subr.bf16.mxu0 0
      %3197 = vmatpush1.bf16.msra.mxu0 0
      %3198 = vmatprep.subr.bf16.mxu0 0
      %3199 = vmatpush1.bf16.msra.mxu0 0
      %3200 = vmatprep.subr.bf16.mxu0 0
      %3201 = vmatpush1.bf16.msra.mxu0 0
      %3202 = vmatprep.subr.bf16.mxu0 0
      %3203 = vmatpush1.bf16.msra.mxu0 0
      %3204 = vmatprep.subr.bf16.mxu0 0
      %3205 = vmatpush1.bf16.msra.mxu0 0
      %3206 = vmatprep.subr.bf16.mxu0 0
      %3207 = vmatpush1.bf16.msra.mxu0 0
      %3208 = vmatprep.subr.bf16.mxu0 0
      %3209 = vmatpush1.bf16.msra.mxu0 0
      %3210 = vmatprep.subr.bf16.mxu0 0
      %3211 = vmatpush1.bf16.msra.mxu0 0
      %3212 = vmatprep.subr.bf16.mxu0 0
      %3213 = vmatpush1.bf16.msra.mxu0 0
      %3214 = vmatprep.subr.bf16.mxu0 0
      %3215 = vmatpush1.bf16.msra.mxu0 0
      %3216 = vmatprep.subr.bf16.mxu0 0
      %3217 = vmatpush1.bf16.msra.mxu0 0
      %3218 = vmatprep.mubr.bf16.mxu0 0
      %3219 = vmatmul.mubr.bf16.gmra.mrb[0].mxu0 %v3172
      %v3220 = vpop.f32.mrb[0].mxu0
      %v3221 = vadd.f32 0.0, %v3220
      %v3222 = vpop.f32.mrb[0].mxu0
      %v3223 = vpop.f32.mrb[0].mxu0
      %v3224 = vadd.f32 0.0, %v3223
      %v3225 = vpop.f32.mrb[0].mxu0
      %3226 = vmatprep.mubr.bf16.mxu0 0
      %3227 = vmatmul.mubr.bf16.gmra.mrb[0].mxu0 %v3175
      %v3228 = vpop.f32.mrb[0].mxu0
      %v3229 = vadd.f32 0.0, %v3228
      %v3230 = vpop.f32.mrb[0].mxu0
      %v3231 = vpop.f32.mrb[0].mxu0
      %v3232 = vadd.f32 0.0, %v3231
      %v3233 = vpop.f32.mrb[0].mxu0
      %3234 = vmatprep.mubr.bf16.mxu0 0
      %3235 = vmatmul.mubr.bf16.gmra.mrb[0].mxu0 %v3178
      %v3236 = vpop.f32.mrb[0].mxu0
      %v3237 = vadd.f32 0.0, %v3236
      %v3238 = vpop.f32.mrb[0].mxu0
      %v3239 = vpop.f32.mrb[0].mxu0
      %v3240 = vadd.f32 0.0, %v3239
      %v3241 = vpop.f32.mrb[0].mxu0
      %3242 = vmatprep.mubr.bf16.mxu0 0
      %3243 = vmatmul.mubr.bf16.gmra.mrb[0].mxu0 %v3181
      %v3244 = vpop.f32.mrb[0].mxu0
      %v3245 = vadd.f32 0.0, %v3244
      %v3246 = vpop.f32.mrb[0].mxu0
      %v3247 = vpop.f32.mrb[0].mxu0
      %v3248 = vadd.f32 0.0, %v3247
      %v3249 = vpop.f32.mrb[0].mxu0
      %3250 = vmatprep.mubr.bf16.mxu0 0
      %3251 = vmatmul.mubr.bf16.gmra.mrb[0].mxu0 %v3184
      %v3252 = vpop.f32.mrb[0].mxu0
      %v3253 = vadd.f32 0.0, %v3252
      %v3254 = vpop.f32.mrb[0].mxu0
      %v3255 = vpop.f32.mrb[0].mxu0
      %v3256 = vpop.f32.mrb[0].mxu0
      %3257 = vdwg.mxu0
      %v3258 = vld [vmem:[%s428] sm:$0xff]
      %v3259 = vld [vmem:[%s428 + $0x8] sm:$0xff]
      %v3260 = vld [vmem:[%s428 + $0x10] sm:$0xff]
      %v3261 = vld [vmem:[%s428 + $0x18] sm:$0xff]
      %v3262 = vld [vmem:[%s428 + $0x20] sm:$0xff]
      %v3263 = vld [vmem:[%s428 + $0x28] sm:$0xff]
      %v3264 = vld [vmem:[%s428 + $0x30] sm:$0xff]
      %v3265 = vld [vmem:[%s428 + $0x38] sm:$0xff]
      %v3266 = vld [vmem:[%s428 + $0x40] sm:$0xff]
      %v3267 = vadd.f32 %v3258, %v3221
      %v3268 = vadd.f32 %v3259, %v3224
      %v3269 = vadd.f32 %v3260, %v3229
      %v3270 = vadd.f32 %v3261, %v3232
      %v3271 = vadd.f32 %v3262, %v3237
      %v3272 = vadd.f32 %v3263, %v3240
      %v3273 = vadd.f32 %v3264, %v3245
      %v3274 = vadd.f32 %v3265, %v3248
      %v3275 = vadd.f32 %v3266, %v3253
      %3276 = vst [vmem:[%s428] sm:$0xff] %v3267
      %3277 = vst [vmem:[%s428 + $0x8] sm:$0xff] %v3268
      %3278 = vst [vmem:[%s428 + $0x10] sm:$0xff] %v3269
      %3279 = vst [vmem:[%s428 + $0x18] sm:$0xff] %v3270
      %3280 = vst [vmem:[%s428 + $0x20] sm:$0xff] %v3271
      %3281 = vst [vmem:[%s428 + $0x28] sm:$0xff] %v3272
      %3282 = vst [vmem:[%s428 + $0x30] sm:$0xff] %v3273
      %3283 = vst [vmem:[%s428 + $0x38] sm:$0xff] %v3274
      %3284 = vst [vmem:[%s428 + $0x40] sm:$0xff] %v3275
      %v3285 = vld [vmem:[%s428] sm:$0xff]
      %v3286 = vld [vmem:[%s428 + $0x8] sm:$0xff]
      %v3287 = vld [vmem:[%s428 + $0x10] sm:$0xff]
      %v3288 = vld [vmem:[%s428 + $0x18] sm:$0xff]
      %v3289 = vld [vmem:[%s428 + $0x20] sm:$0xff]
      %v3290 = vld [vmem:[%s428 + $0x28] sm:$0xff]
      %v3291 = vld [vmem:[%s428 + $0x30] sm:$0xff]
      %v3292 = vld [vmem:[%s428 + $0x38] sm:$0xff]
      %v3293 = vld [vmem:[%s428 + $0x40] sm:$0xff]
      %v3294 = vld [vmem:[%s5] sm:$0xff]
      %v3295 = vld [vmem:[%s5 + $0x8] sm:$0xff]
      %v3296 = vld [vmem:[%s5 + $0x10] sm:$0xff]
      %v3297 = vld [vmem:[%s5 + $0x18] sm:$0xff]
      %v3298 = vld [vmem:[%s5 + $0x20] sm:$0xff]
      %v3299 = vld [vmem:[%s5 + $0x28] sm:$0xff]
      %v3300 = vld [vmem:[%s5 + $0x30] sm:$0xff]
      %v3301 = vld [vmem:[%s5 + $0x38] sm:$0xff]
      %v3302 = vld [vmem:[%s5 + $0x40] sm:$0xff]
      %3304 = vset.pattern.permute.xlu0 0
      %3305 = vperm.xlu0 %3304, %v3294
      %v3306 = vpop.permute.xlu0 %3305
      %3309 = vset.pattern.permute.xlu0 0
      %3310 = vperm.xlu0 %3309, %v3295
      %v3311 = vpop.permute.xlu0 %3310
      %3314 = vset.pattern.permute.xlu0 0
      %3315 = vperm.xlu0 %3314, %v3296
      %v3316 = vpop.permute.xlu0 %3315
      %3319 = vset.pattern.permute.xlu0 0
      %3320 = vperm.xlu0 %3319, %v3297
      %v3321 = vpop.permute.xlu0 %3320
      %3324 = vset.pattern.permute.xlu0 0
      %3325 = vperm.xlu0 %3324, %v3298
      %v3326 = vpop.permute.xlu0 %3325
      %3329 = vset.pattern.permute.xlu0 0
      %3330 = vperm.xlu0 %3329, %v3299
      %v3331 = vpop.permute.xlu0 %3330
      %3334 = vset.pattern.permute.xlu0 0
      %3335 = vperm.xlu0 %3334, %v3300
      %v3336 = vpop.permute.xlu0 %3335
      %3339 = vset.pattern.permute.xlu0 0
      %3340 = vperm.xlu0 %3339, %v3301
      %v3341 = vpop.permute.xlu0 %3340
      %3344 = vset.pattern.permute.xlu0 0
      %3345 = vperm.xlu0 %3344, %v3302
      %v3346 = vpop.permute.xlu0 %3345
      %v3348 = vmul.f32 %v3285, %v3306
      %v3349 = vmul.f32 %v3286, %v3311
      %v3350 = vmul.f32 %v3287, %v3316
      %v3351 = vmul.f32 %v3288, %v3321
      %v3352 = vmul.f32 %v3289, %v3326
      %v3353 = vmul.f32 %v3290, %v3331
      %v3354 = vmul.f32 %v3291, %v3336
      %v3355 = vmul.f32 %v3292, %v3341
      %v3356 = vmul.f32 %v3293, %v3346
      %v3357 = vadd.f32 %v3348, %v3349
      %v3358 = vadd.f32 %v3357, %v3350
      %v3359 = vadd.f32 %v3358, %v3351
      %v3360 = vadd.f32 %v3359, %v3352
      %v3361 = vadd.f32 %v3360, %v3353
      %v3362 = vadd.f32 %v3361, %v3354
      %v3363 = vadd.f32 %v3362, %v3355
      %v3364 = vadd.f32 %v3363, %v3356
      %v3365 = vrot.slane %v3364, 4
      %v3366 = vadd.f32 %v3364, %v3365
      %v3367 = vrot.slane %v3366, 2
      %v3368 = vadd.f32 %v3366, %v3367
      %v3369 = vrot.slane %v3368, 1
      %v3370 = vadd.f32 %v3368, %v3369
      %v3371 = vmul.f32 %v3348, %v3348
      %v3372 = vmul.f32 %v3349, %v3349
      %v3373 = vmul.f32 %v3350, %v3350
      %v3374 = vmul.f32 %v3351, %v3351
      %v3375 = vmul.f32 %v3352, %v3352
      %v3376 = vmul.f32 %v3353, %v3353
      %v3377 = vmul.f32 %v3354, %v3354
      %v3378 = vmul.f32 %v3355, %v3355
      %v3379 = vmul.f32 %v3356, %v3356
      %v3380 = vadd.f32 %v3371, %v3372
      %v3381 = vadd.f32 %v3380, %v3373
      %v3382 = vadd.f32 %v3381, %v3374
      %v3383 = vadd.f32 %v3382, %v3375
      %v3384 = vadd.f32 %v3383, %v3376
      %v3385 = vadd.f32 %v3384, %v3377
      %v3386 = vadd.f32 %v3385, %v3378
      %v3387 = vadd.f32 %v3386, %v3379
      %v3388 = vrot.slane %v3387, 4
      %v3389 = vadd.f32 %v3387, %v3388
      %v3390 = vrot.slane %v3389, 2
      %v3391 = vadd.f32 %v3389, %v3390
      %v3392 = vrot.slane %v3391, 1
      %v3393 = vadd.f32 %v3391, %v3392
      %vm3394 = vcmask 1040384
      %v3395 = vsel %vm3394, %v3370, %v3393
      %3396 = vst [vmem:[%s435] sm:$0x3] %v3395
      %p3397 = scmp.lt.s32.totalorder %s23, 1
      %s3398 = scalar_select %p3397, %s23, 1
      %p3399 = scmp.lt.s32.totalorder %s24, 0
      %s3400 = scalar_select %p3399, %s24, 0
      %s3401 = smul.addr %s3400, 9
      %s3402 = smul.addr %s3398, 9
      %s3403 = sadd.s32 %s3401, %s3402
      %s3404 = smul.addr %s3403, 8
      %s3405 = scalar_lea.vmem %s6, %s3404
      %p3406 = scmp.lt.s32.totalorder %s23, 1
      %s3407 = scalar_select %p3406, %s23, 1
      %p3408 = scmp.lt.s32.totalorder %s24, 0
      %s3409 = scalar_select %p3408, %s24, 0
      %s3410 = sadd.s32 %s3409, %s3407
      %s3411 = smul.addr %s3410, 2
      %s3412 = scalar_lea.vmem %s7, %s3411
      // Predicated region
      $region45: #{block_forward.1} parent=43 // pred_check
        %p3413 = pneg %p205
      $region46: #{block_forward.1} parent=43 // pred_check_branch
        %3415 = sbr.rel (%p3413) target = $region48
      $region47: #{block_forward.1} parent=43 // pred_region
        _
      $region48: #{block_forward.1} parent=43 // pred_fallthru
        _
      // Predicated region
      $region49: #{block_forward.1} parent=43 // pred_check
        %p3416 = pneg %p233
      $region50: #{block_forward.1} parent=43 // pred_check_branch
        %3418 = sbr.rel (%p3416) target = $region52
      $region51: #{block_forward.1} parent=43 // pred_region
        _
      $region52: #{block_forward.1} parent=43 // pred_fallthru
        _
    $region44: #{block_forward.1} parent=5 // pred_fallthru
      _
    %p3419 = scmp.le.s32.totalorder 2, %s14
    // Predicated region
    $region53: #{block_forward.1} parent=5 // pred_check
      %p3420 = pneg %p3419
    $region54: #{block_forward.1} parent=5 // pred_check_branch
      %3422 = sbr.rel (%p3420) target = $region56
    $region55: #{block_forward.1} parent=5 // pred_region
      %s3423 = ssub.s32 %s14, 2
      // Predicated region
      $region57: #{block_forward.1} parent=55 // pred_check
        %p3424 = pneg %p211
      $region58: #{block_forward.1} parent=55 // pred_check_branch
        %3426 = sbr.rel (%p3424) target = $region60
      $region59: #{block_forward.1} parent=55 // pred_region
        %p3427 = scmp.lt.s32.totalorder %s25, 1
        %s3428 = scalar_select %p3427, %s25, 1
        %p3429 = scmp.lt.s32.totalorder %s26, 0
        %s3430 = scalar_select %p3429, %s26, 0
        %s3431 = smul.addr %s3430, 9
        %s3432 = smul.addr %s3428, 9
        %s3433 = sadd.s32 %s3431, %s3432
        %s3434 = smul.addr %s3433, 8
        %s3435 = scalar_lea.vmem %s6, %s3434
      $region60: #{block_forward.1} parent=55 // pred_fallthru
        _
      // Predicated region
      $region61: #{block_forward.1} parent=55 // pred_check
        %p3436 = pneg %p239
      $region62: #{block_forward.1} parent=55 // pred_check_branch
        %3438 = sbr.rel (%p3436) target = $region64
      $region63: #{block_forward.1} parent=55 // pred_region
        %p3439 = scmp.lt.s32.totalorder %s25, 1
        %s3440 = scalar_select %p3439, %s25, 1
        %p3441 = scmp.lt.s32.totalorder %s26, 0
        %s3442 = scalar_select %p3441, %s26, 0
        %s3443 = sadd.s32 %s3442, %s3440
        %s3444 = smul.addr %s3443, 2
        %s3445 = scalar_lea.vmem %s7, %s3444
      $region64: #{block_forward.1} parent=55 // pred_fallthru
        _
    $region56: #{block_forward.1} parent=5 // pred_fallthru
      _
  $region6: #{block_forward.1} parent=0 // loop_footer
    %s18 = sadd.s32 1, %s14
  $region7: #{block_forward.1} parent=0 // loop_footer_branch
    %13 = sbr.rel target = $region3
  $region8: #{block_forward.1} parent=0 // loop_exit
    _

</llo_original>
